<compile_context>
chip_gen: v5e
topology: v5e:2x2
jax: 0.10.0
libtpu: 0.0.40
codegen_flags: <defaults>
</compile_context>

<pallas_src>
import functools

import jax
import jax.numpy as jnp
from jax.experimental import pallas as pl
from jax.experimental.pallas import tpu as pltpu

_TAPS = ((0, 0), (0, 1), (1, 0), (1, 1))


def _compiler_params(block_bytes):
    """'parallel' batch axis; raise the scoped VMEM limit only when the (double
    buffered) block estimate needs it."""
    need = int(2 * block_bytes) + (2 << 20)
    limit = need if need > (30 << 20) else None
    return pltpu.CompilerParams(dimension_semantics=("parallel",),
                                vmem_limit_bytes=limit)


# --------------------------------------------------------------------------
# Pallas kernel: 2x2 stride-1 "valid" conv = 4 in-kernel tap matmuls + bias + act
# --------------------------------------------------------------------------
def _tapconv_kernel(x_ref, w_ref, b_ref, o_ref, *, q, m, act):
    """x_ref: [1, P*Q+1, C]  one image slab, spatial [P, Q] flattened row-major
                             plus one trailing zero row (keeps tap (1,1) in-bounds).
       w_ref: [4, C, Cout]   tap-major weights (dy, dx) row-major.
       b_ref: [1, Cout]      f32 bias row.
       o_ref: [1, m, Cout]   m = (P-1)*Q full-width output rows; the caller drops
                             the wrap-around column j == Q-1."""
    cout = o_ref.shape[2]
    acc = jnp.zeros((m, cout), jnp.float32)
    for t, (dy, dx) in enumerate(_TAPS):
        # Contiguous row slice of the flattened slab -> no im2col expansion,
        # no strided gather: tap (dy, dx) of output (i, j) is slab row
        # (dy+i)*Q + (dx+j), which is contiguous over (i, j).
        a = x_ref[0, pl.ds(dy * q + dx, m), :]
        acc = acc + jnp.dot(a, w_ref[t], preferred_element_type=jnp.float32)
    acc = acc + b_ref[...]
    if act == "relu":
        acc = jnp.maximum(acc, 0.0)
    elif act == "tanh":
        acc = jnp.tanh(acc)
    o_ref[0] = acc.astype(o_ref.dtype)


def tapconv2x2(x_slab, w_taps, bias_row, act, out_dtype=jnp.bfloat16):
    """act(conv2x2_valid(x_slab, w_taps) + bias): [N, P, Q, C] -> [N, P-1, Q-1, Cout]."""
    n, p, q, c = x_slab.shape
    cout = w_taps.shape[2]
    oh, ow = p - 1, q - 1
    m = oh * q                                      # full width incl. wrap column
    x_flat = jnp.pad(x_slab.reshape(n, p * q, c), ((0, 0), (0, 1), (0, 0)))

    x_bytes = (p * q + 1) * c * x_slab.dtype.itemsize
    o_bytes = m * cout * jnp.dtype(out_dtype).itemsize
    w_bytes = 4 * c * cout * 2
    cost = pl.CostEstimate(
        flops=2 * n * m * 4 * c * cout,
        transcendentals=n * m * cout if act == "tanh" else 0,
        bytes_accessed=n * (x_bytes + o_bytes) + w_bytes + 4 * cout)

    out = pl.pallas_call(
        functools.partial(_tapconv_kernel, q=q, m=m, act=act),
        out_shape=jax.ShapeDtypeStruct((n, m, cout), out_dtype),
        grid=(n,),
        in_specs=[
            pl.BlockSpec((1, p * q + 1, c), lambda i: (i, 0, 0)),
            pl.BlockSpec((4, c, cout), lambda i: (0, 0, 0)),     # resident weights
            pl.BlockSpec((1, cout), lambda i: (0, 0)),
        ],
        out_specs=pl.BlockSpec((1, m, cout), lambda i: (i, 0, 0)),
        compiler_params=_compiler_params(x_bytes + o_bytes + w_bytes + 4 * m * cout),
        cost_estimate=cost,
    )(x_flat, w_taps, bias_row)
    # Drop the wrap-around column (tap dx=1 reading the next row's first pixel).
    return out.reshape(n, oh, q, cout)[:, :, :ow, :]


# --------------------------------------------------------------------------
# Conv / ConvTranspose layers (NHWC; only pad / space-to-depth / interleave in XLA)
# --------------------------------------------------------------------------
def conv4x4_s2_relu(x, w_taps, bias_row):
    """NHWC Conv2d(k=4, s=2, p=1) + ReLU.  Pad + space-to-depth(2) turns the
    stride-2 4x4 conv into a 2x2 stride-1 conv over a [N, H/2+1, W/2+1, 4C] slab."""
    n, h, w, c = x.shape
    xp = jnp.pad(x, ((0, 0), (1, 1), (1, 1), (0, 0)))
    p, q = (h + 2) // 2, (w + 2) // 2
    xs = xp.reshape(n, p, 2, q, 2, c).transpose(0, 1, 3, 2, 4, 5).reshape(n, p, q, 4 * c)
    return tapconv2x2(xs, w_taps, bias_row, act="relu")       # [n, h/2, w/2, cout]


def deconv4x4_s2(x, w_taps, bias_row, act, out_dtype=jnp.bfloat16):
    """NHWC ConvTranspose2d(k=4, s=2, p=1) + act via sub-pixel phase split: a 2x2
    stride-1 conv over the padded input whose 4*Cout output channels are the 4
    output phases, then interleaved back to [N, 2H, 2W, Cout]."""
    n, h, w, _ = x.shape
    cout = w_taps.shape[2] // 4
    xp = jnp.pad(x, ((0, 0), (1, 1), (1, 1), (0, 0)))
    res = tapconv2x2(xp, w_taps, bias_row, act=act, out_dtype=out_dtype)
    res = res.reshape(n, h + 1, w + 1, 2, 2, cout)
    phases = [[res[:, ry:ry + h, rx:rx + w, ry, rx, :] for rx in range(2)]
              for ry in range(2)]
    rows = [jnp.stack(phases[ry], axis=3) for ry in range(2)]     # [n, h, w, 2, cout]
    full = jnp.stack(rows, axis=2)                                # [n, h, 2, w, 2, cout]
    return full.reshape(n, 2 * h, 2 * w, cout)


# --------------------------------------------------------------------------
# Fused fc_mu || fc_logvar -> reparameterize -> decoder_input
# --------------------------------------------------------------------------
def _fc_chain_kernel(h_ref, wml_ref, bml_ref, eps_ref, wdi_ref, bdi_ref,
                     ml_ref, d_ref, *, latent):
    t = jnp.dot(h_ref[...], wml_ref[...],
                preferred_element_type=jnp.float32) + bml_ref[...]
    mu = t[:, :latent]
    logvar = t[:, latent:]
    z = mu + eps_ref[...] * jnp.exp(0.5 * logvar)
    d = jnp.dot(z.astype(wdi_ref.dtype), wdi_ref[...],
                preferred_element_type=jnp.float32) + bdi_ref[...]
    ml_ref[...] = t                       # single [tm, 2*latent] store: mu || logvar
    d_ref[...] = d.astype(d_ref.dtype)


def fc_chain(h_flat, w_ml, b_ml, eps, w_di, b_di):
    n, feat = h_flat.shape
    latent = eps.shape[1]
    tm = n if n <= 256 else 256                     # batch-tiled for larger n / v7x
    grid = (pl.cdiv(n, tm),)
    w_bytes = feat * 2 * latent * 2 + latent * feat * 2 + feat * 4 + 2 * latent * 4
    blk_bytes = 2 * tm * feat * 2 + w_bytes + tm * 2 * latent * 4 + tm * latent * 4
    cost = pl.CostEstimate(
        flops=2 * n * feat * 3 * latent,
        transcendentals=n * latent,
        bytes_accessed=2 * n * feat * 2 + w_bytes + n * 3 * latent * 4)

    ml, d = pl.pallas_call(
        functools.partial(_fc_chain_kernel, latent=latent),
        out_shape=(jax.ShapeDtypeStruct((n, 2 * latent), jnp.float32),
                   jax.ShapeDtypeStruct((n, feat), jnp.bfloat16)),
        grid=grid,
        in_specs=[
            pl.BlockSpec((tm, feat), lambda i: (i, 0)),
            pl.BlockSpec((feat, 2 * latent), lambda i: (0, 0)),
            pl.BlockSpec((1, 2 * latent), lambda i: (0, 0)),
            pl.BlockSpec((tm, latent), lambda i: (i, 0)),
            pl.BlockSpec((latent, feat), lambda i: (0, 0)),
            pl.BlockSpec((1, feat), lambda i: (0, 0)),
        ],
        out_specs=(pl.BlockSpec((tm, 2 * latent), lambda i: (i, 0)),
                   pl.BlockSpec((tm, feat), lambda i: (i, 0))),
        compiler_params=_compiler_params(blk_bytes),
        cost_estimate=cost,
    )(h_flat, w_ml, b_ml, eps, w_di, b_di)
    return ml[:, :latent], ml[:, latent:], d


# --------------------------------------------------------------------------
# Parameters: PyTorch-layout init, one-time packing into kernel layouts
# --------------------------------------------------------------------------
def init_params(key, latent_dim, img_size):
    f = img_size // 8
    feat = 128 * f * f
    ks = jax.random.split(key, 18)

    def u(k, shape, fan_in):
        bound = 1.0 / (fan_in ** 0.5)
        return jax.random.uniform(k, shape, jnp.float32, -bound, bound)

    p = {}
    p["e1_w"] = u(ks[0], (32, 1, 4, 4), 1 * 16);      p["e1_b"] = u(ks[1], (32,), 1 * 16)
    p["e2_w"] = u(ks[2], (64, 32, 4, 4), 32 * 16);    p["e2_b"] = u(ks[3], (64,), 32 * 16)
    p["e3_w"] = u(ks[4], (128, 64, 4, 4), 64 * 16);   p["e3_b"] = u(ks[5], (128,), 64 * 16)
    p["mu_w"] = u(ks[6], (latent_dim, feat), feat);   p["mu_b"] = u(ks[7], (latent_dim,), feat)
    p["lv_w"] = u(ks[8], (latent_dim, feat), feat);   p["lv_b"] = u(ks[9], (latent_dim,), feat)
    p["di_w"] = u(ks[10], (feat, latent_dim), latent_dim)
    p["di_b"] = u(ks[11], (feat,), latent_dim)
    p["d1_w"] = u(ks[12], (128, 64, 4, 4), 128 * 16); p["d1_b"] = u(ks[13], (64,), 128 * 16)
    p["d2_w"] = u(ks[14], (64, 32, 4, 4), 64 * 16);   p["d2_b"] = u(ks[15], (32,), 64 * 16)
    p["d3_w"] = u(ks[16], (32, 1, 4, 4), 32 * 16);    p["d3_b"] = u(ks[17], (1,), 32 * 16)
    return p


def pack_params(p, latent_dim, img_size):
    """One-time packing: tap-major bf16 conv/deconv weights, permuted fc weights,
    f32 bias rows.  All layout work happens here, never inside the jitted forward."""
    f = img_size // 8
    feat = 128 * f * f

    def pack_conv(w):            # Conv2d [Cout, Cin, 4, 4] -> [4, 4*Cin, Cout]
        cout, cin = w.shape[0], w.shape[1]
        taps = []
        for dy in range(2):
            for dx in range(2):
                blk = w[:, :, 2 * dy:2 * dy + 2, 2 * dx:2 * dx + 2]   # [cout,cin,ry,rx]
                taps.append(jnp.transpose(blk, (2, 3, 1, 0)).reshape(4 * cin, cout))
        return jnp.stack(taps, axis=0).astype(jnp.bfloat16)

    def pack_deconv(w):          # ConvT [Cin, Cout, 4, 4] -> [4, Cin, 4*Cout] (phase cols)
        taps = []
        for dy in range(2):
            for dx in range(2):
                cols = [w[:, :, 3 - ry - 2 * dy, 3 - rx - 2 * dx]
                        for ry in range(2) for rx in range(2)]
                taps.append(jnp.concatenate(cols, axis=1))
        return jnp.stack(taps, axis=0).astype(jnp.bfloat16)

    def pack_fc_in(wfc):         # [L, feat(c,h,w)] -> [feat(h,w,c), L] (NHWC flatten)
        L = wfc.shape[0]
        return jnp.transpose(wfc.reshape(L, 128, f, f), (0, 2, 3, 1)).reshape(L, feat).T

    def bias_row(b):
        return b.reshape(1, -1).astype(jnp.float32)

    pp = {}
    pp["e1_w"] = pack_conv(p["e1_w"]); pp["e1_b"] = bias_row(p["e1_b"])
    pp["e2_w"] = pack_conv(p["e2_w"]); pp["e2_b"] = bias_row(p["e2_b"])
    pp["e3_w"] = pack_conv(p["e3_w"]); pp["e3_b"] = bias_row(p["e3_b"])
    pp["ml_w"] = jnp.concatenate(
        [pack_fc_in(p["mu_w"]), pack_fc_in(p["lv_w"])], axis=1).astype(jnp.bfloat16)
    pp["ml_b"] = bias_row(jnp.concatenate([p["mu_b"], p["lv_b"]]))
    pp["di_w"] = jnp.transpose(p["di_w"].reshape(128, f, f, latent_dim),
                               (1, 2, 0, 3)).reshape(feat, latent_dim).T.astype(jnp.bfloat16)
    pp["di_b"] = bias_row(
        jnp.transpose(p["di_b"].reshape(128, f, f), (1, 2, 0)).reshape(feat))
    pp["d1_w"] = pack_deconv(p["d1_w"]); pp["d1_b"] = bias_row(jnp.tile(p["d1_b"], 4))
    pp["d2_w"] = pack_deconv(p["d2_w"]); pp["d2_b"] = bias_row(jnp.tile(p["d2_b"], 4))
    pp["d3_w"] = pack_deconv(p["d3_w"]); pp["d3_b"] = bias_row(jnp.tile(p["d3_b"], 4))
    return pp


# --------------------------------------------------------------------------
# VAE forward (mirrors VAE.forward(x, img_size))
# --------------------------------------------------------------------------
def vae_forward(pp, x, eps, img_size):
    n = x.shape[0]
    f = img_size // 8
    h = jnp.transpose(x, (0, 2, 3, 1)).astype(jnp.bfloat16)        # NCHW -> NHWC bf16
    # Encoder.
    h = conv4x4_s2_relu(h, pp["e1_w"], pp["e1_b"])
    h = conv4x4_s2_relu(h, pp["e2_w"], pp["e2_b"])
    h = conv4x4_s2_relu(h, pp["e3_w"], pp["e3_b"])
    h_flat = h.reshape(n, f * f * 128)                              # NHWC flatten
    # fc_mu || fc_logvar -> reparameterize -> decoder_input (one fused kernel).
    mu, logvar, d = fc_chain(h_flat, pp["ml_w"], pp["ml_b"], eps,
                             pp["di_w"], pp["di_b"])
    d = d.reshape(n, f, f, 128)
    # Decoder (phase-split transposed convs).
    d = deconv4x4_s2(d, pp["d1_w"], pp["d1_b"], act="relu")
    d = deconv4x4_s2(d, pp["d2_w"], pp["d2_b"], act="relu")
    recon = deconv4x4_s2(d, pp["d3_w"], pp["d3_b"], act="tanh", out_dtype=jnp.float32)
    recon = jnp.transpose(recon, (0, 3, 1, 2))                      # NHWC -> NCHW
    return recon, mu, logvar


# --------------------------------------------------------------------------
# Pure-JAX f32 reference (PyTorch semantics) for the tolerance check
# --------------------------------------------------------------------------
def vae_reference(p, x, eps, img_size):
    f = img_size // 8

    def conv(h, w, b):
        out = jax.lax.conv_general_dilated(
            h, w, window_strides=(2, 2), padding=((1, 1), (1, 1)),
            dimension_numbers=("NCHW", "OIHW", "NCHW"))
        return out + b[None, :, None, None]

    def convT(h, w, b):
        wt = jnp.flip(w, (2, 3)).transpose(1, 0, 2, 3)
        out = jax.lax.conv_general_dilated(
            h, wt, window_strides=(1, 1), padding=((2, 2), (2, 2)),
            lhs_dilation=(2, 2), dimension_numbers=("NCHW", "OIHW", "NCHW"))
        return out + b[None, :, None, None]

    h = jax.nn.relu(conv(x, p["e1_w"], p["e1_b"]))
    h = jax.nn.relu(conv(h, p["e2_w"], p["e2_b"]))
    h = jax.nn.relu(conv(h, p["e3_w"], p["e3_b"]))
    hf = h.reshape(x.shape[0], -1)
    mu = hf @ p["mu_w"].T + p["mu_b"]
    logvar = hf @ p["lv_w"].T + p["lv_b"]
    z = mu + eps * jnp.exp(0.5 * logvar)
    d = (z @ p["di_w"].T + p["di_b"]).reshape(-1, 128, f, f)
    d = jax.nn.relu(convT(d, p["d1_w"], p["d1_b"]))
    d = jax.nn.relu(convT(d, p["d2_w"], p["d2_b"]))
    recon = jnp.tanh(convT(d, p["d3_w"], p["d3_b"]))
    return recon, mu, logvar


if __name__ == "__main__":
    img_size = 16
    latent_dim = 16
    batch = 2

    key = jax.random.PRNGKey(0)
    pkey, xkey, ekey = jax.random.split(key, 3)

    params = init_params(pkey, latent_dim, img_size)
    packed = pack_params(params, latent_dim, img_size)
    x = jax.random.normal(xkey, (batch, 1, img_size, img_size), jnp.float32)
    # TODO(synk): torch.randn_like draws eps inside the module; here the Gaussian
    # noise is supplied by the caller (deterministic) so the run is reproducible.
    eps = jax.random.normal(ekey, (batch, latent_dim), jnp.float32)

    fwd = jax.jit(functools.partial(vae_forward, img_size=img_size))
    recon, mu, logvar = fwd(packed, x, eps)
    jax.block_until_ready((recon, mu, logvar))

    assert recon.shape == (batch, 1, img_size, img_size)
    assert mu.shape == (batch, latent_dim)
    assert logvar.shape == (batch, latent_dim)
    assert bool(jnp.all(jnp.isfinite(recon)))

    # Tolerance check vs. a pure-JAX f32 reference (bf16 intermediates -> ~1e-2).
    r_ref, mu_ref, lv_ref = vae_reference(params, x, eps, img_size)
    for name, got, ref in (("recon", recon, r_ref), ("mu", mu, mu_ref),
                           ("logvar", logvar, lv_ref)):
        err = float(jnp.max(jnp.abs(got.astype(jnp.float32) - ref)))
        assert err < 5e-2, f"{name}: max abs err {err}"

    print("KERNEL_OK")
</pallas_src>

<mosaic_0001>
module attributes {stable_mosaic.version = 11 : i64} {
  func.func @_tapconv_kernel(%arg0: i32, %arg1: memref<1x82x4xbf16, #tpu.memory_space<vmem>>, %arg2: memref<4x4x32xbf16, #tpu.memory_space<vmem>>, %arg3: memref<1x32xf32, #tpu.memory_space<vmem>>, %arg4: memref<1x72x32xbf16, #tpu.memory_space<vmem>>) attributes {dimension_semantics = [#tpu.dimension_semantics<parallel>], iteration_bounds = array<i64: 2>, scalar_prefetch = 0 : i64, scratch_operands = 0 : i64, tpu.core_type = #tpu.core_type<tc>, window_params = [{transform_indices = @transform_0, window_bounds = array<i64: 1, 82, 4>}, {pipeline_mode = #tpu.pipeline_mode<synchronous>, transform_indices = @transform_1, window_bounds = array<i64: 4, 4, 32>}, {pipeline_mode = #tpu.pipeline_mode<synchronous>, transform_indices = @transform_2, window_bounds = array<i64: 1, 32>}, {transform_indices = @transform_3, window_bounds = array<i64: 1, 72, 32>}]} {
    %cst = arith.constant 0.000000e+00 : f32
    %0 = vector.broadcast %cst : f32 to vector<72x32xf32>
    %c0 = arith.constant 0 : index
    %c0_0 = arith.constant 0 : index
    %c0_1 = arith.constant 0 : index
    %1 = vector.load %arg1[%c0, %c0_0, %c0_1] : memref<1x82x4xbf16, #tpu.memory_space<vmem>>, vector<1x72x4xbf16>
    %2 = vector.shape_cast %1 : vector<1x72x4xbf16> to vector<72x4xbf16>
    %c0_2 = arith.constant 0 : index
    %c0_3 = arith.constant 0 : index
    %c0_4 = arith.constant 0 : index
    %3 = vector.load %arg2[%c0_2, %c0_3, %c0_4] : memref<4x4x32xbf16, #tpu.memory_space<vmem>>, vector<1x4x32xbf16>
    %4 = vector.shape_cast %3 : vector<1x4x32xbf16> to vector<4x32xbf16>
    %cst_5 = arith.constant dense<0.000000e+00> : vector<72x32xf32>
    %5 = tpu.matmul %2, %4, %cst_5 {dimension_numbers = #tpu.dot_dimension_numbers<[1], [0], [0], [1], [0, 0, 1, 1], [], []>} : vector<72x4xbf16>, vector<4x32xbf16>, vector<72x32xf32> -> vector<72x32xf32>
    %6 = arith.addf %0, %5 : vector<72x32xf32>
    %c0_6 = arith.constant 0 : index
    %c1 = arith.constant 1 : index
    %c0_7 = arith.constant 0 : index
    %7 = vector.load %arg1[%c0_6, %c1, %c0_7] : memref<1x82x4xbf16, #tpu.memory_space<vmem>>, vector<1x72x4xbf16>
    %8 = vector.shape_cast %7 : vector<1x72x4xbf16> to vector<72x4xbf16>
    %c1_8 = arith.constant 1 : index
    %c0_9 = arith.constant 0 : index
    %c0_10 = arith.constant 0 : index
    %9 = vector.load %arg2[%c1_8, %c0_9, %c0_10] : memref<4x4x32xbf16, #tpu.memory_space<vmem>>, vector<1x4x32xbf16>
    %10 = vector.shape_cast %9 : vector<1x4x32xbf16> to vector<4x32xbf16>
    %cst_11 = arith.constant dense<0.000000e+00> : vector<72x32xf32>
    %11 = tpu.matmul %8, %10, %cst_11 {dimension_numbers = #tpu.dot_dimension_numbers<[1], [0], [0], [1], [0, 0, 1, 1], [], []>} : vector<72x4xbf16>, vector<4x32xbf16>, vector<72x32xf32> -> vector<72x32xf32>
    %12 = arith.addf %6, %11 : vector<72x32xf32>
    %c0_12 = arith.constant 0 : index
    %c9 = arith.constant 9 : index
    %c0_13 = arith.constant 0 : index
    %13 = vector.load %arg1[%c0_12, %c9, %c0_13] : memref<1x82x4xbf16, #tpu.memory_space<vmem>>, vector<1x72x4xbf16>
    %14 = vector.shape_cast %13 : vector<1x72x4xbf16> to vector<72x4xbf16>
    %c2 = arith.constant 2 : index
    %c0_14 = arith.constant 0 : index
    %c0_15 = arith.constant 0 : index
    %15 = vector.load %arg2[%c2, %c0_14, %c0_15] : memref<4x4x32xbf16, #tpu.memory_space<vmem>>, vector<1x4x32xbf16>
    %16 = vector.shape_cast %15 : vector<1x4x32xbf16> to vector<4x32xbf16>
    %cst_16 = arith.constant dense<0.000000e+00> : vector<72x32xf32>
    %17 = tpu.matmul %14, %16, %cst_16 {dimension_numbers = #tpu.dot_dimension_numbers<[1], [0], [0], [1], [0, 0, 1, 1], [], []>} : vector<72x4xbf16>, vector<4x32xbf16>, vector<72x32xf32> -> vector<72x32xf32>
    %18 = arith.addf %12, %17 : vector<72x32xf32>
    %c0_17 = arith.constant 0 : index
    %c10 = arith.constant 10 : index
    %c0_18 = arith.constant 0 : index
    %19 = vector.load %arg1[%c0_17, %c10, %c0_18] : memref<1x82x4xbf16, #tpu.memory_space<vmem>>, vector<1x72x4xbf16>
    %20 = vector.shape_cast %19 : vector<1x72x4xbf16> to vector<72x4xbf16>
    %c3 = arith.constant 3 : index
    %c0_19 = arith.constant 0 : index
    %c0_20 = arith.constant 0 : index
    %21 = vector.load %arg2[%c3, %c0_19, %c0_20] : memref<4x4x32xbf16, #tpu.memory_space<vmem>>, vector<1x4x32xbf16>
    %22 = vector.shape_cast %21 : vector<1x4x32xbf16> to vector<4x32xbf16>
    %cst_21 = arith.constant dense<0.000000e+00> : vector<72x32xf32>
    %23 = tpu.matmul %20, %22, %cst_21 {dimension_numbers = #tpu.dot_dimension_numbers<[1], [0], [0], [1], [0, 0, 1, 1], [], []>} : vector<72x4xbf16>, vector<4x32xbf16>, vector<72x32xf32> -> vector<72x32xf32>
    %24 = arith.addf %18, %23 : vector<72x32xf32>
    %c0_22 = arith.constant 0 : index
    %c0_23 = arith.constant 0 : index
    %25 = vector.load %arg3[%c0_22, %c0_23] : memref<1x32xf32, #tpu.memory_space<vmem>>, vector<1x32xf32>
    %26 = vector.broadcast %25 : vector<1x32xf32> to vector<72x32xf32>
    %27 = arith.addf %24, %26 : vector<72x32xf32>
    %cst_24 = arith.constant 0.000000e+00 : f32
    %28 = vector.broadcast %cst_24 : f32 to vector<72x32xf32>
    %29 = arith.maximumf %27, %28 : vector<72x32xf32>
    %30 = arith.truncf %29 : vector<72x32xf32> to vector<72x32xbf16>
    %c0_25 = arith.constant 0 : index
    %c0_26 = arith.constant 0 : index
    %c0_27 = arith.constant 0 : index
    %31 = vector.load %arg4[%c0_25, %c0_26, %c0_27] : memref<1x72x32xbf16, #tpu.memory_space<vmem>>, vector<1x72x32xbf16>
    %32 = vector.shape_cast %31 : vector<1x72x32xbf16> to vector<72x32xbf16>
    %33 = vector.shape_cast %30 : vector<72x32xbf16> to vector<1x72x32xbf16>
    tpu.vector_store %arg4[%c0_25, %c0_26, %c0_27], %33 {strides = array<i32>} : memref<1x72x32xbf16, #tpu.memory_space<vmem>>, vector<1x72x32xbf16>,
    return
  }
  func.func @transform_0(%arg0: i32) -> (i32, i32, i32) {
    %c0_i32 = arith.constant 0 : i32
    %c0_i32_0 = arith.constant 0 : i32
    %c0_i32_1 = arith.constant 0 : i32
    return %arg0, %c0_i32, %c0_i32_0 : i32, i32, i32
  }
  func.func @transform_1(%arg0: i32) -> (i32, i32, i32) {
    %c0_i32 = arith.constant 0 : i32
    %c0_i32_0 = arith.constant 0 : i32
    %c0_i32_1 = arith.constant 0 : i32
    %c0_i32_2 = arith.constant 0 : i32
    return %c0_i32, %c0_i32_0, %c0_i32_1 : i32, i32, i32
  }
  func.func @transform_2(%arg0: i32) -> (i32, i32) {
    %c0_i32 = arith.constant 0 : i32
    %c0_i32_0 = arith.constant 0 : i32
    %c0_i32_1 = arith.constant 0 : i32
    return %c0_i32, %c0_i32_0 : i32, i32
  }
  func.func @transform_3(%arg0: i32) -> (i32, i32, i32) {
    %c0_i32 = arith.constant 0 : i32
    %c0_i32_0 = arith.constant 0 : i32
    %c0_i32_1 = arith.constant 0 : i32
    return %arg0, %c0_i32, %c0_i32_0 : i32, i32, i32
  }
}

module attributes {stable_mosaic.version = 11 : i64} {
  func.func @_tapconv_kernel(%arg0: i32, %arg1: memref<1x26x128xbf16, #tpu.memory_space<vmem>>, %arg2: memref<4x128x64xbf16, #tpu.memory_space<vmem>>, %arg3: memref<1x64xf32, #tpu.memory_space<vmem>>, %arg4: memref<1x20x64xbf16, #tpu.memory_space<vmem>>) attributes {dimension_semantics = [#tpu.dimension_semantics<parallel>], iteration_bounds = array<i64: 2>, scalar_prefetch = 0 : i64, scratch_operands = 0 : i64, tpu.core_type = #tpu.core_type<tc>, window_params = [{transform_indices = @transform_0, window_bounds = array<i64: 1, 26, 128>}, {pipeline_mode = #tpu.pipeline_mode<synchronous>, transform_indices = @transform_1, window_bounds = array<i64: 4, 128, 64>}, {pipeline_mode = #tpu.pipeline_mode<synchronous>, transform_indices = @transform_2, window_bounds = array<i64: 1, 64>}, {transform_indices = @transform_3, window_bounds = array<i64: 1, 20, 64>}]} {
    %cst = arith.constant 0.000000e+00 : f32
    %0 = vector.broadcast %cst : f32 to vector<20x64xf32>
    %c0 = arith.constant 0 : index
    %c0_0 = arith.constant 0 : index
    %c0_1 = arith.constant 0 : index
    %1 = vector.load %arg1[%c0, %c0_0, %c0_1] : memref<1x26x128xbf16, #tpu.memory_space<vmem>>, vector<1x20x128xbf16>
    %2 = vector.shape_cast %1 : vector<1x20x128xbf16> to vector<20x128xbf16>
    %c0_2 = arith.constant 0 : index
    %c0_3 = arith.constant 0 : index
    %c0_4 = arith.constant 0 : index
    %3 = vector.load %arg2[%c0_2, %c0_3, %c0_4] : memref<4x128x64xbf16, #tpu.memory_space<vmem>>, vector<1x128x64xbf16>
    %4 = vector.shape_cast %3 : vector<1x128x64xbf16> to vector<128x64xbf16>
    %cst_5 = arith.constant dense<0.000000e+00> : vector<20x64xf32>
    %5 = tpu.matmul %2, %4, %cst_5 {dimension_numbers = #tpu.dot_dimension_numbers<[1], [0], [0], [1], [0, 0, 1, 1], [], []>} : vector<20x128xbf16>, vector<128x64xbf16>, vector<20x64xf32> -> vector<20x64xf32>
    %6 = arith.addf %0, %5 : vector<20x64xf32>
    %c0_6 = arith.constant 0 : index
    %c1 = arith.constant 1 : index
    %c0_7 = arith.constant 0 : index
    %7 = vector.load %arg1[%c0_6, %c1, %c0_7] : memref<1x26x128xbf16, #tpu.memory_space<vmem>>, vector<1x20x128xbf16>
    %8 = vector.shape_cast %7 : vector<1x20x128xbf16> to vector<20x128xbf16>
    %c1_8 = arith.constant 1 : index
    %c0_9 = arith.constant 0 : index
    %c0_10 = arith.constant 0 : index
    %9 = vector.load %arg2[%c1_8, %c0_9, %c0_10] : memref<4x128x64xbf16, #tpu.memory_space<vmem>>, vector<1x128x64xbf16>
    %10 = vector.shape_cast %9 : vector<1x128x64xbf16> to vector<128x64xbf16>
    %cst_11 = arith.constant dense<0.000000e+00> : vector<20x64xf32>
    %11 = tpu.matmul %8, %10, %cst_11 {dimension_numbers = #tpu.dot_dimension_numbers<[1], [0], [0], [1], [0, 0, 1, 1], [], []>} : vector<20x128xbf16>, vector<128x64xbf16>, vector<20x64xf32> -> vector<20x64xf32>
    %12 = arith.addf %6, %11 : vector<20x64xf32>
    %c0_12 = arith.constant 0 : index
    %c5 = arith.constant 5 : index
    %c0_13 = arith.constant 0 : index
    %13 = vector.load %arg1[%c0_12, %c5, %c0_13] : memref<1x26x128xbf16, #tpu.memory_space<vmem>>, vector<1x20x128xbf16>
    %14 = vector.shape_cast %13 : vector<1x20x128xbf16> to vector<20x128xbf16>
    %c2 = arith.constant 2 : index
    %c0_14 = arith.constant 0 : index
    %c0_15 = arith.constant 0 : index
    %15 = vector.load %arg2[%c2, %c0_14, %c0_15] : memref<4x128x64xbf16, #tpu.memory_space<vmem>>, vector<1x128x64xbf16>
    %16 = vector.shape_cast %15 : vector<1x128x64xbf16> to vector<128x64xbf16>
    %cst_16 = arith.constant dense<0.000000e+00> : vector<20x64xf32>
    %17 = tpu.matmul %14, %16, %cst_16 {dimension_numbers = #tpu.dot_dimension_numbers<[1], [0], [0], [1], [0, 0, 1, 1], [], []>} : vector<20x128xbf16>, vector<128x64xbf16>, vector<20x64xf32> -> vector<20x64xf32>
    %18 = arith.addf %12, %17 : vector<20x64xf32>
    %c0_17 = arith.constant 0 : index
    %c6 = arith.constant 6 : index
    %c0_18 = arith.constant 0 : index
    %19 = vector.load %arg1[%c0_17, %c6, %c0_18] : memref<1x26x128xbf16, #tpu.memory_space<vmem>>, vector<1x20x128xbf16>
    %20 = vector.shape_cast %19 : vector<1x20x128xbf16> to vector<20x128xbf16>
    %c3 = arith.constant 3 : index
    %c0_19 = arith.constant 0 : index
    %c0_20 = arith.constant 0 : index
    %21 = vector.load %arg2[%c3, %c0_19, %c0_20] : memref<4x128x64xbf16, #tpu.memory_space<vmem>>, vector<1x128x64xbf16>
    %22 = vector.shape_cast %21 : vector<1x128x64xbf16> to vector<128x64xbf16>
    %cst_21 = arith.constant dense<0.000000e+00> : vector<20x64xf32>
    %23 = tpu.matmul %20, %22, %cst_21 {dimension_numbers = #tpu.dot_dimension_numbers<[1], [0], [0], [1], [0, 0, 1, 1], [], []>} : vector<20x128xbf16>, vector<128x64xbf16>, vector<20x64xf32> -> vector<20x64xf32>
    %24 = arith.addf %18, %23 : vector<20x64xf32>
    %c0_22 = arith.constant 0 : index
    %c0_23 = arith.constant 0 : index
    %25 = vector.load %arg3[%c0_22, %c0_23] : memref<1x64xf32, #tpu.memory_space<vmem>>, vector<1x64xf32>
    %26 = vector.broadcast %25 : vector<1x64xf32> to vector<20x64xf32>
    %27 = arith.addf %24, %26 : vector<20x64xf32>
    %cst_24 = arith.constant 0.000000e+00 : f32
    %28 = vector.broadcast %cst_24 : f32 to vector<20x64xf32>
    %29 = arith.maximumf %27, %28 : vector<20x64xf32>
    %30 = arith.truncf %29 : vector<20x64xf32> to vector<20x64xbf16>
    %c0_25 = arith.constant 0 : index
    %c0_26 = arith.constant 0 : index
    %c0_27 = arith.constant 0 : index
    %31 = vector.load %arg4[%c0_25, %c0_26, %c0_27] : memref<1x20x64xbf16, #tpu.memory_space<vmem>>, vector<1x20x64xbf16>
    %32 = vector.shape_cast %31 : vector<1x20x64xbf16> to vector<20x64xbf16>
    %33 = vector.shape_cast %30 : vector<20x64xbf16> to vector<1x20x64xbf16>
    tpu.vector_store %arg4[%c0_25, %c0_26, %c0_27], %33 {strides = array<i32>} : memref<1x20x64xbf16, #tpu.memory_space<vmem>>, vector<1x20x64xbf16>,
    return
  }
  func.func @transform_0(%arg0: i32) -> (i32, i32, i32) {
    %c0_i32 = arith.constant 0 : i32
    %c0_i32_0 = arith.constant 0 : i32
    %c0_i32_1 = arith.constant 0 : i32
    return %arg0, %c0_i32, %c0_i32_0 : i32, i32, i32
  }
  func.func @transform_1(%arg0: i32) -> (i32, i32, i32) {
    %c0_i32 = arith.constant 0 : i32
    %c0_i32_0 = arith.constant 0 : i32
    %c0_i32_1 = arith.constant 0 : i32
    %c0_i32_2 = arith.constant 0 : i32
    return %c0_i32, %c0_i32_0, %c0_i32_1 : i32, i32, i32
  }
  func.func @transform_2(%arg0: i32) -> (i32, i32) {
    %c0_i32 = arith.constant 0 : i32
    %c0_i32_0 = arith.constant 0 : i32
    %c0_i32_1 = arith.constant 0 : i32
    return %c0_i32, %c0_i32_0 : i32, i32
  }
  func.func @transform_3(%arg0: i32) -> (i32, i32, i32) {
    %c0_i32 = arith.constant 0 : i32
    %c0_i32_0 = arith.constant 0 : i32
    %c0_i32_1 = arith.constant 0 : i32
    return %arg0, %c0_i32, %c0_i32_0 : i32, i32, i32
  }
}

module attributes {stable_mosaic.version = 11 : i64} {
  func.func @_tapconv_kernel(%arg0: i32, %arg1: memref<1x10x256xbf16, #tpu.memory_space<vmem>>, %arg2: memref<4x256x128xbf16, #tpu.memory_space<vmem>>, %arg3: memref<1x128xf32, #tpu.memory_space<vmem>>, %arg4: memref<1x6x128xbf16, #tpu.memory_space<vmem>>) attributes {dimension_semantics = [#tpu.dimension_semantics<parallel>], iteration_bounds = array<i64: 2>, scalar_prefetch = 0 : i64, scratch_operands = 0 : i64, tpu.core_type = #tpu.core_type<tc>, window_params = [{transform_indices = @transform_0, window_bounds = array<i64: 1, 10, 256>}, {pipeline_mode = #tpu.pipeline_mode<synchronous>, transform_indices = @transform_1, window_bounds = array<i64: 4, 256, 128>}, {pipeline_mode = #tpu.pipeline_mode<synchronous>, transform_indices = @transform_2, window_bounds = array<i64: 1, 128>}, {transform_indices = @transform_3, window_bounds = array<i64: 1, 6, 128>}]} {
    %cst = arith.constant 0.000000e+00 : f32
    %0 = vector.broadcast %cst : f32 to vector<6x128xf32>
    %c0 = arith.constant 0 : index
    %c0_0 = arith.constant 0 : index
    %c0_1 = arith.constant 0 : index
    %1 = vector.load %arg1[%c0, %c0_0, %c0_1] : memref<1x10x256xbf16, #tpu.memory_space<vmem>>, vector<1x6x256xbf16>
    %2 = vector.shape_cast %1 : vector<1x6x256xbf16> to vector<6x256xbf16>
    %c0_2 = arith.constant 0 : index
    %c0_3 = arith.constant 0 : index
    %c0_4 = arith.constant 0 : index
    %3 = vector.load %arg2[%c0_2, %c0_3, %c0_4] : memref<4x256x128xbf16, #tpu.memory_space<vmem>>, vector<1x256x128xbf16>
    %4 = vector.shape_cast %3 : vector<1x256x128xbf16> to vector<256x128xbf16>
    %cst_5 = arith.constant dense<0.000000e+00> : vector<6x128xf32>
    %5 = tpu.matmul %2, %4, %cst_5 {dimension_numbers = #tpu.dot_dimension_numbers<[1], [0], [0], [1], [0, 0, 1, 1], [], []>} : vector<6x256xbf16>, vector<256x128xbf16>, vector<6x128xf32> -> vector<6x128xf32>
    %6 = arith.addf %0, %5 : vector<6x128xf32>
    %c0_6 = arith.constant 0 : index
    %c1 = arith.constant 1 : index
    %c0_7 = arith.constant 0 : index
    %7 = vector.load %arg1[%c0_6, %c1, %c0_7] : memref<1x10x256xbf16, #tpu.memory_space<vmem>>, vector<1x6x256xbf16>
    %8 = vector.shape_cast %7 : vector<1x6x256xbf16> to vector<6x256xbf16>
    %c1_8 = arith.constant 1 : index
    %c0_9 = arith.constant 0 : index
    %c0_10 = arith.constant 0 : index
    %9 = vector.load %arg2[%c1_8, %c0_9, %c0_10] : memref<4x256x128xbf16, #tpu.memory_space<vmem>>, vector<1x256x128xbf16>
    %10 = vector.shape_cast %9 : vector<1x256x128xbf16> to vector<256x128xbf16>
    %cst_11 = arith.constant dense<0.000000e+00> : vector<6x128xf32>
    %11 = tpu.matmul %8, %10, %cst_11 {dimension_numbers = #tpu.dot_dimension_numbers<[1], [0], [0], [1], [0, 0, 1, 1], [], []>} : vector<6x256xbf16>, vector<256x128xbf16>, vector<6x128xf32> -> vector<6x128xf32>
    %12 = arith.addf %6, %11 : vector<6x128xf32>
    %c0_12 = arith.constant 0 : index
    %c3 = arith.constant 3 : index
    %c0_13 = arith.constant 0 : index
    %13 = vector.load %arg1[%c0_12, %c3, %c0_13] : memref<1x10x256xbf16, #tpu.memory_space<vmem>>, vector<1x6x256xbf16>
    %14 = vector.shape_cast %13 : vector<1x6x256xbf16> to vector<6x256xbf16>
    %c2 = arith.constant 2 : index
    %c0_14 = arith.constant 0 : index
    %c0_15 = arith.constant 0 : index
    %15 = vector.load %arg2[%c2, %c0_14, %c0_15] : memref<4x256x128xbf16, #tpu.memory_space<vmem>>, vector<1x256x128xbf16>
    %16 = vector.shape_cast %15 : vector<1x256x128xbf16> to vector<256x128xbf16>
    %cst_16 = arith.constant dense<0.000000e+00> : vector<6x128xf32>
    %17 = tpu.matmul %14, %16, %cst_16 {dimension_numbers = #tpu.dot_dimension_numbers<[1], [0], [0], [1], [0, 0, 1, 1], [], []>} : vector<6x256xbf16>, vector<256x128xbf16>, vector<6x128xf32> -> vector<6x128xf32>
    %18 = arith.addf %12, %17 : vector<6x128xf32>
    %c0_17 = arith.constant 0 : index
    %c4 = arith.constant 4 : index
    %c0_18 = arith.constant 0 : index
    %19 = vector.load %arg1[%c0_17, %c4, %c0_18] : memref<1x10x256xbf16, #tpu.memory_space<vmem>>, vector<1x6x256xbf16>
    %20 = vector.shape_cast %19 : vector<1x6x256xbf16> to vector<6x256xbf16>
    %c3_19 = arith.constant 3 : index
    %c0_20 = arith.constant 0 : index
    %c0_21 = arith.constant 0 : index
    %21 = vector.load %arg2[%c3_19, %c0_20, %c0_21] : memref<4x256x128xbf16, #tpu.memory_space<vmem>>, vector<1x256x128xbf16>
    %22 = vector.shape_cast %21 : vector<1x256x128xbf16> to vector<256x128xbf16>
    %cst_22 = arith.constant dense<0.000000e+00> : vector<6x128xf32>
    %23 = tpu.matmul %20, %22, %cst_22 {dimension_numbers = #tpu.dot_dimension_numbers<[1], [0], [0], [1], [0, 0, 1, 1], [], []>} : vector<6x256xbf16>, vector<256x128xbf16>, vector<6x128xf32> -> vector<6x128xf32>
    %24 = arith.addf %18, %23 : vector<6x128xf32>
    %c0_23 = arith.constant 0 : index
    %c0_24 = arith.constant 0 : index
    %25 = vector.load %arg3[%c0_23, %c0_24] : memref<1x128xf32, #tpu.memory_space<vmem>>, vector<1x128xf32>
    %26 = vector.broadcast %25 : vector<1x128xf32> to vector<6x128xf32>
    %27 = arith.addf %24, %26 : vector<6x128xf32>
    %cst_25 = arith.constant 0.000000e+00 : f32
    %28 = vector.broadcast %cst_25 : f32 to vector<6x128xf32>
    %29 = arith.maximumf %27, %28 : vector<6x128xf32>
    %30 = arith.truncf %29 : vector<6x128xf32> to vector<6x128xbf16>
    %c0_26 = arith.constant 0 : index
    %c0_27 = arith.constant 0 : index
    %c0_28 = arith.constant 0 : index
    %31 = vector.load %arg4[%c0_26, %c0_27, %c0_28] : memref<1x6x128xbf16, #tpu.memory_space<vmem>>, vector<1x6x128xbf16>
    %32 = vector.shape_cast %31 : vector<1x6x128xbf16> to vector<6x128xbf16>
    %33 = vector.shape_cast %30 : vector<6x128xbf16> to vector<1x6x128xbf16>
    tpu.vector_store %arg4[%c0_26, %c0_27, %c0_28], %33 {strides = array<i32>} : memref<1x6x128xbf16, #tpu.memory_space<vmem>>, vector<1x6x128xbf16>,
    return
  }
  func.func @transform_0(%arg0: i32) -> (i32, i32, i32) {
    %c0_i32 = arith.constant 0 : i32
    %c0_i32_0 = arith.constant 0 : i32
    %c0_i32_1 = arith.constant 0 : i32
    return %arg0, %c0_i32, %c0_i32_0 : i32, i32, i32
  }
  func.func @transform_1(%arg0: i32) -> (i32, i32, i32) {
    %c0_i32 = arith.constant 0 : i32
    %c0_i32_0 = arith.constant 0 : i32
    %c0_i32_1 = arith.constant 0 : i32
    %c0_i32_2 = arith.constant 0 : i32
    return %c0_i32, %c0_i32_0, %c0_i32_1 : i32, i32, i32
  }
  func.func @transform_2(%arg0: i32) -> (i32, i32) {
    %c0_i32 = arith.constant 0 : i32
    %c0_i32_0 = arith.constant 0 : i32
    %c0_i32_1 = arith.constant 0 : i32
    return %c0_i32, %c0_i32_0 : i32, i32
  }
  func.func @transform_3(%arg0: i32) -> (i32, i32, i32) {
    %c0_i32 = arith.constant 0 : i32
    %c0_i32_0 = arith.constant 0 : i32
    %c0_i32_1 = arith.constant 0 : i32
    return %arg0, %c0_i32, %c0_i32_0 : i32, i32, i32
  }
}

module attributes {stable_mosaic.version = 11 : i64} {
  func.func @_fc_chain_kernel(%arg0: i32, %arg1: memref<2x512xbf16, #tpu.memory_space<vmem>>, %arg2: memref<512x32xbf16, #tpu.memory_space<vmem>>, %arg3: memref<1x32xf32, #tpu.memory_space<vmem>>, %arg4: memref<2x16xf32, #tpu.memory_space<vmem>>, %arg5: memref<16x512xbf16, #tpu.memory_space<vmem>>, %arg6: memref<1x512xf32, #tpu.memory_space<vmem>>, %arg7: memref<2x32xf32, #tpu.memory_space<vmem>>, %arg8: memref<2x512xbf16, #tpu.memory_space<vmem>>) attributes {dimension_semantics = [#tpu.dimension_semantics<parallel>], iteration_bounds = array<i64: 1>, scalar_prefetch = 0 : i64, scratch_operands = 0 : i64, tpu.core_type = #tpu.core_type<tc>, window_params = [{transform_indices = @transform_0, window_bounds = array<i64: 2, 512>}, {pipeline_mode = #tpu.pipeline_mode<synchronous>, transform_indices = @transform_1, window_bounds = array<i64: 512, 32>}, {pipeline_mode = #tpu.pipeline_mode<synchronous>, transform_indices = @transform_2, window_bounds = array<i64: 1, 32>}, {transform_indices = @transform_3, window_bounds = array<i64: 2, 16>}, {pipeline_mode = #tpu.pipeline_mode<synchronous>, transform_indices = @transform_4, window_bounds = array<i64: 16, 512>}, {pipeline_mode = #tpu.pipeline_mode<synchronous>, transform_indices = @transform_5, window_bounds = array<i64: 1, 512>}, {transform_indices = @transform_6, window_bounds = array<i64: 2, 32>}, {transform_indices = @transform_7, window_bounds = array<i64: 2, 512>}]} {
    %c0 = arith.constant 0 : index
    %c0_0 = arith.constant 0 : index
    %0 = vector.load %arg1[%c0, %c0_0] : memref<2x512xbf16, #tpu.memory_space<vmem>>, vector<2x512xbf16>
    %c0_1 = arith.constant 0 : index
    %c0_2 = arith.constant 0 : index
    %1 = vector.load %arg2[%c0_1, %c0_2] : memref<512x32xbf16, #tpu.memory_space<vmem>>, vector<512x32xbf16>
    %cst = arith.constant dense<0.000000e+00> : vector<2x32xf32>
    %2 = tpu.matmul %0, %1, %cst {dimension_numbers = #tpu.dot_dimension_numbers<[1], [0], [0], [1], [0, 0, 1, 1], [], []>} : vector<2x512xbf16>, vector<512x32xbf16>, vector<2x32xf32> -> vector<2x32xf32>
    %c0_3 = arith.constant 0 : index
    %c0_4 = arith.constant 0 : index
    %3 = vector.load %arg3[%c0_3, %c0_4] : memref<1x32xf32, #tpu.memory_space<vmem>>, vector<1x32xf32>
    %4 = vector.broadcast %3 : vector<1x32xf32> to vector<2x32xf32>
    %5 = arith.addf %2, %4 : vector<2x32xf32>
    %6 = vector.extract_strided_slice %5 {offsets = [0, 0], sizes = [2, 16], strides = [1, 1]} : vector<2x32xf32> to vector<2x16xf32>
    %7 = vector.extract_strided_slice %5 {offsets = [0, 16], sizes = [2, 16], strides = [1, 1]} : vector<2x32xf32> to vector<2x16xf32>
    %c0_5 = arith.constant 0 : index
    %c0_6 = arith.constant 0 : index
    %8 = vector.load %arg4[%c0_5, %c0_6] : memref<2x16xf32, #tpu.memory_space<vmem>>, vector<2x16xf32>
    %cst_7 = arith.constant 5.000000e-01 : f32
    %9 = vector.broadcast %cst_7 : f32 to vector<2x16xf32>
    %10 = arith.mulf %9, %7 : vector<2x16xf32>
    %11 = math.exp %10 : vector<2x16xf32>
    %12 = arith.mulf %8, %11 : vector<2x16xf32>
    %13 = arith.addf %6, %12 : vector<2x16xf32>
    %14 = arith.truncf %13 : vector<2x16xf32> to vector<2x16xbf16>
    %c0_8 = arith.constant 0 : index
    %c0_9 = arith.constant 0 : index
    %15 = vector.load %arg5[%c0_8, %c0_9] : memref<16x512xbf16, #tpu.memory_space<vmem>>, vector<16x512xbf16>
    %cst_10 = arith.constant dense<0.000000e+00> : vector<2x512xf32>
    %16 = tpu.matmul %14, %15, %cst_10 {dimension_numbers = #tpu.dot_dimension_numbers<[1], [0], [0], [1], [0, 0, 1, 1], [], []>} : vector<2x16xbf16>, vector<16x512xbf16>, vector<2x512xf32> -> vector<2x512xf32>
    %c0_11 = arith.constant 0 : index
    %c0_12 = arith.constant 0 : index
    %17 = vector.load %arg6[%c0_11, %c0_12] : memref<1x512xf32, #tpu.memory_space<vmem>>, vector<1x512xf32>
    %18 = vector.broadcast %17 : vector<1x512xf32> to vector<2x512xf32>
    %19 = arith.addf %16, %18 : vector<2x512xf32>
    %c0_13 = arith.constant 0 : index
    %c0_14 = arith.constant 0 : index
    %20 = vector.load %arg7[%c0_13, %c0_14] : memref<2x32xf32, #tpu.memory_space<vmem>>, vector<2x32xf32>
    tpu.vector_store %arg7[%c0_13, %c0_14], %5 {strides = array<i32>} : memref<2x32xf32, #tpu.memory_space<vmem>>, vector<2x32xf32>,
    %21 = arith.truncf %19 : vector<2x512xf32> to vector<2x512xbf16>
    %c0_15 = arith.constant 0 : index
    %c0_16 = arith.constant 0 : index
    %22 = vector.load %arg8[%c0_15, %c0_16] : memref<2x512xbf16, #tpu.memory_space<vmem>>, vector<2x512xbf16>
    tpu.vector_store %arg8[%c0_15, %c0_16], %21 {strides = array<i32>} : memref<2x512xbf16, #tpu.memory_space<vmem>>, vector<2x512xbf16>,
    return
  }
  func.func @transform_0(%arg0: i32) -> (i32, i32) {
    %c0_i32 = arith.constant 0 : i32
    %c0_i32_0 = arith.constant 0 : i32
    return %arg0, %c0_i32 : i32, i32
  }
  func.func @transform_1(%arg0: i32) -> (i32, i32) {
    %c0_i32 = arith.constant 0 : i32
    %c0_i32_0 = arith.constant 0 : i32
    %c0_i32_1 = arith.constant 0 : i32
    return %c0_i32, %c0_i32_0 : i32, i32
  }
  func.func @transform_2(%arg0: i32) -> (i32, i32) {
    %c0_i32 = arith.constant 0 : i32
    %c0_i32_0 = arith.constant 0 : i32
    %c0_i32_1 = arith.constant 0 : i32
    return %c0_i32, %c0_i32_0 : i32, i32
  }
  func.func @transform_3(%arg0: i32) -> (i32, i32) {
    %c0_i32 = arith.constant 0 : i32
    %c0_i32_0 = arith.constant 0 : i32
    return %arg0, %c0_i32 : i32, i32
  }
  func.func @transform_4(%arg0: i32) -> (i32, i32) {
    %c0_i32 = arith.constant 0 : i32
    %c0_i32_0 = arith.constant 0 : i32
    %c0_i32_1 = arith.constant 0 : i32
    return %c0_i32, %c0_i32_0 : i32, i32
  }
  func.func @transform_5(%arg0: i32) -> (i32, i32) {
    %c0_i32 = arith.constant 0 : i32
    %c0_i32_0 = arith.constant 0 : i32
    %c0_i32_1 = arith.constant 0 : i32
    return %c0_i32, %c0_i32_0 : i32, i32
  }
  func.func @transform_6(%arg0: i32) -> (i32, i32) {
    %c0_i32 = arith.constant 0 : i32
    %c0_i32_0 = arith.constant 0 : i32
    return %arg0, %c0_i32 : i32, i32
  }
  func.func @transform_7(%arg0: i32) -> (i32, i32) {
    %c0_i32 = arith.constant 0 : i32
    %c0_i32_0 = arith.constant 0 : i32
    return %arg0, %c0_i32 : i32, i32
  }
}

module attributes {stable_mosaic.version = 11 : i64} {
  func.func @_tapconv_kernel(%arg0: i32, %arg1: memref<1x17x128xbf16, #tpu.memory_space<vmem>>, %arg2: memref<4x128x256xbf16, #tpu.memory_space<vmem>>, %arg3: memref<1x256xf32, #tpu.memory_space<vmem>>, %arg4: memref<1x12x256xbf16, #tpu.memory_space<vmem>>) attributes {dimension_semantics = [#tpu.dimension_semantics<parallel>], iteration_bounds = array<i64: 2>, scalar_prefetch = 0 : i64, scratch_operands = 0 : i64, tpu.core_type = #tpu.core_type<tc>, window_params = [{transform_indices = @transform_0, window_bounds = array<i64: 1, 17, 128>}, {pipeline_mode = #tpu.pipeline_mode<synchronous>, transform_indices = @transform_1, window_bounds = array<i64: 4, 128, 256>}, {pipeline_mode = #tpu.pipeline_mode<synchronous>, transform_indices = @transform_2, window_bounds = array<i64: 1, 256>}, {transform_indices = @transform_3, window_bounds = array<i64: 1, 12, 256>}]} {
    %cst = arith.constant 0.000000e+00 : f32
    %0 = vector.broadcast %cst : f32 to vector<12x256xf32>
    %c0 = arith.constant 0 : index
    %c0_0 = arith.constant 0 : index
    %c0_1 = arith.constant 0 : index
    %1 = vector.load %arg1[%c0, %c0_0, %c0_1] : memref<1x17x128xbf16, #tpu.memory_space<vmem>>, vector<1x12x128xbf16>
    %2 = vector.shape_cast %1 : vector<1x12x128xbf16> to vector<12x128xbf16>
    %c0_2 = arith.constant 0 : index
    %c0_3 = arith.constant 0 : index
    %c0_4 = arith.constant 0 : index
    %3 = vector.load %arg2[%c0_2, %c0_3, %c0_4] : memref<4x128x256xbf16, #tpu.memory_space<vmem>>, vector<1x128x256xbf16>
    %4 = vector.shape_cast %3 : vector<1x128x256xbf16> to vector<128x256xbf16>
    %cst_5 = arith.constant dense<0.000000e+00> : vector<12x256xf32>
    %5 = tpu.matmul %2, %4, %cst_5 {dimension_numbers = #tpu.dot_dimension_numbers<[1], [0], [0], [1], [0, 0, 1, 1], [], []>} : vector<12x128xbf16>, vector<128x256xbf16>, vector<12x256xf32> -> vector<12x256xf32>
    %6 = arith.addf %0, %5 : vector<12x256xf32>
    %c0_6 = arith.constant 0 : index
    %c1 = arith.constant 1 : index
    %c0_7 = arith.constant 0 : index
    %7 = vector.load %arg1[%c0_6, %c1, %c0_7] : memref<1x17x128xbf16, #tpu.memory_space<vmem>>, vector<1x12x128xbf16>
    %8 = vector.shape_cast %7 : vector<1x12x128xbf16> to vector<12x128xbf16>
    %c1_8 = arith.constant 1 : index
    %c0_9 = arith.constant 0 : index
    %c0_10 = arith.constant 0 : index
    %9 = vector.load %arg2[%c1_8, %c0_9, %c0_10] : memref<4x128x256xbf16, #tpu.memory_space<vmem>>, vector<1x128x256xbf16>
    %10 = vector.shape_cast %9 : vector<1x128x256xbf16> to vector<128x256xbf16>
    %cst_11 = arith.constant dense<0.000000e+00> : vector<12x256xf32>
    %11 = tpu.matmul %8, %10, %cst_11 {dimension_numbers = #tpu.dot_dimension_numbers<[1], [0], [0], [1], [0, 0, 1, 1], [], []>} : vector<12x128xbf16>, vector<128x256xbf16>, vector<12x256xf32> -> vector<12x256xf32>
    %12 = arith.addf %6, %11 : vector<12x256xf32>
    %c0_12 = arith.constant 0 : index
    %c4 = arith.constant 4 : index
    %c0_13 = arith.constant 0 : index
    %13 = vector.load %arg1[%c0_12, %c4, %c0_13] : memref<1x17x128xbf16, #tpu.memory_space<vmem>>, vector<1x12x128xbf16>
    %14 = vector.shape_cast %13 : vector<1x12x128xbf16> to vector<12x128xbf16>
    %c2 = arith.constant 2 : index
    %c0_14 = arith.constant 0 : index
    %c0_15 = arith.constant 0 : index
    %15 = vector.load %arg2[%c2, %c0_14, %c0_15] : memref<4x128x256xbf16, #tpu.memory_space<vmem>>, vector<1x128x256xbf16>
    %16 = vector.shape_cast %15 : vector<1x128x256xbf16> to vector<128x256xbf16>
    %cst_16 = arith.constant dense<0.000000e+00> : vector<12x256xf32>
    %17 = tpu.matmul %14, %16, %cst_16 {dimension_numbers = #tpu.dot_dimension_numbers<[1], [0], [0], [1], [0, 0, 1, 1], [], []>} : vector<12x128xbf16>, vector<128x256xbf16>, vector<12x256xf32> -> vector<12x256xf32>
    %18 = arith.addf %12, %17 : vector<12x256xf32>
    %c0_17 = arith.constant 0 : index
    %c5 = arith.constant 5 : index
    %c0_18 = arith.constant 0 : index
    %19 = vector.load %arg1[%c0_17, %c5, %c0_18] : memref<1x17x128xbf16, #tpu.memory_space<vmem>>, vector<1x12x128xbf16>
    %20 = vector.shape_cast %19 : vector<1x12x128xbf16> to vector<12x128xbf16>
    %c3 = arith.constant 3 : index
    %c0_19 = arith.constant 0 : index
    %c0_20 = arith.constant 0 : index
    %21 = vector.load %arg2[%c3, %c0_19, %c0_20] : memref<4x128x256xbf16, #tpu.memory_space<vmem>>, vector<1x128x256xbf16>
    %22 = vector.shape_cast %21 : vector<1x128x256xbf16> to vector<128x256xbf16>
    %cst_21 = arith.constant dense<0.000000e+00> : vector<12x256xf32>
    %23 = tpu.matmul %20, %22, %cst_21 {dimension_numbers = #tpu.dot_dimension_numbers<[1], [0], [0], [1], [0, 0, 1, 1], [], []>} : vector<12x128xbf16>, vector<128x256xbf16>, vector<12x256xf32> -> vector<12x256xf32>
    %24 = arith.addf %18, %23 : vector<12x256xf32>
    %c0_22 = arith.constant 0 : index
    %c0_23 = arith.constant 0 : index
    %25 = vector.load %arg3[%c0_22, %c0_23] : memref<1x256xf32, #tpu.memory_space<vmem>>, vector<1x256xf32>
    %26 = vector.broadcast %25 : vector<1x256xf32> to vector<12x256xf32>
    %27 = arith.addf %24, %26 : vector<12x256xf32>
    %cst_24 = arith.constant 0.000000e+00 : f32
    %28 = vector.broadcast %cst_24 : f32 to vector<12x256xf32>
    %29 = arith.maximumf %27, %28 : vector<12x256xf32>
    %30 = arith.truncf %29 : vector<12x256xf32> to vector<12x256xbf16>
    %c0_25 = arith.constant 0 : index
    %c0_26 = arith.constant 0 : index
    %c0_27 = arith.constant 0 : index
    %31 = vector.load %arg4[%c0_25, %c0_26, %c0_27] : memref<1x12x256xbf16, #tpu.memory_space<vmem>>, vector<1x12x256xbf16>
    %32 = vector.shape_cast %31 : vector<1x12x256xbf16> to vector<12x256xbf16>
    %33 = vector.shape_cast %30 : vector<12x256xbf16> to vector<1x12x256xbf16>
    tpu.vector_store %arg4[%c0_25, %c0_26, %c0_27], %33 {strides = array<i32>} : memref<1x12x256xbf16, #tpu.memory_space<vmem>>, vector<1x12x256xbf16>,
    return
  }
  func.func @transform_0(%arg0: i32) -> (i32, i32, i32) {
    %c0_i32 = arith.constant 0 : i32
    %c0_i32_0 = arith.constant 0 : i32
    %c0_i32_1 = arith.constant 0 : i32
    return %arg0, %c0_i32, %c0_i32_0 : i32, i32, i32
  }
  func.func @transform_1(%arg0: i32) -> (i32, i32, i32) {
    %c0_i32 = arith.constant 0 : i32
    %c0_i32_0 = arith.constant 0 : i32
    %c0_i32_1 = arith.constant 0 : i32
    %c0_i32_2 = arith.constant 0 : i32
    return %c0_i32, %c0_i32_0, %c0_i32_1 : i32, i32, i32
  }
  func.func @transform_2(%arg0: i32) -> (i32, i32) {
    %c0_i32 = arith.constant 0 : i32
    %c0_i32_0 = arith.constant 0 : i32
    %c0_i32_1 = arith.constant 0 : i32
    return %c0_i32, %c0_i32_0 : i32, i32
  }
  func.func @transform_3(%arg0: i32) -> (i32, i32, i32) {
    %c0_i32 = arith.constant 0 : i32
    %c0_i32_0 = arith.constant 0 : i32
    %c0_i32_1 = arith.constant 0 : i32
    return %arg0, %c0_i32, %c0_i32_0 : i32, i32, i32
  }
}

module attributes {stable_mosaic.version = 11 : i64} {
  func.func @_tapconv_kernel(%arg0: i32, %arg1: memref<1x37x64xbf16, #tpu.memory_space<vmem>>, %arg2: memref<4x64x128xbf16, #tpu.memory_space<vmem>>, %arg3: memref<1x128xf32, #tpu.memory_space<vmem>>, %arg4: memref<1x30x128xbf16, #tpu.memory_space<vmem>>) attributes {dimension_semantics = [#tpu.dimension_semantics<parallel>], iteration_bounds = array<i64: 2>, scalar_prefetch = 0 : i64, scratch_operands = 0 : i64, tpu.core_type = #tpu.core_type<tc>, window_params = [{transform_indices = @transform_0, window_bounds = array<i64: 1, 37, 64>}, {pipeline_mode = #tpu.pipeline_mode<synchronous>, transform_indices = @transform_1, window_bounds = array<i64: 4, 64, 128>}, {pipeline_mode = #tpu.pipeline_mode<synchronous>, transform_indices = @transform_2, window_bounds = array<i64: 1, 128>}, {transform_indices = @transform_3, window_bounds = array<i64: 1, 30, 128>}]} {
    %cst = arith.constant 0.000000e+00 : f32
    %0 = vector.broadcast %cst : f32 to vector<30x128xf32>
    %c0 = arith.constant 0 : index
    %c0_0 = arith.constant 0 : index
    %c0_1 = arith.constant 0 : index
    %1 = vector.load %arg1[%c0, %c0_0, %c0_1] : memref<1x37x64xbf16, #tpu.memory_space<vmem>>, vector<1x30x64xbf16>
    %2 = vector.shape_cast %1 : vector<1x30x64xbf16> to vector<30x64xbf16>
    %c0_2 = arith.constant 0 : index
    %c0_3 = arith.constant 0 : index
    %c0_4 = arith.constant 0 : index
    %3 = vector.load %arg2[%c0_2, %c0_3, %c0_4] : memref<4x64x128xbf16, #tpu.memory_space<vmem>>, vector<1x64x128xbf16>
    %4 = vector.shape_cast %3 : vector<1x64x128xbf16> to vector<64x128xbf16>
    %cst_5 = arith.constant dense<0.000000e+00> : vector<30x128xf32>
    %5 = tpu.matmul %2, %4, %cst_5 {dimension_numbers = #tpu.dot_dimension_numbers<[1], [0], [0], [1], [0, 0, 1, 1], [], []>} : vector<30x64xbf16>, vector<64x128xbf16>, vector<30x128xf32> -> vector<30x128xf32>
    %6 = arith.addf %0, %5 : vector<30x128xf32>
    %c0_6 = arith.constant 0 : index
    %c1 = arith.constant 1 : index
    %c0_7 = arith.constant 0 : index
    %7 = vector.load %arg1[%c0_6, %c1, %c0_7] : memref<1x37x64xbf16, #tpu.memory_space<vmem>>, vector<1x30x64xbf16>
    %8 = vector.shape_cast %7 : vector<1x30x64xbf16> to vector<30x64xbf16>
    %c1_8 = arith.constant 1 : index
    %c0_9 = arith.constant 0 : index
    %c0_10 = arith.constant 0 : index
    %9 = vector.load %arg2[%c1_8, %c0_9, %c0_10] : memref<4x64x128xbf16, #tpu.memory_space<vmem>>, vector<1x64x128xbf16>
    %10 = vector.shape_cast %9 : vector<1x64x128xbf16> to vector<64x128xbf16>
    %cst_11 = arith.constant dense<0.000000e+00> : vector<30x128xf32>
    %11 = tpu.matmul %8, %10, %cst_11 {dimension_numbers = #tpu.dot_dimension_numbers<[1], [0], [0], [1], [0, 0, 1, 1], [], []>} : vector<30x64xbf16>, vector<64x128xbf16>, vector<30x128xf32> -> vector<30x128xf32>
    %12 = arith.addf %6, %11 : vector<30x128xf32>
    %c0_12 = arith.constant 0 : index
    %c6 = arith.constant 6 : index
    %c0_13 = arith.constant 0 : index
    %13 = vector.load %arg1[%c0_12, %c6, %c0_13] : memref<1x37x64xbf16, #tpu.memory_space<vmem>>, vector<1x30x64xbf16>
    %14 = vector.shape_cast %13 : vector<1x30x64xbf16> to vector<30x64xbf16>
    %c2 = arith.constant 2 : index
    %c0_14 = arith.constant 0 : index
    %c0_15 = arith.constant 0 : index
    %15 = vector.load %arg2[%c2, %c0_14, %c0_15] : memref<4x64x128xbf16, #tpu.memory_space<vmem>>, vector<1x64x128xbf16>
    %16 = vector.shape_cast %15 : vector<1x64x128xbf16> to vector<64x128xbf16>
    %cst_16 = arith.constant dense<0.000000e+00> : vector<30x128xf32>
    %17 = tpu.matmul %14, %16, %cst_16 {dimension_numbers = #tpu.dot_dimension_numbers<[1], [0], [0], [1], [0, 0, 1, 1], [], []>} : vector<30x64xbf16>, vector<64x128xbf16>, vector<30x128xf32> -> vector<30x128xf32>
    %18 = arith.addf %12, %17 : vector<30x128xf32>
    %c0_17 = arith.constant 0 : index
    %c7 = arith.constant 7 : index
    %c0_18 = arith.constant 0 : index
    %19 = vector.load %arg1[%c0_17, %c7, %c0_18] : memref<1x37x64xbf16, #tpu.memory_space<vmem>>, vector<1x30x64xbf16>
    %20 = vector.shape_cast %19 : vector<1x30x64xbf16> to vector<30x64xbf16>
    %c3 = arith.constant 3 : index
    %c0_19 = arith.constant 0 : index
    %c0_20 = arith.constant 0 : index
    %21 = vector.load %arg2[%c3, %c0_19, %c0_20] : memref<4x64x128xbf16, #tpu.memory_space<vmem>>, vector<1x64x128xbf16>
    %22 = vector.shape_cast %21 : vector<1x64x128xbf16> to vector<64x128xbf16>
    %cst_21 = arith.constant dense<0.000000e+00> : vector<30x128xf32>
    %23 = tpu.matmul %20, %22, %cst_21 {dimension_numbers = #tpu.dot_dimension_numbers<[1], [0], [0], [1], [0, 0, 1, 1], [], []>} : vector<30x64xbf16>, vector<64x128xbf16>, vector<30x128xf32> -> vector<30x128xf32>
    %24 = arith.addf %18, %23 : vector<30x128xf32>
    %c0_22 = arith.constant 0 : index
    %c0_23 = arith.constant 0 : index
    %25 = vector.load %arg3[%c0_22, %c0_23] : memref<1x128xf32, #tpu.memory_space<vmem>>, vector<1x128xf32>
    %26 = vector.broadcast %25 : vector<1x128xf32> to vector<30x128xf32>
    %27 = arith.addf %24, %26 : vector<30x128xf32>
    %cst_24 = arith.constant 0.000000e+00 : f32
    %28 = vector.broadcast %cst_24 : f32 to vector<30x128xf32>
    %29 = arith.maximumf %27, %28 : vector<30x128xf32>
    %30 = arith.truncf %29 : vector<30x128xf32> to vector<30x128xbf16>
    %c0_25 = arith.constant 0 : index
    %c0_26 = arith.constant 0 : index
    %c0_27 = arith.constant 0 : index
    %31 = vector.load %arg4[%c0_25, %c0_26, %c0_27] : memref<1x30x128xbf16, #tpu.memory_space<vmem>>, vector<1x30x128xbf16>
    %32 = vector.shape_cast %31 : vector<1x30x128xbf16> to vector<30x128xbf16>
    %33 = vector.shape_cast %30 : vector<30x128xbf16> to vector<1x30x128xbf16>
    tpu.vector_store %arg4[%c0_25, %c0_26, %c0_27], %33 {strides = array<i32>} : memref<1x30x128xbf16, #tpu.memory_space<vmem>>, vector<1x30x128xbf16>,
    return
  }
  func.func @transform_0(%arg0: i32) -> (i32, i32, i32) {
    %c0_i32 = arith.constant 0 : i32
    %c0_i32_0 = arith.constant 0 : i32
    %c0_i32_1 = arith.constant 0 : i32
    return %arg0, %c0_i32, %c0_i32_0 : i32, i32, i32
  }
  func.func @transform_1(%arg0: i32) -> (i32, i32, i32) {
    %c0_i32 = arith.constant 0 : i32
    %c0_i32_0 = arith.constant 0 : i32
    %c0_i32_1 = arith.constant 0 : i32
    %c0_i32_2 = arith.constant 0 : i32
    return %c0_i32, %c0_i32_0, %c0_i32_1 : i32, i32, i32
  }
  func.func @transform_2(%arg0: i32) -> (i32, i32) {
    %c0_i32 = arith.constant 0 : i32
    %c0_i32_0 = arith.constant 0 : i32
    %c0_i32_1 = arith.constant 0 : i32
    return %c0_i32, %c0_i32_0 : i32, i32
  }
  func.func @transform_3(%arg0: i32) -> (i32, i32, i32) {
    %c0_i32 = arith.constant 0 : i32
    %c0_i32_0 = arith.constant 0 : i32
    %c0_i32_1 = arith.constant 0 : i32
    return %arg0, %c0_i32, %c0_i32_0 : i32, i32, i32
  }
}

module attributes {stable_mosaic.version = 11 : i64} {
  func.func @_tapconv_kernel(%arg0: i32, %arg1: memref<1x101x32xbf16, #tpu.memory_space<vmem>>, %arg2: memref<4x32x4xbf16, #tpu.memory_space<vmem>>, %arg3: memref<1x4xf32, #tpu.memory_space<vmem>>, %arg4: memref<1x90x4xf32, #tpu.memory_space<vmem>>) attributes {dimension_semantics = [#tpu.dimension_semantics<parallel>], iteration_bounds = array<i64: 2>, scalar_prefetch = 0 : i64, scratch_operands = 0 : i64, tpu.core_type = #tpu.core_type<tc>, window_params = [{transform_indices = @transform_0, window_bounds = array<i64: 1, 101, 32>}, {pipeline_mode = #tpu.pipeline_mode<synchronous>, transform_indices = @transform_1, window_bounds = array<i64: 4, 32, 4>}, {pipeline_mode = #tpu.pipeline_mode<synchronous>, transform_indices = @transform_2, window_bounds = array<i64: 1, 4>}, {transform_indices = @transform_3, window_bounds = array<i64: 1, 90, 4>}]} {
    %cst = arith.constant 0.000000e+00 : f32
    %0 = vector.broadcast %cst : f32 to vector<90x4xf32>
    %c0 = arith.constant 0 : index
    %c0_0 = arith.constant 0 : index
    %c0_1 = arith.constant 0 : index
    %1 = vector.load %arg1[%c0, %c0_0, %c0_1] : memref<1x101x32xbf16, #tpu.memory_space<vmem>>, vector<1x90x32xbf16>
    %2 = vector.shape_cast %1 : vector<1x90x32xbf16> to vector<90x32xbf16>
    %c0_2 = arith.constant 0 : index
    %c0_3 = arith.constant 0 : index
    %c0_4 = arith.constant 0 : index
    %3 = vector.load %arg2[%c0_2, %c0_3, %c0_4] : memref<4x32x4xbf16, #tpu.memory_space<vmem>>, vector<1x32x4xbf16>
    %4 = vector.shape_cast %3 : vector<1x32x4xbf16> to vector<32x4xbf16>
    %cst_5 = arith.constant dense<0.000000e+00> : vector<90x4xf32>
    %5 = tpu.matmul %2, %4, %cst_5 {dimension_numbers = #tpu.dot_dimension_numbers<[1], [0], [0], [1], [0, 0, 1, 1], [], []>} : vector<90x32xbf16>, vector<32x4xbf16>, vector<90x4xf32> -> vector<90x4xf32>
    %6 = arith.addf %0, %5 : vector<90x4xf32>
    %c0_6 = arith.constant 0 : index
    %c1 = arith.constant 1 : index
    %c0_7 = arith.constant 0 : index
    %7 = vector.load %arg1[%c0_6, %c1, %c0_7] : memref<1x101x32xbf16, #tpu.memory_space<vmem>>, vector<1x90x32xbf16>
    %8 = vector.shape_cast %7 : vector<1x90x32xbf16> to vector<90x32xbf16>
    %c1_8 = arith.constant 1 : index
    %c0_9 = arith.constant 0 : index
    %c0_10 = arith.constant 0 : index
    %9 = vector.load %arg2[%c1_8, %c0_9, %c0_10] : memref<4x32x4xbf16, #tpu.memory_space<vmem>>, vector<1x32x4xbf16>
    %10 = vector.shape_cast %9 : vector<1x32x4xbf16> to vector<32x4xbf16>
    %cst_11 = arith.constant dense<0.000000e+00> : vector<90x4xf32>
    %11 = tpu.matmul %8, %10, %cst_11 {dimension_numbers = #tpu.dot_dimension_numbers<[1], [0], [0], [1], [0, 0, 1, 1], [], []>} : vector<90x32xbf16>, vector<32x4xbf16>, vector<90x4xf32> -> vector<90x4xf32>
    %12 = arith.addf %6, %11 : vector<90x4xf32>
    %c0_12 = arith.constant 0 : index
    %c10 = arith.constant 10 : index
    %c0_13 = arith.constant 0 : index
    %13 = vector.load %arg1[%c0_12, %c10, %c0_13] : memref<1x101x32xbf16, #tpu.memory_space<vmem>>, vector<1x90x32xbf16>
    %14 = vector.shape_cast %13 : vector<1x90x32xbf16> to vector<90x32xbf16>
    %c2 = arith.constant 2 : index
    %c0_14 = arith.constant 0 : index
    %c0_15 = arith.constant 0 : index
    %15 = vector.load %arg2[%c2, %c0_14, %c0_15] : memref<4x32x4xbf16, #tpu.memory_space<vmem>>, vector<1x32x4xbf16>
    %16 = vector.shape_cast %15 : vector<1x32x4xbf16> to vector<32x4xbf16>
    %cst_16 = arith.constant dense<0.000000e+00> : vector<90x4xf32>
    %17 = tpu.matmul %14, %16, %cst_16 {dimension_numbers = #tpu.dot_dimension_numbers<[1], [0], [0], [1], [0, 0, 1, 1], [], []>} : vector<90x32xbf16>, vector<32x4xbf16>, vector<90x4xf32> -> vector<90x4xf32>
    %18 = arith.addf %12, %17 : vector<90x4xf32>
    %c0_17 = arith.constant 0 : index
    %c11 = arith.constant 11 : index
    %c0_18 = arith.constant 0 : index
    %19 = vector.load %arg1[%c0_17, %c11, %c0_18] : memref<1x101x32xbf16, #tpu.memory_space<vmem>>, vector<1x90x32xbf16>
    %20 = vector.shape_cast %19 : vector<1x90x32xbf16> to vector<90x32xbf16>
    %c3 = arith.constant 3 : index
    %c0_19 = arith.constant 0 : index
    %c0_20 = arith.constant 0 : index
    %21 = vector.load %arg2[%c3, %c0_19, %c0_20] : memref<4x32x4xbf16, #tpu.memory_space<vmem>>, vector<1x32x4xbf16>
    %22 = vector.shape_cast %21 : vector<1x32x4xbf16> to vector<32x4xbf16>
    %cst_21 = arith.constant dense<0.000000e+00> : vector<90x4xf32>
    %23 = tpu.matmul %20, %22, %cst_21 {dimension_numbers = #tpu.dot_dimension_numbers<[1], [0], [0], [1], [0, 0, 1, 1], [], []>} : vector<90x32xbf16>, vector<32x4xbf16>, vector<90x4xf32> -> vector<90x4xf32>
    %24 = arith.addf %18, %23 : vector<90x4xf32>
    %c0_22 = arith.constant 0 : index
    %c0_23 = arith.constant 0 : index
    %25 = vector.load %arg3[%c0_22, %c0_23] : memref<1x4xf32, #tpu.memory_space<vmem>>, vector<1x4xf32>
    %26 = vector.broadcast %25 : vector<1x4xf32> to vector<90x4xf32>
    %27 = arith.addf %24, %26 : vector<90x4xf32>
    %28 = math.tanh %27 : vector<90x4xf32>
    %c0_24 = arith.constant 0 : index
    %c0_25 = arith.constant 0 : index
    %c0_26 = arith.constant 0 : index
    %29 = vector.load %arg4[%c0_24, %c0_25, %c0_26] : memref<1x90x4xf32, #tpu.memory_space<vmem>>, vector<1x90x4xf32>
    %30 = vector.shape_cast %29 : vector<1x90x4xf32> to vector<90x4xf32>
    %31 = vector.shape_cast %28 : vector<90x4xf32> to vector<1x90x4xf32>
    tpu.vector_store %arg4[%c0_24, %c0_25, %c0_26], %31 {strides = array<i32>} : memref<1x90x4xf32, #tpu.memory_space<vmem>>, vector<1x90x4xf32>,
    return
  }
  func.func @transform_0(%arg0: i32) -> (i32, i32, i32) {
    %c0_i32 = arith.constant 0 : i32
    %c0_i32_0 = arith.constant 0 : i32
    %c0_i32_1 = arith.constant 0 : i32
    return %arg0, %c0_i32, %c0_i32_0 : i32, i32, i32
  }
  func.func @transform_1(%arg0: i32) -> (i32, i32, i32) {
    %c0_i32 = arith.constant 0 : i32
    %c0_i32_0 = arith.constant 0 : i32
    %c0_i32_1 = arith.constant 0 : i32
    %c0_i32_2 = arith.constant 0 : i32
    return %c0_i32, %c0_i32_0, %c0_i32_1 : i32, i32, i32
  }
  func.func @transform_2(%arg0: i32) -> (i32, i32) {
    %c0_i32 = arith.constant 0 : i32
    %c0_i32_0 = arith.constant 0 : i32
    %c0_i32_1 = arith.constant 0 : i32
    return %c0_i32, %c0_i32_0 : i32, i32
  }
  func.func @transform_3(%arg0: i32) -> (i32, i32, i32) {
    %c0_i32 = arith.constant 0 : i32
    %c0_i32_0 = arith.constant 0 : i32
    %c0_i32_1 = arith.constant 0 : i32
    return %arg0, %c0_i32, %c0_i32_0 : i32, i32, i32
  }
}

</mosaic_0001>

<llo_original>
// kernel: vae_forward.7
$region0: #{vae_forward.7}
  #allocation0 [shape = 'u32[]', space=smem, size = 0x4, offset = 0x4, fixed_abs, tag = 'smem constant byte address 0x4 - core index']
  #allocation1 [shape = 'u32[72,128]{1,0:T(1,128)}', space=vmem, size = 0x9000, scoped, tag = 'internal scratch']
  %s0 = inlined_call_operand.vmem [shape: bf16[2,82,4], index: 0, kind: input, shape index: {}]
  %s1 = inlined_call_operand.vmem [shape: bf16[4,4,32], index: 1, kind: input, shape index: {}]
  %s2 = inlined_call_operand.vmem [shape: f32[1,32], index: 2, kind: input, shape index: {}]
  %s3 = inlined_call_operand.vmem [shape: bf16[2,72,32], index: 3, kind: output, shape index: {}]
  %s4 = sld [smem:[#allocation0]]
  $region45: #{vae_forward.7} parent=0
    _
  %s6 = ssub.s32 1, %s4
  %s7 = scalar_select 0, %s6, %s4
  loop: start=0, step=1, limit=4
  $region2: #{vae_forward.7} parent=0 // loop_pre_header
    _
  $region3: #{vae_forward.7} parent=0 // loop_header
    %s9 = sphi 0, %s13
    %p10 = scmp.ge.s32.totalorder %s9, 4
    %s19 = sphi 0, %s21
    %s22 = sphi 0, %s19
    %s23 = sphi 0, %s22
    %s39 = sphi 0, %s23
    %s43 = sphi 0, %s43
    %s45 = sphi 0, %s43
    %s46 = sphi 0, %s45
    %s60 = sphi 0, %s46
    %s64 = sphi 0, %s64
    %s66 = sphi 0, %s64
    %s67 = sphi 0, %s66
    %s81 = sphi 0, %s67
    %s87 = sphi 0, %s89
    %s90 = sphi 0, %s87
    %s91 = sphi 0, %s90
    %s107 = sphi 0, %s91
  $region4: #{vae_forward.7} parent=0 // loop_header_branch
    %12 = sbr.rel (%p10) target = $region8
  $region5: #{vae_forward.7} parent=0 // loop_body
    %s14 = ssub.s32 %s9, 1
    %s15 = ssub.s32 %s9, 2
    %s16 = sadd.s32 %s9, 1
    %s17 = ssub.s32 %s9, %s16
    %p18 = scmp.eq.s32.totalorder %s17, 0
    %s20 = sadd.s32 %s19, 1
    %s21 = scalar_select %p18, %s19, %s20
    %p24 = pneg %p18
    %p25 = scmp.eq.s32.totalorder %s9, 1
    %p26 = por %p24, %p25
    %p27 = scmp.ne.s32.totalorder %s19, %s22
    %p28 = scmp.eq.s32.totalorder %s9, 0
    %p29 = por %p27, %p28
    %p30 = scmp.ne.s32.totalorder %s19, %s22
    %p31 = scmp.eq.s32.totalorder %s14, 1
    %p32 = por %p30, %p31
    %p33 = scmp.ne.s32.totalorder %s22, %s23
    %p34 = scmp.eq.s32.totalorder %s14, 0
    %p35 = por %p33, %p34
    %p36 = scmp.ne.s32.totalorder %s22, %s23
    %p37 = scmp.eq.s32.totalorder %s15, 1
    %p38 = por %p36, %p37
    %p40 = scmp.ne.s32.totalorder %s23, %s39
    %p41 = scmp.eq.s32.totalorder %s15, 0
    %p42 = por %p40, %p41
    %s44 = sadd.s32 %s43, 1
    %p47 = scmp.eq.s32.totalorder %s9, 1
    %p48 = scmp.ne.s32.totalorder %s43, %s45
    %p49 = scmp.eq.s32.totalorder %s9, 0
    %p50 = por %p48, %p49
    %p51 = scmp.ne.s32.totalorder %s43, %s45
    %p52 = scmp.eq.s32.totalorder %s14, 1
    %p53 = por %p51, %p52
    %p54 = scmp.ne.s32.totalorder %s45, %s46
    %p55 = scmp.eq.s32.totalorder %s14, 0
    %p56 = por %p54, %p55
    %p57 = scmp.ne.s32.totalorder %s45, %s46
    %p58 = scmp.eq.s32.totalorder %s15, 1
    %p59 = por %p57, %p58
    %p61 = scmp.ne.s32.totalorder %s46, %s60
    %p62 = scmp.eq.s32.totalorder %s15, 0
    %p63 = por %p61, %p62
    %s65 = sadd.s32 %s64, 1
    %p68 = scmp.eq.s32.totalorder %s9, 1
    %p69 = scmp.ne.s32.totalorder %s64, %s66
    %p70 = scmp.eq.s32.totalorder %s9, 0
    %p71 = por %p69, %p70
    %p72 = scmp.ne.s32.totalorder %s64, %s66
    %p73 = scmp.eq.s32.totalorder %s14, 1
    %p74 = por %p72, %p73
    %p75 = scmp.ne.s32.totalorder %s66, %s67
    %p76 = scmp.eq.s32.totalorder %s14, 0
    %p77 = por %p75, %p76
    %p78 = scmp.ne.s32.totalorder %s66, %s67
    %p79 = scmp.eq.s32.totalorder %s15, 1
    %p80 = por %p78, %p79
    %p82 = scmp.ne.s32.totalorder %s67, %s81
    %p83 = scmp.eq.s32.totalorder %s15, 0
    %p84 = por %p82, %p83
    %s85 = ssub.s32 %s9, %s16
    %p86 = scmp.eq.s32.totalorder %s85, 0
    %s88 = sadd.s32 %s87, 1
    %s89 = scalar_select %p86, %s87, %s88
    %p92 = pneg %p86
    %p93 = scmp.eq.s32.totalorder %s9, 1
    %p94 = por %p92, %p93
    %p95 = scmp.ne.s32.totalorder %s87, %s90
    %p96 = scmp.eq.s32.totalorder %s9, 0
    %p97 = por %p95, %p96
    %p98 = scmp.ne.s32.totalorder %s87, %s90
    %p99 = scmp.eq.s32.totalorder %s14, 1
    %p100 = por %p98, %p99
    %p101 = scmp.ne.s32.totalorder %s90, %s91
    %p102 = scmp.eq.s32.totalorder %s14, 0
    %p103 = por %p101, %p102
    %p104 = scmp.ne.s32.totalorder %s90, %s91
    %p105 = scmp.eq.s32.totalorder %s15, 1
    %p106 = por %p104, %p105
    %p108 = scmp.ne.s32.totalorder %s91, %s107
    %p109 = scmp.eq.s32.totalorder %s15, 0
    %p110 = por %p108, %p109
    %p111 = scmp.le.s32.totalorder 1, %s9
    %p112 = scmp.lt.s32.totalorder %s9, 3
    %p113 = pnand %p111, %p112
    %p114 = pneg %p113
    // Predicated region
    $region9: #{vae_forward.7} parent=5 // pred_check
      _
    $region10: #{vae_forward.7} parent=5 // pred_check_branch
      %116 = sbr.rel (%p113) target = $region12
    $region11: #{vae_forward.7} parent=5 // pred_region
      %s117 = ssub.s32 %s9, 1
      // Predicated region
      $region13: #{vae_forward.7} parent=11 // pred_check
        %p118 = pneg %p56
      $region14: #{vae_forward.7} parent=11 // pred_check_branch
        %120 = sbr.rel (%p118) target = $region16
      $region15: #{vae_forward.7} parent=11 // pred_region
        _
      $region16: #{vae_forward.7} parent=11 // pred_fallthru
        _
      // Predicated region
      $region17: #{vae_forward.7} parent=11 // pred_check
        %p121 = pneg %p77
      $region18: #{vae_forward.7} parent=11 // pred_check_branch
        %123 = sbr.rel (%p121) target = $region20
      $region19: #{vae_forward.7} parent=11 // pred_region
        _
      $region20: #{vae_forward.7} parent=11 // pred_fallthru
        _
    $region12: #{vae_forward.7} parent=5 // pred_fallthru
      _
    %p124 = scmp.lt.s32.totalorder %s9, 2
    // Predicated region
    $region21: #{vae_forward.7} parent=5 // pred_check
      %p125 = pneg %p124
    $region22: #{vae_forward.7} parent=5 // pred_check_branch
      %127 = sbr.rel (%p125) target = $region24
    $region23: #{vae_forward.7} parent=5 // pred_region
      // Predicated region
      $region25: #{vae_forward.7} parent=23 // pred_check
        %p128 = pneg %p29
      $region26: #{vae_forward.7} parent=23 // pred_check_branch
        %130 = sbr.rel (%p128) target = $region28
      $region27: #{vae_forward.7} parent=23 // pred_region
        %p131 = scmp.lt.s32.totalorder %s9, 1
        %s132 = scalar_select %p131, %s9, 1
        %s133 = smul.addr %s132, 11
        %s134 = smul.addr %s133, 4
        %s135 = scalar_lea.vmem %s0, %s134
      $region28: #{vae_forward.7} parent=23 // pred_fallthru
        _
    $region24: #{vae_forward.7} parent=5 // pred_fallthru
      _
    %p136 = scmp.le.s32.totalorder 1, %s9
    %p137 = scmp.lt.s32.totalorder %s9, 3
    %p138 = pnand %p136, %p137
    %p139 = pneg %p138
    // Predicated region
    $region29: #{vae_forward.7} parent=5 // pred_check
      _
    $region30: #{vae_forward.7} parent=5 // pred_check_branch
      %141 = sbr.rel (%p138) target = $region32
    $region31: #{vae_forward.7} parent=5 // pred_region
      %s142 = ssub.s32 %s9, 1
      %p143 = scmp.lt.s32.totalorder %s14, 1
      %s144 = scalar_select %p143, %s14, 1
      %s145 = smul.addr %s144, 11
      %s146 = smul.addr %s145, 4
      %s147 = scalar_lea.vmem %s0, %s146
      %p148 = pneg %p35
      %p149 = pneg %p32
      %p150 = pneg %p56
      %p151 = pneg %p53
      %p152 = pneg %p77
      %p153 = pneg %p74
      %p154 = pneg %p103
      %p155 = pneg %p100
      %p156 = scmp.lt.s32.totalorder %s14, 1
      %s157 = scalar_select %p156, %s14, 1
      %s158 = smul.addr %s157, 9
      %s159 = smul.addr %s158, 4
      %s160 = scalar_lea.vmem %s3, %s159
      %p161 = scmp.lt.s32.totalorder %s14, 1
      %s162 = scalar_select %p161, %s14, 1
      %s163 = smul.addr %s162, 11
      %s164 = smul.addr %s163, 4
      %s165 = scalar_lea.vmem %s0, %s164
      %p166 = scmp.lt.s32.totalorder %s14, 1
      %s167 = scalar_select %p166, %s14, 1
      %s168 = smul.addr %s167, 9
      %s169 = smul.addr %s168, 4
      %s170 = scalar_lea.vmem %s3, %s169
      %v172 = vld [vmem:[%s165] sm:$0xf]
      %v173 = vld [vmem:[%s165 + $0x4] sm:$0xf]
      %v174 = vld [vmem:[%s165 + $0x8] sm:$0xf]
      %v175 = vld [vmem:[%s165 + $0xc] sm:$0xf]
      %v176 = vld [vmem:[%s165 + $0x10] sm:$0xf]
      %v177 = vld [vmem:[%s165 + $0x14] sm:$0xf]
      %v178 = vld [vmem:[%s165 + $0x18] sm:$0xf]
      %v179 = vld [vmem:[%s165 + $0x1c] sm:$0xf]
      %v180 = vld [vmem:[%s165 + $0x20] sm:$0xf]
      %v181 = vld [vmem:[%s1] sm:$0x3]
      %v182 = vld [vmem:[%s165 + $0x24] sm:$0x1]
      %s183 = scalar_lea.vmem %s1, 2
      %v184 = vld [vmem:[%s183] sm:$0x3]
      %v195 = vunpack.c.l.b16 %v172
      %v196 = vunpack.c.l.b16 %v173
      %v197 = vunpack.c.l.b16 %v174
      %v198 = vunpack.c.l.b16 %v175
      %v199 = vunpack.c.l.b16 %v176
      %v200 = vunpack.c.l.b16 %v177
      %v201 = vunpack.c.l.b16 %v178
      %v202 = vunpack.c.l.b16 %v179
      %v203 = vunpack.c.l.b16 %v180
      %v204 = vunpack.c.l.b16 %v182
      %v205 = vpack.c.b16 %v196, %v195
      %v206 = vpack.c.b16 %v198, %v197
      %v207 = vpack.c.b16 %v200, %v199
      %v208 = vpack.c.b16 %v202, %v201
      %v209 = vpack.c.b16 %v204, %v203
      %vm210 = vsmask.f32 7424
      %v212 = vshrl.u32 %v205, 16
      %v214 = vshll.u32 %v205, 16
      %v216 = vrot.slane %v214, 1
      %v217 = vor.u32 %v212, %v216
      %v219 = vshll.u32 %v206, 16
      %v221 = vrot.slane %v219, 1
      %v222 = vsel %vm210, %v217, %v221
      %v223 = vshrl.u32 %v206, 16
      %v225 = vor.u32 %v223, %v221
      %v227 = vshll.u32 %v207, 16
      %v229 = vrot.slane %v227, 1
      %v230 = vsel %vm210, %v225, %v229
      %v231 = vshrl.u32 %v207, 16
      %v233 = vor.u32 %v231, %v229
      %v235 = vshll.u32 %v208, 16
      %v237 = vrot.slane %v235, 1
      %v238 = vsel %vm210, %v233, %v237
      %v239 = vshrl.u32 %v208, 16
      %v241 = vor.u32 %v239, %v237
      %v243 = vshll.u32 %v209, 16
      %v245 = vrot.slane %v243, 1
      %v246 = vsel %vm210, %v241, %v245
      %v247 = vshrl.u32 %v209, 16
      %v249 = vor.u32 %v247, %v245
      %vm250 = vcmask 31744
      %v252 = vsel %vm250, %v222, 0
      %v255 = vsel %vm250, %v230, 0
      %v258 = vsel %vm250, %v238, 0
      %v261 = vsel %vm250, %v246, 0
      %v264 = vsel %vm250, %v249, 0
      %vm266 = vcmask 1041408
      %v268 = vsel %vm266, %v184, 0
      %270 = vmatpush.bf16.msra.mxu0 0
      %271 = vmatpush.bf16.msra.mxu0 0
      %272 = vmatpush.bf16.msra.mxu0 0
      %273 = vmatpush.bf16.msra.mxu0 0
      %274 = vmatpush.bf16.msra.mxu0 0
      %275 = vmatpush.bf16.msra.mxu0 0
      %276 = vmatpush.bf16.msra.mxu0 0
      %277 = vmatpush.bf16.msra.mxu0 %v268
      %278 = vmatmul.bf16.gmra.mxu0 %v252
      %v279 = vpop.f32.mrf.mxu0
      %v280 = vadd.f32 0.0, %v279
      %v281 = vpop.f32.mrf.mxu0
      %v282 = vadd.f32 0.0, %v281
      %283 = vmatmul.bf16.gmra.mxu0 %v255
      %v284 = vpop.f32.mrf.mxu0
      %v285 = vadd.f32 0.0, %v284
      %v286 = vpop.f32.mrf.mxu0
      %v287 = vadd.f32 0.0, %v286
      %288 = vmatmul.bf16.gmra.mxu0 %v258
      %v289 = vpop.f32.mrf.mxu0
      %v290 = vadd.f32 0.0, %v289
      %v291 = vpop.f32.mrf.mxu0
      %v292 = vadd.f32 0.0, %v291
      %293 = vmatmul.bf16.gmra.mxu0 %v261
      %v294 = vpop.f32.mrf.mxu0
      %v295 = vadd.f32 0.0, %v294
      %v296 = vpop.f32.mrf.mxu0
      %v297 = vadd.f32 0.0, %v296
      %298 = vmatmul.bf16.gmra.mxu0 %v264
      %v299 = vpop.f32.mrf.mxu0
      %v300 = vadd.f32 0.0, %v299
      %v301 = vpop.f32.mrf.mxu0
      %302 = vdwg.mxu0
      %v303 = vpack.c.b16 %v203, %v203
      %v304 = vsel %vm250, %v205, 0
      %v306 = vsel %vm250, %v206, 0
      %v308 = vsel %vm250, %v207, 0
      %v310 = vsel %vm250, %v208, 0
      %v313 = vsel %vm250, %v303, 0
      %v316 = vsel %vm266, %v181, 0
      %318 = vmatpush.bf16.msra.mxu0 0
      %319 = vmatpush.bf16.msra.mxu0 0
      %320 = vmatpush.bf16.msra.mxu0 0
      %321 = vmatpush.bf16.msra.mxu0 0
      %322 = vmatpush.bf16.msra.mxu0 0
      %323 = vmatpush.bf16.msra.mxu0 0
      %324 = vmatpush.bf16.msra.mxu0 0
      %325 = vmatpush.bf16.msra.mxu0 %v316
      %326 = vmatmul.bf16.gmra.mxu0 %v304
      %v327 = vpop.f32.mrf.mxu0
      %v328 = vadd.f32 %v280, %v327
      %v329 = vpop.f32.mrf.mxu0
      %v330 = vadd.f32 %v282, %v329
      %331 = vmatmul.bf16.gmra.mxu0 %v306
      %v332 = vpop.f32.mrf.mxu0
      %v333 = vadd.f32 %v285, %v332
      %v334 = vpop.f32.mrf.mxu0
      %v335 = vadd.f32 %v287, %v334
      %336 = vmatmul.bf16.gmra.mxu0 %v308
      %v337 = vpop.f32.mrf.mxu0
      %v338 = vadd.f32 %v290, %v337
      %v339 = vpop.f32.mrf.mxu0
      %v340 = vadd.f32 %v292, %v339
      %341 = vmatmul.bf16.gmra.mxu0 %v310
      %v342 = vpop.f32.mrf.mxu0
      %v343 = vadd.f32 %v295, %v342
      %v344 = vpop.f32.mrf.mxu0
      %v345 = vadd.f32 %v297, %v344
      %346 = vmatmul.bf16.gmra.mxu0 %v313
      %v347 = vpop.f32.mrf.mxu0
      %v348 = vadd.f32 %v300, %v347
      %v349 = vpop.f32.mrf.mxu0
      %350 = vdwg.mxu0
      %v351 = vld [vmem:[%s165 + $0x4] sm:$0xf]
      %v352 = vld [vmem:[%s165 + $0x8] sm:$0xf]
      %v353 = vld [vmem:[%s165 + $0xc] sm:$0xf]
      %v354 = vld [vmem:[%s165 + $0x10] sm:$0xf]
      %v355 = vld [vmem:[%s165 + $0x14] sm:$0xf]
      %v356 = vld [vmem:[%s165 + $0x18] sm:$0xf]
      %v357 = vld [vmem:[%s165 + $0x1c] sm:$0xf]
      %v358 = vld [vmem:[%s165 + $0x20] sm:$0xf]
      %v359 = vld [vmem:[%s165 + $0x24] sm:$0xf]
      %v360 = vld [vmem:[%s165 + $0x28] sm:$0x1]
      %s361 = scalar_lea.vmem %s1, 4
      %v362 = vld [vmem:[%s361] sm:$0x3]
      %v373 = vunpack.c.l.b16 %v351
      %v374 = vunpack.c.l.b16 %v352
      %v375 = vunpack.c.l.b16 %v353
      %v376 = vunpack.c.l.b16 %v354
      %v377 = vunpack.c.l.b16 %v355
      %v378 = vunpack.c.l.b16 %v356
      %v379 = vunpack.c.l.b16 %v357
      %v380 = vunpack.c.l.b16 %v358
      %v381 = vunpack.c.l.b16 %v359
      %v382 = vunpack.c.l.b16 %v360
      %v383 = vpack.c.b16 %v374, %v373
      %v384 = vpack.c.b16 %v376, %v375
      %v385 = vpack.c.b16 %v378, %v377
      %v386 = vpack.c.b16 %v380, %v379
      %v387 = vpack.c.b16 %v382, %v381
      %v389 = vshrl.u32 %v383, 16
      %v391 = vshll.u32 %v383, 16
      %v393 = vrot.slane %v391, 1
      %v394 = vor.u32 %v389, %v393
      %v396 = vshll.u32 %v384, 16
      %v398 = vrot.slane %v396, 1
      %v399 = vsel %vm210, %v394, %v398
      %v400 = vshrl.u32 %v384, 16
      %v402 = vor.u32 %v400, %v398
      %v404 = vshll.u32 %v385, 16
      %v406 = vrot.slane %v404, 1
      %v407 = vsel %vm210, %v402, %v406
      %v408 = vshrl.u32 %v385, 16
      %v410 = vor.u32 %v408, %v406
      %v412 = vshll.u32 %v386, 16
      %v414 = vrot.slane %v412, 1
      %v415 = vsel %vm210, %v410, %v414
      %v416 = vshrl.u32 %v386, 16
      %v418 = vor.u32 %v416, %v414
      %v420 = vshll.u32 %v387, 16
      %v422 = vrot.slane %v420, 1
      %v423 = vsel %vm210, %v418, %v422
      %v424 = vshrl.u32 %v387, 16
      %v426 = vor.u32 %v424, %v422
      %v428 = vsel %vm250, %v399, 0
      %v431 = vsel %vm250, %v407, 0
      %v434 = vsel %vm250, %v415, 0
      %v437 = vsel %vm250, %v423, 0
      %v440 = vsel %vm250, %v426, 0
      %v443 = vsel %vm266, %v362, 0
      %445 = vmatpush.bf16.msra.mxu0 0
      %446 = vmatpush.bf16.msra.mxu0 0
      %447 = vmatpush.bf16.msra.mxu0 0
      %448 = vmatpush.bf16.msra.mxu0 0
      %449 = vmatpush.bf16.msra.mxu0 0
      %450 = vmatpush.bf16.msra.mxu0 0
      %451 = vmatpush.bf16.msra.mxu0 0
      %452 = vmatpush.bf16.msra.mxu0 %v443
      %453 = vmatmul.bf16.gmra.mxu0 %v428
      %v454 = vpop.f32.mrf.mxu0
      %v455 = vadd.f32 0.0, %v454
      %v456 = vpop.f32.mrf.mxu0
      %v457 = vadd.f32 0.0, %v456
      %458 = vmatmul.bf16.gmra.mxu0 %v431
      %v459 = vpop.f32.mrf.mxu0
      %v460 = vadd.f32 0.0, %v459
      %v461 = vpop.f32.mrf.mxu0
      %v462 = vadd.f32 0.0, %v461
      %463 = vmatmul.bf16.gmra.mxu0 %v434
      %v464 = vpop.f32.mrf.mxu0
      %v465 = vadd.f32 0.0, %v464
      %v466 = vpop.f32.mrf.mxu0
      %v467 = vadd.f32 0.0, %v466
      %468 = vmatmul.bf16.gmra.mxu0 %v437
      %v469 = vpop.f32.mrf.mxu0
      %v470 = vadd.f32 0.0, %v469
      %v471 = vpop.f32.mrf.mxu0
      %v472 = vadd.f32 0.0, %v471
      %473 = vmatmul.bf16.gmra.mxu0 %v440
      %v474 = vpop.f32.mrf.mxu0
      %v475 = vadd.f32 0.0, %v474
      %v476 = vpop.f32.mrf.mxu0
      %477 = vdwg.mxu0
      %v478 = vadd.f32 %v328, %v455
      %v479 = vadd.f32 %v330, %v457
      %v480 = vadd.f32 %v333, %v460
      %v481 = vadd.f32 %v335, %v462
      %v482 = vadd.f32 %v338, %v465
      %v483 = vadd.f32 %v340, %v467
      %v484 = vadd.f32 %v343, %v470
      %v485 = vadd.f32 %v345, %v472
      %v486 = vadd.f32 %v348, %v475
      %v487 = vld [vmem:[%s165 + $0x4] sm:$0xe]
      %s488 = scalar_lea.vmem %s1, 6
      %v489 = vld [vmem:[%s488] sm:$0x3]
      %v491 = vunpack.c.l.b16 %v487
      %v492 = vpack.c.b16 %v374, %v491
      %vm493 = vcmask 1046528
      %v494 = vrot.slane %v492, 1
      %v495 = vrot.slane %v384, 1
      %v496 = vsel %vm493, %v494, %v495
      %v497 = vrot.slane %v385, 1
      %v498 = vsel %vm493, %v495, %v497
      %v499 = vrot.slane %v386, 1
      %v500 = vsel %vm493, %v497, %v499
      %v501 = vrot.slane %v387, 1
      %v502 = vsel %vm493, %v499, %v501
      %v504 = vsel %vm250, %v496, 0
      %v507 = vsel %vm250, %v498, 0
      %v510 = vsel %vm250, %v500, 0
      %v513 = vsel %vm250, %v502, 0
      %v516 = vsel %vm250, %v501, 0
      %v519 = vsel %vm266, %v489, 0
      %521 = vmatpush.bf16.msra.mxu0 0
      %522 = vmatpush.bf16.msra.mxu0 0
      %523 = vmatpush.bf16.msra.mxu0 0
      %524 = vmatpush.bf16.msra.mxu0 0
      %525 = vmatpush.bf16.msra.mxu0 0
      %526 = vmatpush.bf16.msra.mxu0 0
      %527 = vmatpush.bf16.msra.mxu0 0
      %528 = vmatpush.bf16.msra.mxu0 %v519
      %529 = vmatmul.bf16.gmra.mxu0 %v504
      %v530 = vpop.f32.mrf.mxu0
      %v531 = vadd.f32 0.0, %v530
      %v532 = vpop.f32.mrf.mxu0
      %v533 = vadd.f32 0.0, %v532
      %534 = vmatmul.bf16.gmra.mxu0 %v507
      %v535 = vpop.f32.mrf.mxu0
      %v536 = vadd.f32 0.0, %v535
      %v537 = vpop.f32.mrf.mxu0
      %v538 = vadd.f32 0.0, %v537
      %539 = vmatmul.bf16.gmra.mxu0 %v510
      %v540 = vpop.f32.mrf.mxu0
      %v541 = vadd.f32 0.0, %v540
      %v542 = vpop.f32.mrf.mxu0
      %v543 = vadd.f32 0.0, %v542
      %544 = vmatmul.bf16.gmra.mxu0 %v513
      %v545 = vpop.f32.mrf.mxu0
      %v546 = vadd.f32 0.0, %v545
      %v547 = vpop.f32.mrf.mxu0
      %v548 = vadd.f32 0.0, %v547
      %549 = vmatmul.bf16.gmra.mxu0 %v516
      %v550 = vpop.f32.mrf.mxu0
      %v551 = vadd.f32 0.0, %v550
      %v552 = vpop.f32.mrf.mxu0
      %553 = vdwg.mxu0
      %v554 = vadd.f32 %v478, %v531
      %v555 = vadd.f32 %v479, %v533
      %v556 = vadd.f32 %v480, %v536
      %v557 = vadd.f32 %v481, %v538
      %v558 = vadd.f32 %v482, %v541
      %v559 = vadd.f32 %v483, %v543
      %v560 = vadd.f32 %v484, %v546
      %v561 = vadd.f32 %v485, %v548
      %v562 = vadd.f32 %v486, %v551
      %v563 = vld [vmem:[%s2] sm:$0x1]
      %v565 = vperm.slane %v563, 0
      %v567 = vadd.f32 %v554, %v565
      %v568 = vadd.f32 %v555, %v565
      %v569 = vadd.f32 %v556, %v565
      %v570 = vadd.f32 %v557, %v565
      %v571 = vadd.f32 %v558, %v565
      %v572 = vadd.f32 %v559, %v565
      %v573 = vadd.f32 %v560, %v565
      %v574 = vadd.f32 %v561, %v565
      %v575 = vadd.f32 %v562, %v565
      %v576 = vmax.f32 %v567, 0.0
      %v577 = vmax.f32 %v568, 0.0
      %v578 = vmax.f32 %v569, 0.0
      %v579 = vmax.f32 %v570, 0.0
      %v580 = vmax.f32 %v571, 0.0
      %v581 = vmax.f32 %v572, 0.0
      %v582 = vmax.f32 %v573, 0.0
      %v583 = vmax.f32 %v574, 0.0
      %v584 = vmax.f32 %v575, 0.0
      %v585 = vpack.c.bf16 %v576, %v576
      %v586 = vpack.c.bf16 %v577, %v577
      %v587 = vpack.c.bf16 %v578, %v578
      %v588 = vpack.c.bf16 %v579, %v579
      %v589 = vpack.c.bf16 %v580, %v580
      %v590 = vpack.c.bf16 %v581, %v581
      %v591 = vpack.c.bf16 %v582, %v582
      %v592 = vpack.c.bf16 %v583, %v583
      %v593 = vpack.c.bf16 %v584, %v584
      %vm594 = vcmask 257024
      %595 = vst.msk [vmem:[%s170] sm:$0xf] %vm594, %v585
      %596 = vst.msk [vmem:[%s170 + $0x4] sm:$0xf] %vm594, %v586
      %597 = vst.msk [vmem:[%s170 + $0x8] sm:$0xf] %vm594, %v587
      %598 = vst.msk [vmem:[%s170 + $0xc] sm:$0xf] %vm594, %v588
      %599 = vst.msk [vmem:[%s170 + $0x10] sm:$0xf] %vm594, %v589
      %600 = vst.msk [vmem:[%s170 + $0x14] sm:$0xf] %vm594, %v590
      %601 = vst.msk [vmem:[%s170 + $0x18] sm:$0xf] %vm594, %v591
      %602 = vst.msk [vmem:[%s170 + $0x1c] sm:$0xf] %vm594, %v592
      %603 = vst.msk [vmem:[%s170 + $0x20] sm:$0xf] %vm594, %v593
      %p604 = scmp.lt.s32.totalorder %s14, 1
      %s605 = scalar_select %p604, %s14, 1
      %s606 = smul.addr %s605, 9
      %s607 = smul.addr %s606, 4
      %s608 = scalar_lea.vmem %s3, %s607
      // Predicated region
      $region33: #{vae_forward.7} parent=31 // pred_check
        %p609 = pneg %p100
      $region34: #{vae_forward.7} parent=31 // pred_check_branch
        %611 = sbr.rel (%p609) target = $region36
      $region35: #{vae_forward.7} parent=31 // pred_region
        _
      $region36: #{vae_forward.7} parent=31 // pred_fallthru
        _
    $region32: #{vae_forward.7} parent=5 // pred_fallthru
      _
    %p612 = scmp.le.s32.totalorder 2, %s9
    // Predicated region
    $region37: #{vae_forward.7} parent=5 // pred_check
      %p613 = pneg %p612
    $region38: #{vae_forward.7} parent=5 // pred_check_branch
      %615 = sbr.rel (%p613) target = $region40
    $region39: #{vae_forward.7} parent=5 // pred_region
      %s616 = ssub.s32 %s9, 2
      // Predicated region
      $region41: #{vae_forward.7} parent=39 // pred_check
        %p617 = pneg %p106
      $region42: #{vae_forward.7} parent=39 // pred_check_branch
        %619 = sbr.rel (%p617) target = $region44
      $region43: #{vae_forward.7} parent=39 // pred_region
        %p620 = scmp.lt.s32.totalorder %s15, 1
        %s621 = scalar_select %p620, %s15, 1
        %s622 = smul.addr %s621, 9
        %s623 = smul.addr %s622, 4
        %s624 = scalar_lea.vmem %s3, %s623
      $region44: #{vae_forward.7} parent=39 // pred_fallthru
        _
    $region40: #{vae_forward.7} parent=5 // pred_fallthru
      _
  $region6: #{vae_forward.7} parent=0 // loop_footer
    %s13 = sadd.s32 1, %s9
  $region7: #{vae_forward.7} parent=0 // loop_footer_branch
    %8 = sbr.rel target = $region3
  $region8: #{vae_forward.7} parent=0 // loop_exit
    _

// kernel: vae_forward.8
$region0: #{vae_forward.8}
  #allocation0 [shape = 'u32[]', space=smem, size = 0x4, offset = 0x4, fixed_abs, tag = 'smem constant byte address 0x4 - core index']
  #allocation1 [shape = 'u32[72,128]{1,0:T(1,128)}', space=vmem, size = 0x9000, scoped, tag = 'internal scratch']
  %s0 = inlined_call_operand.vmem [shape: bf16[2,26,128], index: 0, kind: input, shape index: {}]
  %s1 = inlined_call_operand.vmem [shape: bf16[4,128,64], index: 1, kind: input, shape index: {}]
  %s2 = inlined_call_operand.vmem [shape: f32[1,64], index: 2, kind: input, shape index: {}]
  %s3 = inlined_call_operand.vmem [shape: bf16[2,20,64], index: 3, kind: output, shape index: {}]
  %s4 = sld [smem:[#allocation0]]
  $region45: #{vae_forward.8} parent=0
    _
  %s6 = ssub.s32 1, %s4
  %s7 = scalar_select 0, %s6, %s4
  loop: start=0, step=1, limit=4
  $region2: #{vae_forward.8} parent=0 // loop_pre_header
    _
  $region3: #{vae_forward.8} parent=0 // loop_header
    %s9 = sphi 0, %s13
    %p10 = scmp.ge.s32.totalorder %s9, 4
    %s19 = sphi 0, %s21
    %s22 = sphi 0, %s19
    %s23 = sphi 0, %s22
    %s39 = sphi 0, %s23
    %s43 = sphi 0, %s43
    %s45 = sphi 0, %s43
    %s46 = sphi 0, %s45
    %s60 = sphi 0, %s46
    %s64 = sphi 0, %s64
    %s66 = sphi 0, %s64
    %s67 = sphi 0, %s66
    %s81 = sphi 0, %s67
    %s87 = sphi 0, %s89
    %s90 = sphi 0, %s87
    %s91 = sphi 0, %s90
    %s107 = sphi 0, %s91
  $region4: #{vae_forward.8} parent=0 // loop_header_branch
    %12 = sbr.rel (%p10) target = $region8
  $region5: #{vae_forward.8} parent=0 // loop_body
    %s14 = ssub.s32 %s9, 1
    %s15 = ssub.s32 %s9, 2
    %s16 = sadd.s32 %s9, 1
    %s17 = ssub.s32 %s9, %s16
    %p18 = scmp.eq.s32.totalorder %s17, 0
    %s20 = sadd.s32 %s19, 1
    %s21 = scalar_select %p18, %s19, %s20
    %p24 = pneg %p18
    %p25 = scmp.eq.s32.totalorder %s9, 1
    %p26 = por %p24, %p25
    %p27 = scmp.ne.s32.totalorder %s19, %s22
    %p28 = scmp.eq.s32.totalorder %s9, 0
    %p29 = por %p27, %p28
    %p30 = scmp.ne.s32.totalorder %s19, %s22
    %p31 = scmp.eq.s32.totalorder %s14, 1
    %p32 = por %p30, %p31
    %p33 = scmp.ne.s32.totalorder %s22, %s23
    %p34 = scmp.eq.s32.totalorder %s14, 0
    %p35 = por %p33, %p34
    %p36 = scmp.ne.s32.totalorder %s22, %s23
    %p37 = scmp.eq.s32.totalorder %s15, 1
    %p38 = por %p36, %p37
    %p40 = scmp.ne.s32.totalorder %s23, %s39
    %p41 = scmp.eq.s32.totalorder %s15, 0
    %p42 = por %p40, %p41
    %s44 = sadd.s32 %s43, 1
    %p47 = scmp.eq.s32.totalorder %s9, 1
    %p48 = scmp.ne.s32.totalorder %s43, %s45
    %p49 = scmp.eq.s32.totalorder %s9, 0
    %p50 = por %p48, %p49
    %p51 = scmp.ne.s32.totalorder %s43, %s45
    %p52 = scmp.eq.s32.totalorder %s14, 1
    %p53 = por %p51, %p52
    %p54 = scmp.ne.s32.totalorder %s45, %s46
    %p55 = scmp.eq.s32.totalorder %s14, 0
    %p56 = por %p54, %p55
    %p57 = scmp.ne.s32.totalorder %s45, %s46
    %p58 = scmp.eq.s32.totalorder %s15, 1
    %p59 = por %p57, %p58
    %p61 = scmp.ne.s32.totalorder %s46, %s60
    %p62 = scmp.eq.s32.totalorder %s15, 0
    %p63 = por %p61, %p62
    %s65 = sadd.s32 %s64, 1
    %p68 = scmp.eq.s32.totalorder %s9, 1
    %p69 = scmp.ne.s32.totalorder %s64, %s66
    %p70 = scmp.eq.s32.totalorder %s9, 0
    %p71 = por %p69, %p70
    %p72 = scmp.ne.s32.totalorder %s64, %s66
    %p73 = scmp.eq.s32.totalorder %s14, 1
    %p74 = por %p72, %p73
    %p75 = scmp.ne.s32.totalorder %s66, %s67
    %p76 = scmp.eq.s32.totalorder %s14, 0
    %p77 = por %p75, %p76
    %p78 = scmp.ne.s32.totalorder %s66, %s67
    %p79 = scmp.eq.s32.totalorder %s15, 1
    %p80 = por %p78, %p79
    %p82 = scmp.ne.s32.totalorder %s67, %s81
    %p83 = scmp.eq.s32.totalorder %s15, 0
    %p84 = por %p82, %p83
    %s85 = ssub.s32 %s9, %s16
    %p86 = scmp.eq.s32.totalorder %s85, 0
    %s88 = sadd.s32 %s87, 1
    %s89 = scalar_select %p86, %s87, %s88
    %p92 = pneg %p86
    %p93 = scmp.eq.s32.totalorder %s9, 1
    %p94 = por %p92, %p93
    %p95 = scmp.ne.s32.totalorder %s87, %s90
    %p96 = scmp.eq.s32.totalorder %s9, 0
    %p97 = por %p95, %p96
    %p98 = scmp.ne.s32.totalorder %s87, %s90
    %p99 = scmp.eq.s32.totalorder %s14, 1
    %p100 = por %p98, %p99
    %p101 = scmp.ne.s32.totalorder %s90, %s91
    %p102 = scmp.eq.s32.totalorder %s14, 0
    %p103 = por %p101, %p102
    %p104 = scmp.ne.s32.totalorder %s90, %s91
    %p105 = scmp.eq.s32.totalorder %s15, 1
    %p106 = por %p104, %p105
    %p108 = scmp.ne.s32.totalorder %s91, %s107
    %p109 = scmp.eq.s32.totalorder %s15, 0
    %p110 = por %p108, %p109
    %p111 = scmp.le.s32.totalorder 1, %s9
    %p112 = scmp.lt.s32.totalorder %s9, 3
    %p113 = pnand %p111, %p112
    %p114 = pneg %p113
    // Predicated region
    $region9: #{vae_forward.8} parent=5 // pred_check
      _
    $region10: #{vae_forward.8} parent=5 // pred_check_branch
      %116 = sbr.rel (%p113) target = $region12
    $region11: #{vae_forward.8} parent=5 // pred_region
      %s117 = ssub.s32 %s9, 1
      // Predicated region
      $region13: #{vae_forward.8} parent=11 // pred_check
        %p118 = pneg %p56
      $region14: #{vae_forward.8} parent=11 // pred_check_branch
        %120 = sbr.rel (%p118) target = $region16
      $region15: #{vae_forward.8} parent=11 // pred_region
        _
      $region16: #{vae_forward.8} parent=11 // pred_fallthru
        _
      // Predicated region
      $region17: #{vae_forward.8} parent=11 // pred_check
        %p121 = pneg %p77
      $region18: #{vae_forward.8} parent=11 // pred_check_branch
        %123 = sbr.rel (%p121) target = $region20
      $region19: #{vae_forward.8} parent=11 // pred_region
        _
      $region20: #{vae_forward.8} parent=11 // pred_fallthru
        _
    $region12: #{vae_forward.8} parent=5 // pred_fallthru
      _
    %p124 = scmp.lt.s32.totalorder %s9, 2
    // Predicated region
    $region21: #{vae_forward.8} parent=5 // pred_check
      %p125 = pneg %p124
    $region22: #{vae_forward.8} parent=5 // pred_check_branch
      %127 = sbr.rel (%p125) target = $region24
    $region23: #{vae_forward.8} parent=5 // pred_region
      // Predicated region
      $region25: #{vae_forward.8} parent=23 // pred_check
        %p128 = pneg %p29
      $region26: #{vae_forward.8} parent=23 // pred_check_branch
        %130 = sbr.rel (%p128) target = $region28
      $region27: #{vae_forward.8} parent=23 // pred_region
        %p131 = scmp.lt.s32.totalorder %s9, 1
        %s132 = scalar_select %p131, %s9, 1
        %s133 = smul.addr %s132, 4
        %s134 = smul.addr %s133, 4
        %s135 = scalar_lea.vmem %s0, %s134
      $region28: #{vae_forward.8} parent=23 // pred_fallthru
        _
    $region24: #{vae_forward.8} parent=5 // pred_fallthru
      _
    %p136 = scmp.le.s32.totalorder 1, %s9
    %p137 = scmp.lt.s32.totalorder %s9, 3
    %p138 = pnand %p136, %p137
    %p139 = pneg %p138
    // Predicated region
    $region29: #{vae_forward.8} parent=5 // pred_check
      _
    $region30: #{vae_forward.8} parent=5 // pred_check_branch
      %141 = sbr.rel (%p138) target = $region32
    $region31: #{vae_forward.8} parent=5 // pred_region
      %s142 = ssub.s32 %s9, 1
      %p143 = scmp.lt.s32.totalorder %s14, 1
      %s144 = scalar_select %p143, %s14, 1
      %s145 = smul.addr %s144, 4
      %s146 = smul.addr %s145, 4
      %s147 = scalar_lea.vmem %s0, %s146
      %p148 = pneg %p35
      %p149 = pneg %p32
      %p150 = pneg %p56
      %p151 = pneg %p53
      %p152 = pneg %p77
      %p153 = pneg %p74
      %p154 = pneg %p103
      %p155 = pneg %p100
      %p156 = scmp.lt.s32.totalorder %s14, 1
      %s157 = scalar_select %p156, %s14, 1
      %s158 = smul.addr %s157, 3
      %s159 = smul.addr %s158, 4
      %s160 = scalar_lea.vmem %s3, %s159
      %p161 = scmp.lt.s32.totalorder %s14, 1
      %s162 = scalar_select %p161, %s14, 1
      %s163 = smul.addr %s162, 4
      %s164 = smul.addr %s163, 4
      %s165 = scalar_lea.vmem %s0, %s164
      %p166 = scmp.lt.s32.totalorder %s14, 1
      %s167 = scalar_select %p166, %s14, 1
      %s168 = smul.addr %s167, 3
      %s169 = smul.addr %s168, 4
      %s170 = scalar_lea.vmem %s3, %s169
      %v171 = vld [vmem:[%s165] sm:$0xf]
      %v172 = vld [vmem:[%s165 + $0x4] sm:$0xf]
      %v173 = vld [vmem:[%s165 + $0x8] sm:$0x3]
      %v174 = vld [vmem:[%s1] sm:$0xf]
      %v175 = vld [vmem:[%s1 + $0x4] sm:$0xf]
      %v176 = vld [vmem:[%s1 + $0x8] sm:$0xf]
      %v177 = vld [vmem:[%s1 + $0xc] sm:$0xf]
      %v178 = vld [vmem:[%s1 + $0x10] sm:$0xf]
      %v179 = vld [vmem:[%s1 + $0x14] sm:$0xf]
      %v180 = vld [vmem:[%s1 + $0x18] sm:$0xf]
      %v181 = vld [vmem:[%s1 + $0x1c] sm:$0xf]
      %v182 = vld [vmem:[%s1 + $0x20] sm:$0xf]
      %v183 = vld [vmem:[%s1 + $0x24] sm:$0xf]
      %v184 = vld [vmem:[%s1 + $0x28] sm:$0xf]
      %v185 = vld [vmem:[%s1 + $0x2c] sm:$0xf]
      %v186 = vld [vmem:[%s1 + $0x30] sm:$0xf]
      %v187 = vld [vmem:[%s1 + $0x34] sm:$0xf]
      %v188 = vld [vmem:[%s1 + $0x38] sm:$0xf]
      %v189 = vld [vmem:[%s1 + $0x3c] sm:$0xf]
      %v190 = vld [vmem:[%s165 + $0x8] sm:$0x7]
      %s191 = scalar_lea.vmem %s1, 64
      %v192 = vld [vmem:[%s191] sm:$0xf]
      %v193 = vld [vmem:[%s191 + $0x4] sm:$0xf]
      %v194 = vld [vmem:[%s191 + $0x8] sm:$0xf]
      %v195 = vld [vmem:[%s191 + $0xc] sm:$0xf]
      %v196 = vld [vmem:[%s191 + $0x10] sm:$0xf]
      %v197 = vld [vmem:[%s191 + $0x14] sm:$0xf]
      %v198 = vld [vmem:[%s191 + $0x18] sm:$0xf]
      %v199 = vld [vmem:[%s191 + $0x1c] sm:$0xf]
      %v200 = vld [vmem:[%s191 + $0x20] sm:$0xf]
      %v201 = vld [vmem:[%s191 + $0x24] sm:$0xf]
      %v202 = vld [vmem:[%s191 + $0x28] sm:$0xf]
      %v203 = vld [vmem:[%s191 + $0x2c] sm:$0xf]
      %v204 = vld [vmem:[%s191 + $0x30] sm:$0xf]
      %v205 = vld [vmem:[%s191 + $0x34] sm:$0xf]
      %v206 = vld [vmem:[%s191 + $0x38] sm:$0xf]
      %v207 = vld [vmem:[%s191 + $0x3c] sm:$0xf]
      %v211 = vunpack.c.l.b16 %v171
      %v212 = vunpack.c.l.b16 %v172
      %v213 = vunpack.c.l.b16 %v190
      %v214 = vpack.c.b16 %v212, %v211
      %v215 = vpack.c.b16 %v213, %v213
      %vm216 = vsmask.f32 7424
      %v218 = vshrl.u32 %v214, 16
      %v220 = vshll.u32 %v214, 16
      %v222 = vrot.slane %v220, 1
      %v223 = vor.u32 %v218, %v222
      %v225 = vshll.u32 %v215, 16
      %v227 = vrot.slane %v225, 1
      %v228 = vsel %vm216, %v223, %v227
      %v229 = vshrl.u32 %v215, 16
      %v231 = vor.u32 %v229, %v227
      %v250 = vunpack.c.l.b16 %v192
      %v251 = vunpack.c.l.b16 %v193
      %v252 = vunpack.c.l.b16 %v194
      %v253 = vunpack.c.l.b16 %v195
      %v254 = vunpack.c.l.b16 %v196
      %v255 = vunpack.c.l.b16 %v197
      %v256 = vunpack.c.l.b16 %v198
      %v257 = vunpack.c.l.b16 %v199
      %v258 = vunpack.c.l.b16 %v200
      %v259 = vunpack.c.l.b16 %v201
      %v260 = vunpack.c.l.b16 %v202
      %v261 = vunpack.c.l.b16 %v203
      %v262 = vunpack.c.l.b16 %v204
      %v263 = vunpack.c.l.b16 %v205
      %v264 = vunpack.c.l.b16 %v206
      %v265 = vunpack.c.l.b16 %v207
      %v266 = vpack.c.b16 %v251, %v250
      %v267 = vpack.c.b16 %v253, %v252
      %v268 = vpack.c.b16 %v255, %v254
      %v269 = vpack.c.b16 %v257, %v256
      %v270 = vpack.c.b16 %v259, %v258
      %v271 = vpack.c.b16 %v261, %v260
      %v272 = vpack.c.b16 %v263, %v262
      %v273 = vpack.c.b16 %v265, %v264
      %282 = vmatpush.bf16.msra.mxu0 %v273
      %283 = vmatpush.bf16.msra.mxu0 %v272
      %284 = vmatpush.bf16.msra.mxu0 %v271
      %285 = vmatpush.bf16.msra.mxu0 %v270
      %286 = vmatpush.bf16.msra.mxu0 %v269
      %287 = vmatpush.bf16.msra.mxu0 %v268
      %288 = vmatpush.bf16.msra.mxu0 %v267
      %289 = vmatpush.bf16.msra.mxu0 %v266
      %290 = vmatmul.bf16.gmra.mxu0 %v228
      %v291 = vpop.f32.mrf.mxu0
      %v292 = vadd.f32 0.0, %v291
      %v293 = vpop.f32.mrf.mxu0
      %v294 = vadd.f32 0.0, %v293
      %295 = vmatmul.bf16.gmra.mxu0 %v231
      %v296 = vpop.f32.mrf.mxu0
      %v297 = vadd.f32 0.0, %v296
      %v298 = vpop.f32.mrf.mxu0
      %299 = vdwg.mxu0
      %v301 = vunpack.c.l.b16 %v173
      %v302 = vpack.c.b16 %v301, %v301
      %v321 = vunpack.c.l.b16 %v174
      %v322 = vunpack.c.l.b16 %v175
      %v323 = vunpack.c.l.b16 %v176
      %v324 = vunpack.c.l.b16 %v177
      %v325 = vunpack.c.l.b16 %v178
      %v326 = vunpack.c.l.b16 %v179
      %v327 = vunpack.c.l.b16 %v180
      %v328 = vunpack.c.l.b16 %v181
      %v329 = vunpack.c.l.b16 %v182
      %v330 = vunpack.c.l.b16 %v183
      %v331 = vunpack.c.l.b16 %v184
      %v332 = vunpack.c.l.b16 %v185
      %v333 = vunpack.c.l.b16 %v186
      %v334 = vunpack.c.l.b16 %v187
      %v335 = vunpack.c.l.b16 %v188
      %v336 = vunpack.c.l.b16 %v189
      %v337 = vpack.c.b16 %v322, %v321
      %v338 = vpack.c.b16 %v324, %v323
      %v339 = vpack.c.b16 %v326, %v325
      %v340 = vpack.c.b16 %v328, %v327
      %v341 = vpack.c.b16 %v330, %v329
      %v342 = vpack.c.b16 %v332, %v331
      %v343 = vpack.c.b16 %v334, %v333
      %v344 = vpack.c.b16 %v336, %v335
      %353 = vmatpush.bf16.msra.mxu0 %v344
      %354 = vmatpush.bf16.msra.mxu0 %v343
      %355 = vmatpush.bf16.msra.mxu0 %v342
      %356 = vmatpush.bf16.msra.mxu0 %v341
      %357 = vmatpush.bf16.msra.mxu0 %v340
      %358 = vmatpush.bf16.msra.mxu0 %v339
      %359 = vmatpush.bf16.msra.mxu0 %v338
      %360 = vmatpush.bf16.msra.mxu0 %v337
      %361 = vmatmul.bf16.gmra.mxu0 %v214
      %v362 = vpop.f32.mrf.mxu0
      %v363 = vadd.f32 %v292, %v362
      %v364 = vpop.f32.mrf.mxu0
      %v365 = vadd.f32 %v294, %v364
      %366 = vmatmul.bf16.gmra.mxu0 %v302
      %v367 = vpop.f32.mrf.mxu0
      %v368 = vadd.f32 %v297, %v367
      %v369 = vpop.f32.mrf.mxu0
      %370 = vdwg.mxu0
      %v371 = vld [vmem:[%s165] sm:$0xc]
      %v372 = vld [vmem:[%s165 + $0x4] sm:$0xf]
      %v373 = vld [vmem:[%s165 + $0x8] sm:$0xf]
      %v374 = vld [vmem:[%s165 + $0xc] sm:$0x1]
      %s375 = scalar_lea.vmem %s1, 128
      %v376 = vld [vmem:[%s375] sm:$0xf]
      %v377 = vld [vmem:[%s375 + $0x4] sm:$0xf]
      %v378 = vld [vmem:[%s375 + $0x8] sm:$0xf]
      %v379 = vld [vmem:[%s375 + $0xc] sm:$0xf]
      %v380 = vld [vmem:[%s375 + $0x10] sm:$0xf]
      %v381 = vld [vmem:[%s375 + $0x14] sm:$0xf]
      %v382 = vld [vmem:[%s375 + $0x18] sm:$0xf]
      %v383 = vld [vmem:[%s375 + $0x1c] sm:$0xf]
      %v384 = vld [vmem:[%s375 + $0x20] sm:$0xf]
      %v385 = vld [vmem:[%s375 + $0x24] sm:$0xf]
      %v386 = vld [vmem:[%s375 + $0x28] sm:$0xf]
      %v387 = vld [vmem:[%s375 + $0x2c] sm:$0xf]
      %v388 = vld [vmem:[%s375 + $0x30] sm:$0xf]
      %v389 = vld [vmem:[%s375 + $0x34] sm:$0xf]
      %v390 = vld [vmem:[%s375 + $0x38] sm:$0xf]
      %v391 = vld [vmem:[%s375 + $0x3c] sm:$0xf]
      %v396 = vunpack.c.l.b16 %v371
      %v397 = vunpack.c.l.b16 %v372
      %v398 = vunpack.c.l.b16 %v373
      %v399 = vunpack.c.l.b16 %v374
      %v400 = vpack.c.b16 %v397, %v396
      %v401 = vpack.c.b16 %v399, %v398
      %vm402 = vsmask.f32 5376
      %v404 = vshrl.u32 %v400, 16
      %v406 = vrot.slane %v404, 2
      %v407 = vshll.u32 %v400, 16
      %v409 = vrot.slane %v407, 3
      %v410 = vor.u32 %v406, %v409
      %v412 = vshrl.u32 %v401, 16
      %v414 = vrot.slane %v412, 2
      %v415 = vshll.u32 %v401, 16
      %v417 = vrot.slane %v415, 3
      %v418 = vor.u32 %v414, %v417
      %v419 = vsel %vm402, %v410, %v418
      %v438 = vunpack.c.l.b16 %v376
      %v439 = vunpack.c.l.b16 %v377
      %v440 = vunpack.c.l.b16 %v378
      %v441 = vunpack.c.l.b16 %v379
      %v442 = vunpack.c.l.b16 %v380
      %v443 = vunpack.c.l.b16 %v381
      %v444 = vunpack.c.l.b16 %v382
      %v445 = vunpack.c.l.b16 %v383
      %v446 = vunpack.c.l.b16 %v384
      %v447 = vunpack.c.l.b16 %v385
      %v448 = vunpack.c.l.b16 %v386
      %v449 = vunpack.c.l.b16 %v387
      %v450 = vunpack.c.l.b16 %v388
      %v451 = vunpack.c.l.b16 %v389
      %v452 = vunpack.c.l.b16 %v390
      %v453 = vunpack.c.l.b16 %v391
      %v454 = vpack.c.b16 %v439, %v438
      %v455 = vpack.c.b16 %v441, %v440
      %v456 = vpack.c.b16 %v443, %v442
      %v457 = vpack.c.b16 %v445, %v444
      %v458 = vpack.c.b16 %v447, %v446
      %v459 = vpack.c.b16 %v449, %v448
      %v460 = vpack.c.b16 %v451, %v450
      %v461 = vpack.c.b16 %v453, %v452
      %470 = vmatpush.bf16.msra.mxu0 %v461
      %471 = vmatpush.bf16.msra.mxu0 %v460
      %472 = vmatpush.bf16.msra.mxu0 %v459
      %473 = vmatpush.bf16.msra.mxu0 %v458
      %474 = vmatpush.bf16.msra.mxu0 %v457
      %475 = vmatpush.bf16.msra.mxu0 %v456
      %476 = vmatpush.bf16.msra.mxu0 %v455
      %477 = vmatpush.bf16.msra.mxu0 %v454
      %478 = vmatmul.bf16.gmra.mxu0 %v419
      %v479 = vpop.f32.mrf.mxu0
      %v480 = vadd.f32 0.0, %v479
      %v481 = vpop.f32.mrf.mxu0
      %v482 = vadd.f32 0.0, %v481
      %483 = vmatmul.bf16.gmra.mxu0 %v418
      %v484 = vpop.f32.mrf.mxu0
      %v485 = vadd.f32 0.0, %v484
      %v486 = vpop.f32.mrf.mxu0
      %487 = vdwg.mxu0
      %v488 = vadd.f32 %v363, %v480
      %v489 = vadd.f32 %v365, %v482
      %v490 = vadd.f32 %v368, %v485
      %v491 = vld [vmem:[%s165] sm:$0x8]
      %s492 = scalar_lea.vmem %s1, 192
      %v493 = vld [vmem:[%s492] sm:$0xf]
      %v494 = vld [vmem:[%s492 + $0x4] sm:$0xf]
      %v495 = vld [vmem:[%s492 + $0x8] sm:$0xf]
      %v496 = vld [vmem:[%s492 + $0xc] sm:$0xf]
      %v497 = vld [vmem:[%s492 + $0x10] sm:$0xf]
      %v498 = vld [vmem:[%s492 + $0x14] sm:$0xf]
      %v499 = vld [vmem:[%s492 + $0x18] sm:$0xf]
      %v500 = vld [vmem:[%s492 + $0x1c] sm:$0xf]
      %v501 = vld [vmem:[%s492 + $0x20] sm:$0xf]
      %v502 = vld [vmem:[%s492 + $0x24] sm:$0xf]
      %v503 = vld [vmem:[%s492 + $0x28] sm:$0xf]
      %v504 = vld [vmem:[%s492 + $0x2c] sm:$0xf]
      %v505 = vld [vmem:[%s492 + $0x30] sm:$0xf]
      %v506 = vld [vmem:[%s492 + $0x34] sm:$0xf]
      %v507 = vld [vmem:[%s492 + $0x38] sm:$0xf]
      %v508 = vld [vmem:[%s492 + $0x3c] sm:$0xf]
      %v510 = vunpack.c.l.b16 %v491
      %v511 = vpack.c.b16 %v397, %v510
      %vm512 = vcmask 1044480
      %v513 = vrot.slane %v511, 3
      %v514 = vrot.slane %v401, 3
      %v515 = vsel %vm512, %v513, %v514
      %v534 = vunpack.c.l.b16 %v493
      %v535 = vunpack.c.l.b16 %v494
      %v536 = vunpack.c.l.b16 %v495
      %v537 = vunpack.c.l.b16 %v496
      %v538 = vunpack.c.l.b16 %v497
      %v539 = vunpack.c.l.b16 %v498
      %v540 = vunpack.c.l.b16 %v499
      %v541 = vunpack.c.l.b16 %v500
      %v542 = vunpack.c.l.b16 %v501
      %v543 = vunpack.c.l.b16 %v502
      %v544 = vunpack.c.l.b16 %v503
      %v545 = vunpack.c.l.b16 %v504
      %v546 = vunpack.c.l.b16 %v505
      %v547 = vunpack.c.l.b16 %v506
      %v548 = vunpack.c.l.b16 %v507
      %v549 = vunpack.c.l.b16 %v508
      %v550 = vpack.c.b16 %v535, %v534
      %v551 = vpack.c.b16 %v537, %v536
      %v552 = vpack.c.b16 %v539, %v538
      %v553 = vpack.c.b16 %v541, %v540
      %v554 = vpack.c.b16 %v543, %v542
      %v555 = vpack.c.b16 %v545, %v544
      %v556 = vpack.c.b16 %v547, %v546
      %v557 = vpack.c.b16 %v549, %v548
      %566 = vmatpush.bf16.msra.mxu0 %v557
      %567 = vmatpush.bf16.msra.mxu0 %v556
      %568 = vmatpush.bf16.msra.mxu0 %v555
      %569 = vmatpush.bf16.msra.mxu0 %v554
      %570 = vmatpush.bf16.msra.mxu0 %v553
      %571 = vmatpush.bf16.msra.mxu0 %v552
      %572 = vmatpush.bf16.msra.mxu0 %v551
      %573 = vmatpush.bf16.msra.mxu0 %v550
      %574 = vmatmul.bf16.gmra.mxu0 %v515
      %v575 = vpop.f32.mrf.mxu0
      %v576 = vadd.f32 0.0, %v575
      %v577 = vpop.f32.mrf.mxu0
      %v578 = vadd.f32 0.0, %v577
      %579 = vmatmul.bf16.gmra.mxu0 %v514
      %v580 = vpop.f32.mrf.mxu0
      %v581 = vadd.f32 0.0, %v580
      %v582 = vpop.f32.mrf.mxu0
      %583 = vdwg.mxu0
      %v584 = vadd.f32 %v488, %v576
      %v585 = vadd.f32 %v489, %v578
      %v586 = vadd.f32 %v490, %v581
      %v587 = vld [vmem:[%s2] sm:$0x1]
      %v589 = vperm.slane %v587, 0
      %v591 = vadd.f32 %v584, %v589
      %v592 = vadd.f32 %v585, %v589
      %v593 = vadd.f32 %v586, %v589
      %v594 = vmax.f32 %v591, 0.0
      %v595 = vmax.f32 %v592, 0.0
      %v596 = vmax.f32 %v593, 0.0
      %v597 = vpack.c.bf16 %v594, %v594
      %v598 = vpack.c.bf16 %v595, %v595
      %v599 = vpack.c.bf16 %v596, %v596
      %vm600 = vcmask 519168
      %601 = vst.msk [vmem:[%s170] sm:$0xf] %vm600, %v597
      %602 = vst.msk [vmem:[%s170 + $0x4] sm:$0xf] %vm600, %v598
      %vm603 = vcmask 517120
      %604 = vst.msk [vmem:[%s170 + $0x8] sm:$0x3] %vm603, %v599
      %p605 = scmp.lt.s32.totalorder %s14, 1
      %s606 = scalar_select %p605, %s14, 1
      %s607 = smul.addr %s606, 3
      %s608 = smul.addr %s607, 4
      %s609 = scalar_lea.vmem %s3, %s608
      // Predicated region
      $region33: #{vae_forward.8} parent=31 // pred_check
        %p610 = pneg %p100
      $region34: #{vae_forward.8} parent=31 // pred_check_branch
        %612 = sbr.rel (%p610) target = $region36
      $region35: #{vae_forward.8} parent=31 // pred_region
        _
      $region36: #{vae_forward.8} parent=31 // pred_fallthru
        _
    $region32: #{vae_forward.8} parent=5 // pred_fallthru
      _
    %p613 = scmp.le.s32.totalorder 2, %s9
    // Predicated region
    $region37: #{vae_forward.8} parent=5 // pred_check
      %p614 = pneg %p613
    $region38: #{vae_forward.8} parent=5 // pred_check_branch
      %616 = sbr.rel (%p614) target = $region40
    $region39: #{vae_forward.8} parent=5 // pred_region
      %s617 = ssub.s32 %s9, 2
      // Predicated region
      $region41: #{vae_forward.8} parent=39 // pred_check
        %p618 = pneg %p106
      $region42: #{vae_forward.8} parent=39 // pred_check_branch
        %620 = sbr.rel (%p618) target = $region44
      $region43: #{vae_forward.8} parent=39 // pred_region
        %p621 = scmp.lt.s32.totalorder %s15, 1
        %s622 = scalar_select %p621, %s15, 1
        %s623 = smul.addr %s622, 3
        %s624 = smul.addr %s623, 4
        %s625 = scalar_lea.vmem %s3, %s624
      $region44: #{vae_forward.8} parent=39 // pred_fallthru
        _
    $region40: #{vae_forward.8} parent=5 // pred_fallthru
      _
  $region6: #{vae_forward.8} parent=0 // loop_footer
    %s13 = sadd.s32 1, %s9
  $region7: #{vae_forward.8} parent=0 // loop_footer_branch
    %8 = sbr.rel target = $region3
  $region8: #{vae_forward.8} parent=0 // loop_exit
    _

// kernel: vae_forward.10
$region0: #{vae_forward.10}
  #allocation0 [shape = 'u32[]', space=smem, size = 0x4, offset = 0x4, fixed_abs, tag = 'smem constant byte address 0x4 - core index']
  #allocation1 [shape = 'u32[72,128]{1,0:T(1,128)}', space=vmem, size = 0x9000, scoped, tag = 'internal scratch']
  %s0 = inlined_call_operand.vmem [shape: bf16[2,512], index: 0, kind: input, shape index: {}]
  %s1 = inlined_call_operand.vmem [shape: bf16[512,32], index: 1, kind: input, shape index: {}]
  %s2 = inlined_call_operand.vmem [shape: f32[1,32], index: 2, kind: input, shape index: {}]
  %s3 = inlined_call_operand.vmem [shape: f32[2,16], index: 3, kind: input, shape index: {}]
  %s4 = inlined_call_operand.vmem [shape: bf16[16,512], index: 4, kind: input, shape index: {}]
  %s5 = inlined_call_operand.vmem [shape: f32[1,512], index: 5, kind: input, shape index: {}]
  %s6 = inlined_call_operand.vmem [shape: f32[2,32], index: 6, kind: output, shape index: {0}]
  %s7 = inlined_call_operand.vmem [shape: bf16[2,512], index: 7, kind: output, shape index: {1}]
  %8 = xla_tuple %s6, %s7
  %s9 = sld [smem:[#allocation0]]
  $region42: #{vae_forward.10} parent=0
    _
  %s11 = ssub.s32 1, %s9
  %s12 = scalar_select 0, %s11, %s9
  // Predicated region
  $region2: #{vae_forward.10} parent=0 // pred_check
    _
  $region3: #{vae_forward.10} parent=0 // pred_check_branch
    %14 = sbr.rel (0) target = $region5
  $region4: #{vae_forward.10} parent=0 // pred_region
    _
  $region5: #{vae_forward.10} parent=0 // pred_fallthru
    _
  // Predicated region
  $region6: #{vae_forward.10} parent=0 // pred_check
    _
  $region7: #{vae_forward.10} parent=0 // pred_check_branch
    %16 = sbr.rel (0) target = $region9
  $region8: #{vae_forward.10} parent=0 // pred_region
    _
  $region9: #{vae_forward.10} parent=0 // pred_fallthru
    _
  // Predicated region
  $region10: #{vae_forward.10} parent=0 // pred_check
    _
  $region11: #{vae_forward.10} parent=0 // pred_check_branch
    %18 = sbr.rel (0) target = $region13
  $region12: #{vae_forward.10} parent=0 // pred_region
    _
  $region13: #{vae_forward.10} parent=0 // pred_fallthru
    _
  // Predicated region
  $region14: #{vae_forward.10} parent=0 // pred_check
    _
  $region15: #{vae_forward.10} parent=0 // pred_check_branch
    %20 = sbr.rel (0) target = $region17
  $region16: #{vae_forward.10} parent=0 // pred_region
    _
  $region17: #{vae_forward.10} parent=0 // pred_fallthru
    _
  // Predicated region
  $region18: #{vae_forward.10} parent=0 // pred_check
    _
  $region19: #{vae_forward.10} parent=0 // pred_check_branch
    %22 = sbr.rel (0) target = $region21
  $region20: #{vae_forward.10} parent=0 // pred_region
    _
  $region21: #{vae_forward.10} parent=0 // pred_fallthru
    _
  // Predicated region
  $region22: #{vae_forward.10} parent=0 // pred_check
    _
  $region23: #{vae_forward.10} parent=0 // pred_check_branch
    %24 = sbr.rel (0) target = $region25
  $region24: #{vae_forward.10} parent=0 // pred_region
    _
  $region25: #{vae_forward.10} parent=0 // pred_fallthru
    _
  %v26 = vld [vmem:[%s0] sm:$0xf]
  %v27 = vld [vmem:[%s1] sm:$0xf]
  %v28 = vld [vmem:[%s1 + $0x4] sm:$0xf]
  %v29 = vld [vmem:[%s1 + $0x8] sm:$0xf]
  %v30 = vld [vmem:[%s1 + $0xc] sm:$0xf]
  %v31 = vld [vmem:[%s1 + $0x10] sm:$0xf]
  %v32 = vld [vmem:[%s1 + $0x14] sm:$0xf]
  %v33 = vld [vmem:[%s1 + $0x18] sm:$0xf]
  %v34 = vld [vmem:[%s1 + $0x1c] sm:$0xf]
  %v35 = vld [vmem:[%s1 + $0x20] sm:$0xf]
  %v36 = vld [vmem:[%s1 + $0x24] sm:$0xf]
  %v37 = vld [vmem:[%s1 + $0x28] sm:$0xf]
  %v38 = vld [vmem:[%s1 + $0x2c] sm:$0xf]
  %v39 = vld [vmem:[%s1 + $0x30] sm:$0xf]
  %v40 = vld [vmem:[%s1 + $0x34] sm:$0xf]
  %v41 = vld [vmem:[%s1 + $0x38] sm:$0xf]
  %v42 = vld [vmem:[%s1 + $0x3c] sm:$0xf]
  %v43 = vld [vmem:[%s1 + $0x40] sm:$0xf]
  %v44 = vld [vmem:[%s1 + $0x44] sm:$0xf]
  %v45 = vld [vmem:[%s1 + $0x48] sm:$0xf]
  %v46 = vld [vmem:[%s1 + $0x4c] sm:$0xf]
  %v47 = vld [vmem:[%s1 + $0x50] sm:$0xf]
  %v48 = vld [vmem:[%s1 + $0x54] sm:$0xf]
  %v49 = vld [vmem:[%s1 + $0x58] sm:$0xf]
  %v50 = vld [vmem:[%s1 + $0x5c] sm:$0xf]
  %v51 = vld [vmem:[%s1 + $0x60] sm:$0xf]
  %v52 = vld [vmem:[%s1 + $0x64] sm:$0xf]
  %v53 = vld [vmem:[%s1 + $0x68] sm:$0xf]
  %v54 = vld [vmem:[%s1 + $0x6c] sm:$0xf]
  %v55 = vld [vmem:[%s1 + $0x70] sm:$0xf]
  %v56 = vld [vmem:[%s1 + $0x74] sm:$0xf]
  %v57 = vld [vmem:[%s1 + $0x78] sm:$0xf]
  %v58 = vld [vmem:[%s1 + $0x7c] sm:$0xf]
  %v59 = vld [vmem:[%s1 + $0x80] sm:$0xf]
  %v60 = vld [vmem:[%s1 + $0x84] sm:$0xf]
  %v61 = vld [vmem:[%s1 + $0x88] sm:$0xf]
  %v62 = vld [vmem:[%s1 + $0x8c] sm:$0xf]
  %v63 = vld [vmem:[%s1 + $0x90] sm:$0xf]
  %v64 = vld [vmem:[%s1 + $0x94] sm:$0xf]
  %v65 = vld [vmem:[%s1 + $0x98] sm:$0xf]
  %v66 = vld [vmem:[%s1 + $0x9c] sm:$0xf]
  %v67 = vld [vmem:[%s1 + $0xa0] sm:$0xf]
  %v68 = vld [vmem:[%s1 + $0xa4] sm:$0xf]
  %v69 = vld [vmem:[%s1 + $0xa8] sm:$0xf]
  %v70 = vld [vmem:[%s1 + $0xac] sm:$0xf]
  %v71 = vld [vmem:[%s1 + $0xb0] sm:$0xf]
  %v72 = vld [vmem:[%s1 + $0xb4] sm:$0xf]
  %v73 = vld [vmem:[%s1 + $0xb8] sm:$0xf]
  %v74 = vld [vmem:[%s1 + $0xbc] sm:$0xf]
  %v75 = vld [vmem:[%s1 + $0xc0] sm:$0xf]
  %v76 = vld [vmem:[%s1 + $0xc4] sm:$0xf]
  %v77 = vld [vmem:[%s1 + $0xc8] sm:$0xf]
  %v78 = vld [vmem:[%s1 + $0xcc] sm:$0xf]
  %v79 = vld [vmem:[%s1 + $0xd0] sm:$0xf]
  %v80 = vld [vmem:[%s1 + $0xd4] sm:$0xf]
  %v81 = vld [vmem:[%s1 + $0xd8] sm:$0xf]
  %v82 = vld [vmem:[%s1 + $0xdc] sm:$0xf]
  %v83 = vld [vmem:[%s1 + $0xe0] sm:$0xf]
  %v84 = vld [vmem:[%s1 + $0xe4] sm:$0xf]
  %v85 = vld [vmem:[%s1 + $0xe8] sm:$0xf]
  %v86 = vld [vmem:[%s1 + $0xec] sm:$0xf]
  %v87 = vld [vmem:[%s1 + $0xf0] sm:$0xf]
  %v88 = vld [vmem:[%s1 + $0xf4] sm:$0xf]
  %v89 = vld [vmem:[%s1 + $0xf8] sm:$0xf]
  %v90 = vld [vmem:[%s1 + $0xfc] sm:$0xf]
  %v91 = vld [vmem:[%s2] sm:$0x1]
  %v93 = vperm.slane %v91, 0
  %96 = vst [vmem:[#allocation1] ss:$9 sm:$0xff] %v26
  %v97 = vld [vmem:[#allocation1] sm:$0xff]
  %v98 = vld [vmem:[#allocation1 + $0x9] sm:$0xff]
  %v99 = vld [vmem:[#allocation1 + $0x12] sm:$0xff]
  %v100 = vld [vmem:[#allocation1 + $0x1b] sm:$0xff]
  %v169 = vunpack.c.l.b16 %v27
  %v170 = vunpack.c.l.b16 %v28
  %v171 = vunpack.c.l.b16 %v29
  %v172 = vunpack.c.l.b16 %v30
  %v173 = vunpack.c.l.b16 %v31
  %v174 = vunpack.c.l.b16 %v32
  %v175 = vunpack.c.l.b16 %v33
  %v176 = vunpack.c.l.b16 %v34
  %v177 = vunpack.c.l.b16 %v35
  %v178 = vunpack.c.l.b16 %v36
  %v179 = vunpack.c.l.b16 %v37
  %v180 = vunpack.c.l.b16 %v38
  %v181 = vunpack.c.l.b16 %v39
  %v182 = vunpack.c.l.b16 %v40
  %v183 = vunpack.c.l.b16 %v41
  %v184 = vunpack.c.l.b16 %v42
  %v185 = vunpack.c.l.b16 %v43
  %v186 = vunpack.c.l.b16 %v44
  %v187 = vunpack.c.l.b16 %v45
  %v188 = vunpack.c.l.b16 %v46
  %v189 = vunpack.c.l.b16 %v47
  %v190 = vunpack.c.l.b16 %v48
  %v191 = vunpack.c.l.b16 %v49
  %v192 = vunpack.c.l.b16 %v50
  %v193 = vunpack.c.l.b16 %v51
  %v194 = vunpack.c.l.b16 %v52
  %v195 = vunpack.c.l.b16 %v53
  %v196 = vunpack.c.l.b16 %v54
  %v197 = vunpack.c.l.b16 %v55
  %v198 = vunpack.c.l.b16 %v56
  %v199 = vunpack.c.l.b16 %v57
  %v200 = vunpack.c.l.b16 %v58
  %v201 = vunpack.c.l.b16 %v59
  %v202 = vunpack.c.l.b16 %v60
  %v203 = vunpack.c.l.b16 %v61
  %v204 = vunpack.c.l.b16 %v62
  %v205 = vunpack.c.l.b16 %v63
  %v206 = vunpack.c.l.b16 %v64
  %v207 = vunpack.c.l.b16 %v65
  %v208 = vunpack.c.l.b16 %v66
  %v209 = vunpack.c.l.b16 %v67
  %v210 = vunpack.c.l.b16 %v68
  %v211 = vunpack.c.l.b16 %v69
  %v212 = vunpack.c.l.b16 %v70
  %v213 = vunpack.c.l.b16 %v71
  %v214 = vunpack.c.l.b16 %v72
  %v215 = vunpack.c.l.b16 %v73
  %v216 = vunpack.c.l.b16 %v74
  %v217 = vunpack.c.l.b16 %v75
  %v218 = vunpack.c.l.b16 %v76
  %v219 = vunpack.c.l.b16 %v77
  %v220 = vunpack.c.l.b16 %v78
  %v221 = vunpack.c.l.b16 %v79
  %v222 = vunpack.c.l.b16 %v80
  %v223 = vunpack.c.l.b16 %v81
  %v224 = vunpack.c.l.b16 %v82
  %v225 = vunpack.c.l.b16 %v83
  %v226 = vunpack.c.l.b16 %v84
  %v227 = vunpack.c.l.b16 %v85
  %v228 = vunpack.c.l.b16 %v86
  %v229 = vunpack.c.l.b16 %v87
  %v230 = vunpack.c.l.b16 %v88
  %v231 = vunpack.c.l.b16 %v89
  %v232 = vunpack.c.l.b16 %v90
  %v233 = vpack.c.b16 %v170, %v169
  %v234 = vpack.c.b16 %v172, %v171
  %v235 = vpack.c.b16 %v174, %v173
  %v236 = vpack.c.b16 %v176, %v175
  %v237 = vpack.c.b16 %v178, %v177
  %v238 = vpack.c.b16 %v180, %v179
  %v239 = vpack.c.b16 %v182, %v181
  %v240 = vpack.c.b16 %v184, %v183
  %v241 = vpack.c.b16 %v186, %v185
  %v242 = vpack.c.b16 %v188, %v187
  %v243 = vpack.c.b16 %v190, %v189
  %v244 = vpack.c.b16 %v192, %v191
  %v245 = vpack.c.b16 %v194, %v193
  %v246 = vpack.c.b16 %v196, %v195
  %v247 = vpack.c.b16 %v198, %v197
  %v248 = vpack.c.b16 %v200, %v199
  %v249 = vpack.c.b16 %v202, %v201
  %v250 = vpack.c.b16 %v204, %v203
  %v251 = vpack.c.b16 %v206, %v205
  %v252 = vpack.c.b16 %v208, %v207
  %v253 = vpack.c.b16 %v210, %v209
  %v254 = vpack.c.b16 %v212, %v211
  %v255 = vpack.c.b16 %v214, %v213
  %v256 = vpack.c.b16 %v216, %v215
  %v257 = vpack.c.b16 %v218, %v217
  %v258 = vpack.c.b16 %v220, %v219
  %v259 = vpack.c.b16 %v222, %v221
  %v260 = vpack.c.b16 %v224, %v223
  %v261 = vpack.c.b16 %v226, %v225
  %v262 = vpack.c.b16 %v228, %v227
  %v263 = vpack.c.b16 %v230, %v229
  %v264 = vpack.c.b16 %v232, %v231
  %297 = vmatpush.bf16.msra.mxu0 %v240
  %298 = vmatpush.bf16.msra.mxu0 %v239
  %299 = vmatpush.bf16.msra.mxu0 %v238
  %300 = vmatpush.bf16.msra.mxu0 %v237
  %301 = vmatpush.bf16.msra.mxu0 %v236
  %302 = vmatpush.bf16.msra.mxu0 %v235
  %303 = vmatpush.bf16.msra.mxu0 %v234
  %304 = vmatpush.bf16.msra.mxu0 %v233
  %305 = vmatmul.bf16.gmra.mxu0 %v97
  %v306 = vpop.f32.mrf.mxu0
  %v307 = vadd.f32 %v93, %v306
  %v308 = vpop.f32.mrf.mxu0
  %309 = vdwg.mxu0
  %310 = vmatpush.bf16.msra.mxu0 %v248
  %311 = vmatpush.bf16.msra.mxu0 %v247
  %312 = vmatpush.bf16.msra.mxu0 %v246
  %313 = vmatpush.bf16.msra.mxu0 %v245
  %314 = vmatpush.bf16.msra.mxu0 %v244
  %315 = vmatpush.bf16.msra.mxu0 %v243
  %316 = vmatpush.bf16.msra.mxu0 %v242
  %317 = vmatpush.bf16.msra.mxu0 %v241
  %318 = vmatmul.bf16.gmra.mxu0 %v98
  %v319 = vpop.f32.mrf.mxu0
  %v320 = vadd.f32 %v307, %v319
  %v321 = vpop.f32.mrf.mxu0
  %322 = vdwg.mxu0
  %323 = vmatpush.bf16.msra.mxu0 %v256
  %324 = vmatpush.bf16.msra.mxu0 %v255
  %325 = vmatpush.bf16.msra.mxu0 %v254
  %326 = vmatpush.bf16.msra.mxu0 %v253
  %327 = vmatpush.bf16.msra.mxu0 %v252
  %328 = vmatpush.bf16.msra.mxu0 %v251
  %329 = vmatpush.bf16.msra.mxu0 %v250
  %330 = vmatpush.bf16.msra.mxu0 %v249
  %331 = vmatmul.bf16.gmra.mxu0 %v99
  %v332 = vpop.f32.mrf.mxu0
  %v333 = vadd.f32 %v320, %v332
  %v334 = vpop.f32.mrf.mxu0
  %335 = vdwg.mxu0
  %336 = vmatpush.bf16.msra.mxu0 %v264
  %337 = vmatpush.bf16.msra.mxu0 %v263
  %338 = vmatpush.bf16.msra.mxu0 %v262
  %339 = vmatpush.bf16.msra.mxu0 %v261
  %340 = vmatpush.bf16.msra.mxu0 %v260
  %341 = vmatpush.bf16.msra.mxu0 %v259
  %342 = vmatpush.bf16.msra.mxu0 %v258
  %343 = vmatpush.bf16.msra.mxu0 %v257
  %344 = vmatmul.bf16.gmra.mxu0 %v100
  %v345 = vpop.f32.mrf.mxu0
  %v346 = vadd.f32 %v333, %v345
  %v347 = vpop.f32.mrf.mxu0
  %348 = vdwg.mxu0
  %v349 = vld [vmem:[%s3] sm:$0x3]
  %v350 = vmul.f32 %v346, 0.5
  %v351 = vmul.f32 %v350, 1.442695
  %v352 = vpow.pop %v351
  %354 = vrot.lane.b32.xlu0 %v352, 112
  %v355 = vpop.permute.xlu0 %354
  %v357 = vmul.f32 %v349, %v355
  %v358 = vadd.f32 %v346, %v357
  %v359 = vpack.c.bf16 %v358, %v358
  %v360 = vld [vmem:[%s4] sm:$0xff]
  %v361 = vld [vmem:[%s4 + $0x8] sm:$0xff]
  %v362 = vld [vmem:[%s4 + $0x10] sm:$0xff]
  %v363 = vld [vmem:[%s4 + $0x18] sm:$0xff]
  %v364 = vld [vmem:[%s5] sm:$0xf]
  %v366 = vperm.slane %v364, 0
  %v367 = vperm.slane %v364, 1
  %v368 = vperm.slane %v364, 2
  %v369 = vperm.slane %v364, 3
  %v378 = vunpack.c.l.b16 %v360
  %v379 = vunpack.c.h.b16 %v360
  %v380 = vunpack.c.l.b16 %v361
  %v381 = vunpack.c.h.b16 %v361
  %v382 = vunpack.c.l.b16 %v362
  %v383 = vunpack.c.h.b16 %v362
  %v384 = vunpack.c.l.b16 %v363
  %v385 = vunpack.c.h.b16 %v363
  %v386 = vpack.c.b16 %v382, %v378
  %v387 = vpack.c.b16 %v383, %v379
  %v388 = vpack.c.b16 %v384, %v380
  %v389 = vpack.c.b16 %v385, %v381
  %vm394 = vcmask 130048
  %v396 = vsel %vm394, %v359, 0
  %398 = vmatpush.bf16.msra.mxu0 0
  %399 = vmatpush.bf16.msra.mxu0 0
  %400 = vmatpush.bf16.msra.mxu0 0
  %401 = vmatpush.bf16.msra.mxu0 0
  %402 = vmatpush.bf16.msra.mxu0 0
  %403 = vmatpush.bf16.msra.mxu0 0
  %404 = vmatpush.bf16.msra.mxu0 0
  %405 = vmatpush.bf16.msra.mxu0 %v386
  %406 = vmatmul.bf16.gmra.mxu0 %v396
  %v407 = vpop.f32.mrf.mxu0
  %v408 = vadd.f32 %v366, %v407
  %v409 = vpop.f32.mrf.mxu0
  %410 = vdwg.mxu0
  %411 = vmatpush.bf16.msra.mxu0 0
  %412 = vmatpush.bf16.msra.mxu0 0
  %413 = vmatpush.bf16.msra.mxu0 0
  %414 = vmatpush.bf16.msra.mxu0 0
  %415 = vmatpush.bf16.msra.mxu0 0
  %416 = vmatpush.bf16.msra.mxu0 0
  %417 = vmatpush.bf16.msra.mxu0 0
  %418 = vmatpush.bf16.msra.mxu0 %v387
  %419 = vmatmul.bf16.gmra.mxu0 %v396
  %v420 = vpop.f32.mrf.mxu0
  %v421 = vadd.f32 %v367, %v420
  %v422 = vpop.f32.mrf.mxu0
  %423 = vdwg.mxu0
  %424 = vmatpush.bf16.msra.mxu0 0
  %425 = vmatpush.bf16.msra.mxu0 0
  %426 = vmatpush.bf16.msra.mxu0 0
  %427 = vmatpush.bf16.msra.mxu0 0
  %428 = vmatpush.bf16.msra.mxu0 0
  %429 = vmatpush.bf16.msra.mxu0 0
  %430 = vmatpush.bf16.msra.mxu0 0
  %431 = vmatpush.bf16.msra.mxu0 %v388
  %432 = vmatmul.bf16.gmra.mxu0 %v396
  %v433 = vpop.f32.mrf.mxu0
  %v434 = vadd.f32 %v368, %v433
  %v435 = vpop.f32.mrf.mxu0
  %436 = vdwg.mxu0
  %437 = vmatpush.bf16.msra.mxu0 0
  %438 = vmatpush.bf16.msra.mxu0 0
  %439 = vmatpush.bf16.msra.mxu0 0
  %440 = vmatpush.bf16.msra.mxu0 0
  %441 = vmatpush.bf16.msra.mxu0 0
  %442 = vmatpush.bf16.msra.mxu0 0
  %443 = vmatpush.bf16.msra.mxu0 0
  %444 = vmatpush.bf16.msra.mxu0 %v389
  %445 = vmatmul.bf16.gmra.mxu0 %v396
  %v446 = vpop.f32.mrf.mxu0
  %v447 = vadd.f32 %v369, %v446
  %v448 = vpop.f32.mrf.mxu0
  %449 = vdwg.mxu0
  %vm450 = vcmask 254976
  %451 = vst.msk [vmem:[%s6] sm:$0x3] %vm450, %v346
  %v452 = vpack.c.bf16 %v421, %v408
  %v453 = vpack.c.bf16 %v447, %v434
  %v456 = vrot.slane %v452, 3
  %v457 = vrot.slane %v453, 6
  %v458 = vrot.slane %v453, 1
  %vm459 = vcmask 1040384
  %v462 = vsel %vm459, %v452, %v456
  %vm463 = vcmask 1042434
  %v466 = vsel %vm463, %v457, %v458
  %vm467 = vcmask 1041408
  %v468 = vsel %vm467, %v462, %v466
  %470 = vst [vmem:[%s7] sm:$0xf] %v468
  // Predicated region
  $region26: #{vae_forward.10} parent=0 // pred_check
    _
  $region27: #{vae_forward.10} parent=0 // pred_check_branch
    %472 = sbr.rel (0) target = $region29
  $region28: #{vae_forward.10} parent=0 // pred_region
    _
  $region29: #{vae_forward.10} parent=0 // pred_fallthru
    _
  // Predicated region
  $region30: #{vae_forward.10} parent=0 // pred_check
    _
  $region31: #{vae_forward.10} parent=0 // pred_check_branch
    %474 = sbr.rel (0) target = $region33
  $region32: #{vae_forward.10} parent=0 // pred_region
    _
  $region33: #{vae_forward.10} parent=0 // pred_fallthru
    _
  // Predicated region
  $region34: #{vae_forward.10} parent=0 // pred_check
    _
  $region35: #{vae_forward.10} parent=0 // pred_check_branch
    %476 = sbr.rel (0) target = $region37
  $region36: #{vae_forward.10} parent=0 // pred_region
    _
  $region37: #{vae_forward.10} parent=0 // pred_fallthru
    _
  // Predicated region
  $region38: #{vae_forward.10} parent=0 // pred_check
    _
  $region39: #{vae_forward.10} parent=0 // pred_check_branch
    %478 = sbr.rel (0) target = $region41
  $region40: #{vae_forward.10} parent=0 // pred_region
    _
  $region41: #{vae_forward.10} parent=0 // pred_fallthru
    _

// kernel: vae_forward.9
$region0: #{vae_forward.9}
  #allocation0 [shape = 'u32[]', space=smem, size = 0x4, offset = 0x4, fixed_abs, tag = 'smem constant byte address 0x4 - core index']
  #allocation1 [shape = 'u32[72,128]{1,0:T(1,128)}', space=vmem, size = 0x9000, scoped, tag = 'internal scratch']
  %s0 = inlined_call_operand.vmem [shape: bf16[2,10,256], index: 0, kind: input, shape index: {}]
  %s1 = inlined_call_operand.vmem [shape: bf16[4,256,128], index: 1, kind: input, shape index: {}]
  %s2 = inlined_call_operand.vmem [shape: f32[1,128], index: 2, kind: input, shape index: {}]
  %s3 = inlined_call_operand.vmem [shape: bf16[2,6,128], index: 3, kind: output, shape index: {}]
  %s4 = sld [smem:[#allocation0]]
  $region45: #{vae_forward.9} parent=0
    _
  %s6 = ssub.s32 1, %s4
  %s7 = scalar_select 0, %s6, %s4
  loop: start=0, step=1, limit=4
  $region2: #{vae_forward.9} parent=0 // loop_pre_header
    _
  $region3: #{vae_forward.9} parent=0 // loop_header
    %s9 = sphi 0, %s13
    %p10 = scmp.ge.s32.totalorder %s9, 4
    %s19 = sphi 0, %s21
    %s22 = sphi 0, %s19
    %s23 = sphi 0, %s22
    %s39 = sphi 0, %s23
    %s43 = sphi 0, %s43
    %s45 = sphi 0, %s43
    %s46 = sphi 0, %s45
    %s60 = sphi 0, %s46
    %s64 = sphi 0, %s64
    %s66 = sphi 0, %s64
    %s67 = sphi 0, %s66
    %s81 = sphi 0, %s67
    %s87 = sphi 0, %s89
    %s90 = sphi 0, %s87
    %s91 = sphi 0, %s90
    %s107 = sphi 0, %s91
  $region4: #{vae_forward.9} parent=0 // loop_header_branch
    %12 = sbr.rel (%p10) target = $region8
  $region5: #{vae_forward.9} parent=0 // loop_body
    %s14 = ssub.s32 %s9, 1
    %s15 = ssub.s32 %s9, 2
    %s16 = sadd.s32 %s9, 1
    %s17 = ssub.s32 %s9, %s16
    %p18 = scmp.eq.s32.totalorder %s17, 0
    %s20 = sadd.s32 %s19, 1
    %s21 = scalar_select %p18, %s19, %s20
    %p24 = pneg %p18
    %p25 = scmp.eq.s32.totalorder %s9, 1
    %p26 = por %p24, %p25
    %p27 = scmp.ne.s32.totalorder %s19, %s22
    %p28 = scmp.eq.s32.totalorder %s9, 0
    %p29 = por %p27, %p28
    %p30 = scmp.ne.s32.totalorder %s19, %s22
    %p31 = scmp.eq.s32.totalorder %s14, 1
    %p32 = por %p30, %p31
    %p33 = scmp.ne.s32.totalorder %s22, %s23
    %p34 = scmp.eq.s32.totalorder %s14, 0
    %p35 = por %p33, %p34
    %p36 = scmp.ne.s32.totalorder %s22, %s23
    %p37 = scmp.eq.s32.totalorder %s15, 1
    %p38 = por %p36, %p37
    %p40 = scmp.ne.s32.totalorder %s23, %s39
    %p41 = scmp.eq.s32.totalorder %s15, 0
    %p42 = por %p40, %p41
    %s44 = sadd.s32 %s43, 1
    %p47 = scmp.eq.s32.totalorder %s9, 1
    %p48 = scmp.ne.s32.totalorder %s43, %s45
    %p49 = scmp.eq.s32.totalorder %s9, 0
    %p50 = por %p48, %p49
    %p51 = scmp.ne.s32.totalorder %s43, %s45
    %p52 = scmp.eq.s32.totalorder %s14, 1
    %p53 = por %p51, %p52
    %p54 = scmp.ne.s32.totalorder %s45, %s46
    %p55 = scmp.eq.s32.totalorder %s14, 0
    %p56 = por %p54, %p55
    %p57 = scmp.ne.s32.totalorder %s45, %s46
    %p58 = scmp.eq.s32.totalorder %s15, 1
    %p59 = por %p57, %p58
    %p61 = scmp.ne.s32.totalorder %s46, %s60
    %p62 = scmp.eq.s32.totalorder %s15, 0
    %p63 = por %p61, %p62
    %s65 = sadd.s32 %s64, 1
    %p68 = scmp.eq.s32.totalorder %s9, 1
    %p69 = scmp.ne.s32.totalorder %s64, %s66
    %p70 = scmp.eq.s32.totalorder %s9, 0
    %p71 = por %p69, %p70
    %p72 = scmp.ne.s32.totalorder %s64, %s66
    %p73 = scmp.eq.s32.totalorder %s14, 1
    %p74 = por %p72, %p73
    %p75 = scmp.ne.s32.totalorder %s66, %s67
    %p76 = scmp.eq.s32.totalorder %s14, 0
    %p77 = por %p75, %p76
    %p78 = scmp.ne.s32.totalorder %s66, %s67
    %p79 = scmp.eq.s32.totalorder %s15, 1
    %p80 = por %p78, %p79
    %p82 = scmp.ne.s32.totalorder %s67, %s81
    %p83 = scmp.eq.s32.totalorder %s15, 0
    %p84 = por %p82, %p83
    %s85 = ssub.s32 %s9, %s16
    %p86 = scmp.eq.s32.totalorder %s85, 0
    %s88 = sadd.s32 %s87, 1
    %s89 = scalar_select %p86, %s87, %s88
    %p92 = pneg %p86
    %p93 = scmp.eq.s32.totalorder %s9, 1
    %p94 = por %p92, %p93
    %p95 = scmp.ne.s32.totalorder %s87, %s90
    %p96 = scmp.eq.s32.totalorder %s9, 0
    %p97 = por %p95, %p96
    %p98 = scmp.ne.s32.totalorder %s87, %s90
    %p99 = scmp.eq.s32.totalorder %s14, 1
    %p100 = por %p98, %p99
    %p101 = scmp.ne.s32.totalorder %s90, %s91
    %p102 = scmp.eq.s32.totalorder %s14, 0
    %p103 = por %p101, %p102
    %p104 = scmp.ne.s32.totalorder %s90, %s91
    %p105 = scmp.eq.s32.totalorder %s15, 1
    %p106 = por %p104, %p105
    %p108 = scmp.ne.s32.totalorder %s91, %s107
    %p109 = scmp.eq.s32.totalorder %s15, 0
    %p110 = por %p108, %p109
    %p111 = scmp.le.s32.totalorder 1, %s9
    %p112 = scmp.lt.s32.totalorder %s9, 3
    %p113 = pnand %p111, %p112
    %p114 = pneg %p113
    // Predicated region
    $region9: #{vae_forward.9} parent=5 // pred_check
      _
    $region10: #{vae_forward.9} parent=5 // pred_check_branch
      %116 = sbr.rel (%p113) target = $region12
    $region11: #{vae_forward.9} parent=5 // pred_region
      %s117 = ssub.s32 %s9, 1
      // Predicated region
      $region13: #{vae_forward.9} parent=11 // pred_check
        %p118 = pneg %p56
      $region14: #{vae_forward.9} parent=11 // pred_check_branch
        %120 = sbr.rel (%p118) target = $region16
      $region15: #{vae_forward.9} parent=11 // pred_region
        _
      $region16: #{vae_forward.9} parent=11 // pred_fallthru
        _
      // Predicated region
      $region17: #{vae_forward.9} parent=11 // pred_check
        %p121 = pneg %p77
      $region18: #{vae_forward.9} parent=11 // pred_check_branch
        %123 = sbr.rel (%p121) target = $region20
      $region19: #{vae_forward.9} parent=11 // pred_region
        _
      $region20: #{vae_forward.9} parent=11 // pred_fallthru
        _
    $region12: #{vae_forward.9} parent=5 // pred_fallthru
      _
    %p124 = scmp.lt.s32.totalorder %s9, 2
    // Predicated region
    $region21: #{vae_forward.9} parent=5 // pred_check
      %p125 = pneg %p124
    $region22: #{vae_forward.9} parent=5 // pred_check_branch
      %127 = sbr.rel (%p125) target = $region24
    $region23: #{vae_forward.9} parent=5 // pred_region
      // Predicated region
      $region25: #{vae_forward.9} parent=23 // pred_check
        %p128 = pneg %p29
      $region26: #{vae_forward.9} parent=23 // pred_check_branch
        %130 = sbr.rel (%p128) target = $region28
      $region27: #{vae_forward.9} parent=23 // pred_region
        %p131 = scmp.lt.s32.totalorder %s9, 1
        %s132 = scalar_select %p131, %s9, 1
        %s133 = smul.addr %s132, 4
        %s134 = smul.addr %s133, 4
        %s135 = scalar_lea.vmem %s0, %s134
      $region28: #{vae_forward.9} parent=23 // pred_fallthru
        _
    $region24: #{vae_forward.9} parent=5 // pred_fallthru
      _
    %p136 = scmp.le.s32.totalorder 1, %s9
    %p137 = scmp.lt.s32.totalorder %s9, 3
    %p138 = pnand %p136, %p137
    %p139 = pneg %p138
    // Predicated region
    $region29: #{vae_forward.9} parent=5 // pred_check
      _
    $region30: #{vae_forward.9} parent=5 // pred_check_branch
      %141 = sbr.rel (%p138) target = $region32
    $region31: #{vae_forward.9} parent=5 // pred_region
      %s142 = ssub.s32 %s9, 1
      %p143 = scmp.lt.s32.totalorder %s14, 1
      %s144 = scalar_select %p143, %s14, 1
      %s145 = smul.addr %s144, 4
      %s146 = smul.addr %s145, 4
      %s147 = scalar_lea.vmem %s0, %s146
      %p148 = pneg %p35
      %p149 = pneg %p32
      %p150 = pneg %p56
      %p151 = pneg %p53
      %p152 = pneg %p77
      %p153 = pneg %p74
      %p154 = pneg %p103
      %p155 = pneg %p100
      %p156 = scmp.lt.s32.totalorder %s14, 1
      %s157 = scalar_select %p156, %s14, 1
      %s158 = smul.addr %s157, 4
      %s159 = scalar_lea.vmem %s3, %s158
      %p160 = scmp.lt.s32.totalorder %s14, 1
      %s161 = scalar_select %p160, %s14, 1
      %s162 = smul.addr %s161, 4
      %s163 = smul.addr %s162, 4
      %s164 = scalar_lea.vmem %s0, %s163
      %p165 = scmp.lt.s32.totalorder %s14, 1
      %s166 = scalar_select %p165, %s14, 1
      %s167 = smul.addr %s166, 4
      %s168 = scalar_lea.vmem %s3, %s167
      %v169 = vld [vmem:[%s164] sm:$0x77]
      %v170 = vld [vmem:[%s1] sm:$0xf]
      %v171 = vld [vmem:[%s1 + $0x4] sm:$0xf]
      %v172 = vld [vmem:[%s1 + $0x8] sm:$0xf]
      %v173 = vld [vmem:[%s1 + $0xc] sm:$0xf]
      %v174 = vld [vmem:[%s1 + $0x10] sm:$0xf]
      %v175 = vld [vmem:[%s1 + $0x14] sm:$0xf]
      %v176 = vld [vmem:[%s1 + $0x18] sm:$0xf]
      %v177 = vld [vmem:[%s1 + $0x1c] sm:$0xf]
      %v178 = vld [vmem:[%s1 + $0x20] sm:$0xf]
      %v179 = vld [vmem:[%s1 + $0x24] sm:$0xf]
      %v180 = vld [vmem:[%s1 + $0x28] sm:$0xf]
      %v181 = vld [vmem:[%s1 + $0x2c] sm:$0xf]
      %v182 = vld [vmem:[%s1 + $0x30] sm:$0xf]
      %v183 = vld [vmem:[%s1 + $0x34] sm:$0xf]
      %v184 = vld [vmem:[%s1 + $0x38] sm:$0xf]
      %v185 = vld [vmem:[%s1 + $0x3c] sm:$0xf]
      %v186 = vld [vmem:[%s1 + $0x40] sm:$0xf]
      %v187 = vld [vmem:[%s1 + $0x44] sm:$0xf]
      %v188 = vld [vmem:[%s1 + $0x48] sm:$0xf]
      %v189 = vld [vmem:[%s1 + $0x4c] sm:$0xf]
      %v190 = vld [vmem:[%s1 + $0x50] sm:$0xf]
      %v191 = vld [vmem:[%s1 + $0x54] sm:$0xf]
      %v192 = vld [vmem:[%s1 + $0x58] sm:$0xf]
      %v193 = vld [vmem:[%s1 + $0x5c] sm:$0xf]
      %v194 = vld [vmem:[%s1 + $0x60] sm:$0xf]
      %v195 = vld [vmem:[%s1 + $0x64] sm:$0xf]
      %v196 = vld [vmem:[%s1 + $0x68] sm:$0xf]
      %v197 = vld [vmem:[%s1 + $0x6c] sm:$0xf]
      %v198 = vld [vmem:[%s1 + $0x70] sm:$0xf]
      %v199 = vld [vmem:[%s1 + $0x74] sm:$0xf]
      %v200 = vld [vmem:[%s1 + $0x78] sm:$0xf]
      %v201 = vld [vmem:[%s1 + $0x7c] sm:$0xf]
      %v202 = vld [vmem:[%s164] sm:$0xff]
      %s203 = scalar_lea.vmem %s1, 128
      %v204 = vld [vmem:[%s203] sm:$0xf]
      %v205 = vld [vmem:[%s203 + $0x4] sm:$0xf]
      %v206 = vld [vmem:[%s203 + $0x8] sm:$0xf]
      %v207 = vld [vmem:[%s203 + $0xc] sm:$0xf]
      %v208 = vld [vmem:[%s203 + $0x10] sm:$0xf]
      %v209 = vld [vmem:[%s203 + $0x14] sm:$0xf]
      %v210 = vld [vmem:[%s203 + $0x18] sm:$0xf]
      %v211 = vld [vmem:[%s203 + $0x1c] sm:$0xf]
      %v212 = vld [vmem:[%s203 + $0x20] sm:$0xf]
      %v213 = vld [vmem:[%s203 + $0x24] sm:$0xf]
      %v214 = vld [vmem:[%s203 + $0x28] sm:$0xf]
      %v215 = vld [vmem:[%s203 + $0x2c] sm:$0xf]
      %v216 = vld [vmem:[%s203 + $0x30] sm:$0xf]
      %v217 = vld [vmem:[%s203 + $0x34] sm:$0xf]
      %v218 = vld [vmem:[%s203 + $0x38] sm:$0xf]
      %v219 = vld [vmem:[%s203 + $0x3c] sm:$0xf]
      %v220 = vld [vmem:[%s203 + $0x40] sm:$0xf]
      %v221 = vld [vmem:[%s203 + $0x44] sm:$0xf]
      %v222 = vld [vmem:[%s203 + $0x48] sm:$0xf]
      %v223 = vld [vmem:[%s203 + $0x4c] sm:$0xf]
      %v224 = vld [vmem:[%s203 + $0x50] sm:$0xf]
      %v225 = vld [vmem:[%s203 + $0x54] sm:$0xf]
      %v226 = vld [vmem:[%s203 + $0x58] sm:$0xf]
      %v227 = vld [vmem:[%s203 + $0x5c] sm:$0xf]
      %v228 = vld [vmem:[%s203 + $0x60] sm:$0xf]
      %v229 = vld [vmem:[%s203 + $0x64] sm:$0xf]
      %v230 = vld [vmem:[%s203 + $0x68] sm:$0xf]
      %v231 = vld [vmem:[%s203 + $0x6c] sm:$0xf]
      %v232 = vld [vmem:[%s203 + $0x70] sm:$0xf]
      %v233 = vld [vmem:[%s203 + $0x74] sm:$0xf]
      %v234 = vld [vmem:[%s203 + $0x78] sm:$0xf]
      %v235 = vld [vmem:[%s203 + $0x7c] sm:$0xf]
      %v237 = vunpack.c.l.b16 %v202
      %v238 = vunpack.c.h.b16 %v202
      %v239 = vpack.c.b16 %v237, %v237
      %v240 = vpack.c.b16 %v238, %v238
      %v242 = vshrl.u32 %v239, 16
      %v244 = vshll.u32 %v239, 16
      %v246 = vrot.slane %v244, 1
      %v247 = vor.u32 %v242, %v246
      %v249 = vshrl.u32 %v240, 16
      %v251 = vshll.u32 %v240, 16
      %v253 = vrot.slane %v251, 1
      %v254 = vor.u32 %v249, %v253
      %v289 = vunpack.c.l.b16 %v204
      %v290 = vunpack.c.l.b16 %v205
      %v291 = vunpack.c.l.b16 %v206
      %v292 = vunpack.c.l.b16 %v207
      %v293 = vunpack.c.l.b16 %v208
      %v294 = vunpack.c.l.b16 %v209
      %v295 = vunpack.c.l.b16 %v210
      %v296 = vunpack.c.l.b16 %v211
      %v297 = vunpack.c.l.b16 %v212
      %v298 = vunpack.c.l.b16 %v213
      %v299 = vunpack.c.l.b16 %v214
      %v300 = vunpack.c.l.b16 %v215
      %v301 = vunpack.c.l.b16 %v216
      %v302 = vunpack.c.l.b16 %v217
      %v303 = vunpack.c.l.b16 %v218
      %v304 = vunpack.c.l.b16 %v219
      %v305 = vunpack.c.l.b16 %v220
      %v306 = vunpack.c.l.b16 %v221
      %v307 = vunpack.c.l.b16 %v222
      %v308 = vunpack.c.l.b16 %v223
      %v309 = vunpack.c.l.b16 %v224
      %v310 = vunpack.c.l.b16 %v225
      %v311 = vunpack.c.l.b16 %v226
      %v312 = vunpack.c.l.b16 %v227
      %v313 = vunpack.c.l.b16 %v228
      %v314 = vunpack.c.l.b16 %v229
      %v315 = vunpack.c.l.b16 %v230
      %v316 = vunpack.c.l.b16 %v231
      %v317 = vunpack.c.l.b16 %v232
      %v318 = vunpack.c.l.b16 %v233
      %v319 = vunpack.c.l.b16 %v234
      %v320 = vunpack.c.l.b16 %v235
      %v321 = vpack.c.b16 %v290, %v289
      %v322 = vpack.c.b16 %v292, %v291
      %v323 = vpack.c.b16 %v294, %v293
      %v324 = vpack.c.b16 %v296, %v295
      %v325 = vpack.c.b16 %v298, %v297
      %v326 = vpack.c.b16 %v300, %v299
      %v327 = vpack.c.b16 %v302, %v301
      %v328 = vpack.c.b16 %v304, %v303
      %v329 = vpack.c.b16 %v306, %v305
      %v330 = vpack.c.b16 %v308, %v307
      %v331 = vpack.c.b16 %v310, %v309
      %v332 = vpack.c.b16 %v312, %v311
      %v333 = vpack.c.b16 %v314, %v313
      %v334 = vpack.c.b16 %v316, %v315
      %v335 = vpack.c.b16 %v318, %v317
      %v336 = vpack.c.b16 %v320, %v319
      %353 = vmatpush.bf16.msra.mxu0 %v328
      %354 = vmatpush.bf16.msra.mxu0 %v327
      %355 = vmatpush.bf16.msra.mxu0 %v326
      %356 = vmatpush.bf16.msra.mxu0 %v325
      %357 = vmatpush.bf16.msra.mxu0 %v324
      %358 = vmatpush.bf16.msra.mxu0 %v323
      %359 = vmatpush.bf16.msra.mxu0 %v322
      %360 = vmatpush.bf16.msra.mxu0 %v321
      %361 = vmatmul.bf16.gmra.mxu0 %v247
      %v362 = vpop.f32.mrf.mxu0
      %v363 = vadd.f32 0.0, %v362
      %v364 = vpop.f32.mrf.mxu0
      %365 = vdwg.mxu0
      %366 = vmatpush.bf16.msra.mxu0 %v336
      %367 = vmatpush.bf16.msra.mxu0 %v335
      %368 = vmatpush.bf16.msra.mxu0 %v334
      %369 = vmatpush.bf16.msra.mxu0 %v333
      %370 = vmatpush.bf16.msra.mxu0 %v332
      %371 = vmatpush.bf16.msra.mxu0 %v331
      %372 = vmatpush.bf16.msra.mxu0 %v330
      %373 = vmatpush.bf16.msra.mxu0 %v329
      %374 = vmatmul.bf16.gmra.mxu0 %v254
      %v375 = vpop.f32.mrf.mxu0
      %v376 = vadd.f32 %v363, %v375
      %v377 = vpop.f32.mrf.mxu0
      %378 = vdwg.mxu0
      %v380 = vunpack.c.l.b16 %v169
      %v381 = vunpack.c.h.b16 %v169
      %v382 = vpack.c.b16 %v380, %v380
      %v383 = vpack.c.b16 %v381, %v381
      %v418 = vunpack.c.l.b16 %v170
      %v419 = vunpack.c.l.b16 %v171
      %v420 = vunpack.c.l.b16 %v172
      %v421 = vunpack.c.l.b16 %v173
      %v422 = vunpack.c.l.b16 %v174
      %v423 = vunpack.c.l.b16 %v175
      %v424 = vunpack.c.l.b16 %v176
      %v425 = vunpack.c.l.b16 %v177
      %v426 = vunpack.c.l.b16 %v178
      %v427 = vunpack.c.l.b16 %v179
      %v428 = vunpack.c.l.b16 %v180
      %v429 = vunpack.c.l.b16 %v181
      %v430 = vunpack.c.l.b16 %v182
      %v431 = vunpack.c.l.b16 %v183
      %v432 = vunpack.c.l.b16 %v184
      %v433 = vunpack.c.l.b16 %v185
      %v434 = vunpack.c.l.b16 %v186
      %v435 = vunpack.c.l.b16 %v187
      %v436 = vunpack.c.l.b16 %v188
      %v437 = vunpack.c.l.b16 %v189
      %v438 = vunpack.c.l.b16 %v190
      %v439 = vunpack.c.l.b16 %v191
      %v440 = vunpack.c.l.b16 %v192
      %v441 = vunpack.c.l.b16 %v193
      %v442 = vunpack.c.l.b16 %v194
      %v443 = vunpack.c.l.b16 %v195
      %v444 = vunpack.c.l.b16 %v196
      %v445 = vunpack.c.l.b16 %v197
      %v446 = vunpack.c.l.b16 %v198
      %v447 = vunpack.c.l.b16 %v199
      %v448 = vunpack.c.l.b16 %v200
      %v449 = vunpack.c.l.b16 %v201
      %v450 = vpack.c.b16 %v419, %v418
      %v451 = vpack.c.b16 %v421, %v420
      %v452 = vpack.c.b16 %v423, %v422
      %v453 = vpack.c.b16 %v425, %v424
      %v454 = vpack.c.b16 %v427, %v426
      %v455 = vpack.c.b16 %v429, %v428
      %v456 = vpack.c.b16 %v431, %v430
      %v457 = vpack.c.b16 %v433, %v432
      %v458 = vpack.c.b16 %v435, %v434
      %v459 = vpack.c.b16 %v437, %v436
      %v460 = vpack.c.b16 %v439, %v438
      %v461 = vpack.c.b16 %v441, %v440
      %v462 = vpack.c.b16 %v443, %v442
      %v463 = vpack.c.b16 %v445, %v444
      %v464 = vpack.c.b16 %v447, %v446
      %v465 = vpack.c.b16 %v449, %v448
      %482 = vmatpush.bf16.msra.mxu0 %v457
      %483 = vmatpush.bf16.msra.mxu0 %v456
      %484 = vmatpush.bf16.msra.mxu0 %v455
      %485 = vmatpush.bf16.msra.mxu0 %v454
      %486 = vmatpush.bf16.msra.mxu0 %v453
      %487 = vmatpush.bf16.msra.mxu0 %v452
      %488 = vmatpush.bf16.msra.mxu0 %v451
      %489 = vmatpush.bf16.msra.mxu0 %v450
      %490 = vmatmul.bf16.gmra.mxu0 %v382
      %v491 = vpop.f32.mrf.mxu0
      %v492 = vadd.f32 %v376, %v491
      %v493 = vpop.f32.mrf.mxu0
      %494 = vdwg.mxu0
      %495 = vmatpush.bf16.msra.mxu0 %v465
      %496 = vmatpush.bf16.msra.mxu0 %v464
      %497 = vmatpush.bf16.msra.mxu0 %v463
      %498 = vmatpush.bf16.msra.mxu0 %v462
      %499 = vmatpush.bf16.msra.mxu0 %v461
      %500 = vmatpush.bf16.msra.mxu0 %v460
      %501 = vmatpush.bf16.msra.mxu0 %v459
      %502 = vmatpush.bf16.msra.mxu0 %v458
      %503 = vmatmul.bf16.gmra.mxu0 %v383
      %v504 = vpop.f32.mrf.mxu0
      %v505 = vadd.f32 %v492, %v504
      %v506 = vpop.f32.mrf.mxu0
      %507 = vdwg.mxu0
      %v508 = vld [vmem:[%s164] sm:$0xee]
      %v509 = vld [vmem:[%s164 + $0x8] sm:$0x11]
      %s510 = scalar_lea.vmem %s1, 256
      %v511 = vld [vmem:[%s510] sm:$0xf]
      %v512 = vld [vmem:[%s510 + $0x4] sm:$0xf]
      %v513 = vld [vmem:[%s510 + $0x8] sm:$0xf]
      %v514 = vld [vmem:[%s510 + $0xc] sm:$0xf]
      %v515 = vld [vmem:[%s510 + $0x10] sm:$0xf]
      %v516 = vld [vmem:[%s510 + $0x14] sm:$0xf]
      %v517 = vld [vmem:[%s510 + $0x18] sm:$0xf]
      %v518 = vld [vmem:[%s510 + $0x1c] sm:$0xf]
      %v519 = vld [vmem:[%s510 + $0x20] sm:$0xf]
      %v520 = vld [vmem:[%s510 + $0x24] sm:$0xf]
      %v521 = vld [vmem:[%s510 + $0x28] sm:$0xf]
      %v522 = vld [vmem:[%s510 + $0x2c] sm:$0xf]
      %v523 = vld [vmem:[%s510 + $0x30] sm:$0xf]
      %v524 = vld [vmem:[%s510 + $0x34] sm:$0xf]
      %v525 = vld [vmem:[%s510 + $0x38] sm:$0xf]
      %v526 = vld [vmem:[%s510 + $0x3c] sm:$0xf]
      %v527 = vld [vmem:[%s510 + $0x40] sm:$0xf]
      %v528 = vld [vmem:[%s510 + $0x44] sm:$0xf]
      %v529 = vld [vmem:[%s510 + $0x48] sm:$0xf]
      %v530 = vld [vmem:[%s510 + $0x4c] sm:$0xf]
      %v531 = vld [vmem:[%s510 + $0x50] sm:$0xf]
      %v532 = vld [vmem:[%s510 + $0x54] sm:$0xf]
      %v533 = vld [vmem:[%s510 + $0x58] sm:$0xf]
      %v534 = vld [vmem:[%s510 + $0x5c] sm:$0xf]
      %v535 = vld [vmem:[%s510 + $0x60] sm:$0xf]
      %v536 = vld [vmem:[%s510 + $0x64] sm:$0xf]
      %v537 = vld [vmem:[%s510 + $0x68] sm:$0xf]
      %v538 = vld [vmem:[%s510 + $0x6c] sm:$0xf]
      %v539 = vld [vmem:[%s510 + $0x70] sm:$0xf]
      %v540 = vld [vmem:[%s510 + $0x74] sm:$0xf]
      %v541 = vld [vmem:[%s510 + $0x78] sm:$0xf]
      %v542 = vld [vmem:[%s510 + $0x7c] sm:$0xf]
      %v545 = vunpack.c.l.b16 %v508
      %v546 = vunpack.c.h.b16 %v508
      %v547 = vunpack.c.l.b16 %v509
      %v548 = vunpack.c.h.b16 %v509
      %v549 = vpack.c.b16 %v547, %v545
      %v550 = vpack.c.b16 %v548, %v546
      %v552 = vshrl.u32 %v549, 16
      %v554 = vrot.slane %v552, 1
      %v555 = vshll.u32 %v549, 16
      %v557 = vrot.slane %v555, 2
      %v558 = vor.u32 %v554, %v557
      %v560 = vshrl.u32 %v550, 16
      %v562 = vrot.slane %v560, 1
      %v563 = vshll.u32 %v550, 16
      %v565 = vrot.slane %v563, 2
      %v566 = vor.u32 %v562, %v565
      %v601 = vunpack.c.l.b16 %v511
      %v602 = vunpack.c.l.b16 %v512
      %v603 = vunpack.c.l.b16 %v513
      %v604 = vunpack.c.l.b16 %v514
      %v605 = vunpack.c.l.b16 %v515
      %v606 = vunpack.c.l.b16 %v516
      %v607 = vunpack.c.l.b16 %v517
      %v608 = vunpack.c.l.b16 %v518
      %v609 = vunpack.c.l.b16 %v519
      %v610 = vunpack.c.l.b16 %v520
      %v611 = vunpack.c.l.b16 %v521
      %v612 = vunpack.c.l.b16 %v522
      %v613 = vunpack.c.l.b16 %v523
      %v614 = vunpack.c.l.b16 %v524
      %v615 = vunpack.c.l.b16 %v525
      %v616 = vunpack.c.l.b16 %v526
      %v617 = vunpack.c.l.b16 %v527
      %v618 = vunpack.c.l.b16 %v528
      %v619 = vunpack.c.l.b16 %v529
      %v620 = vunpack.c.l.b16 %v530
      %v621 = vunpack.c.l.b16 %v531
      %v622 = vunpack.c.l.b16 %v532
      %v623 = vunpack.c.l.b16 %v533
      %v624 = vunpack.c.l.b16 %v534
      %v625 = vunpack.c.l.b16 %v535
      %v626 = vunpack.c.l.b16 %v536
      %v627 = vunpack.c.l.b16 %v537
      %v628 = vunpack.c.l.b16 %v538
      %v629 = vunpack.c.l.b16 %v539
      %v630 = vunpack.c.l.b16 %v540
      %v631 = vunpack.c.l.b16 %v541
      %v632 = vunpack.c.l.b16 %v542
      %v633 = vpack.c.b16 %v602, %v601
      %v634 = vpack.c.b16 %v604, %v603
      %v635 = vpack.c.b16 %v606, %v605
      %v636 = vpack.c.b16 %v608, %v607
      %v637 = vpack.c.b16 %v610, %v609
      %v638 = vpack.c.b16 %v612, %v611
      %v639 = vpack.c.b16 %v614, %v613
      %v640 = vpack.c.b16 %v616, %v615
      %v641 = vpack.c.b16 %v618, %v617
      %v642 = vpack.c.b16 %v620, %v619
      %v643 = vpack.c.b16 %v622, %v621
      %v644 = vpack.c.b16 %v624, %v623
      %v645 = vpack.c.b16 %v626, %v625
      %v646 = vpack.c.b16 %v628, %v627
      %v647 = vpack.c.b16 %v630, %v629
      %v648 = vpack.c.b16 %v632, %v631
      %665 = vmatpush.bf16.msra.mxu0 %v640
      %666 = vmatpush.bf16.msra.mxu0 %v639
      %667 = vmatpush.bf16.msra.mxu0 %v638
      %668 = vmatpush.bf16.msra.mxu0 %v637
      %669 = vmatpush.bf16.msra.mxu0 %v636
      %670 = vmatpush.bf16.msra.mxu0 %v635
      %671 = vmatpush.bf16.msra.mxu0 %v634
      %672 = vmatpush.bf16.msra.mxu0 %v633
      %673 = vmatmul.bf16.gmra.mxu0 %v558
      %v674 = vpop.f32.mrf.mxu0
      %v675 = vadd.f32 0.0, %v674
      %v676 = vpop.f32.mrf.mxu0
      %677 = vdwg.mxu0
      %678 = vmatpush.bf16.msra.mxu0 %v648
      %679 = vmatpush.bf16.msra.mxu0 %v647
      %680 = vmatpush.bf16.msra.mxu0 %v646
      %681 = vmatpush.bf16.msra.mxu0 %v645
      %682 = vmatpush.bf16.msra.mxu0 %v644
      %683 = vmatpush.bf16.msra.mxu0 %v643
      %684 = vmatpush.bf16.msra.mxu0 %v642
      %685 = vmatpush.bf16.msra.mxu0 %v641
      %686 = vmatmul.bf16.gmra.mxu0 %v566
      %v687 = vpop.f32.mrf.mxu0
      %v688 = vadd.f32 %v675, %v687
      %v689 = vpop.f32.mrf.mxu0
      %690 = vdwg.mxu0
      %v691 = vadd.f32 %v505, %v688
      %v692 = vld [vmem:[%s164] sm:$0xcc]
      %s693 = scalar_lea.vmem %s1, 384
      %v694 = vld [vmem:[%s693] sm:$0xf]
      %v695 = vld [vmem:[%s693 + $0x4] sm:$0xf]
      %v696 = vld [vmem:[%s693 + $0x8] sm:$0xf]
      %v697 = vld [vmem:[%s693 + $0xc] sm:$0xf]
      %v698 = vld [vmem:[%s693 + $0x10] sm:$0xf]
      %v699 = vld [vmem:[%s693 + $0x14] sm:$0xf]
      %v700 = vld [vmem:[%s693 + $0x18] sm:$0xf]
      %v701 = vld [vmem:[%s693 + $0x1c] sm:$0xf]
      %v702 = vld [vmem:[%s693 + $0x20] sm:$0xf]
      %v703 = vld [vmem:[%s693 + $0x24] sm:$0xf]
      %v704 = vld [vmem:[%s693 + $0x28] sm:$0xf]
      %v705 = vld [vmem:[%s693 + $0x2c] sm:$0xf]
      %v706 = vld [vmem:[%s693 + $0x30] sm:$0xf]
      %v707 = vld [vmem:[%s693 + $0x34] sm:$0xf]
      %v708 = vld [vmem:[%s693 + $0x38] sm:$0xf]
      %v709 = vld [vmem:[%s693 + $0x3c] sm:$0xf]
      %v710 = vld [vmem:[%s693 + $0x40] sm:$0xf]
      %v711 = vld [vmem:[%s693 + $0x44] sm:$0xf]
      %v712 = vld [vmem:[%s693 + $0x48] sm:$0xf]
      %v713 = vld [vmem:[%s693 + $0x4c] sm:$0xf]
      %v714 = vld [vmem:[%s693 + $0x50] sm:$0xf]
      %v715 = vld [vmem:[%s693 + $0x54] sm:$0xf]
      %v716 = vld [vmem:[%s693 + $0x58] sm:$0xf]
      %v717 = vld [vmem:[%s693 + $0x5c] sm:$0xf]
      %v718 = vld [vmem:[%s693 + $0x60] sm:$0xf]
      %v719 = vld [vmem:[%s693 + $0x64] sm:$0xf]
      %v720 = vld [vmem:[%s693 + $0x68] sm:$0xf]
      %v721 = vld [vmem:[%s693 + $0x6c] sm:$0xf]
      %v722 = vld [vmem:[%s693 + $0x70] sm:$0xf]
      %v723 = vld [vmem:[%s693 + $0x74] sm:$0xf]
      %v724 = vld [vmem:[%s693 + $0x78] sm:$0xf]
      %v725 = vld [vmem:[%s693 + $0x7c] sm:$0xf]
      %v727 = vunpack.c.l.b16 %v692
      %v728 = vunpack.c.h.b16 %v692
      %v729 = vpack.c.b16 %v547, %v727
      %v730 = vpack.c.b16 %v548, %v728
      %v731 = vrot.slane %v729, 2
      %v732 = vrot.slane %v730, 2
      %v767 = vunpack.c.l.b16 %v694
      %v768 = vunpack.c.l.b16 %v695
      %v769 = vunpack.c.l.b16 %v696
      %v770 = vunpack.c.l.b16 %v697
      %v771 = vunpack.c.l.b16 %v698
      %v772 = vunpack.c.l.b16 %v699
      %v773 = vunpack.c.l.b16 %v700
      %v774 = vunpack.c.l.b16 %v701
      %v775 = vunpack.c.l.b16 %v702
      %v776 = vunpack.c.l.b16 %v703
      %v777 = vunpack.c.l.b16 %v704
      %v778 = vunpack.c.l.b16 %v705
      %v779 = vunpack.c.l.b16 %v706
      %v780 = vunpack.c.l.b16 %v707
      %v781 = vunpack.c.l.b16 %v708
      %v782 = vunpack.c.l.b16 %v709
      %v783 = vunpack.c.l.b16 %v710
      %v784 = vunpack.c.l.b16 %v711
      %v785 = vunpack.c.l.b16 %v712
      %v786 = vunpack.c.l.b16 %v713
      %v787 = vunpack.c.l.b16 %v714
      %v788 = vunpack.c.l.b16 %v715
      %v789 = vunpack.c.l.b16 %v716
      %v790 = vunpack.c.l.b16 %v717
      %v791 = vunpack.c.l.b16 %v718
      %v792 = vunpack.c.l.b16 %v719
      %v793 = vunpack.c.l.b16 %v720
      %v794 = vunpack.c.l.b16 %v721
      %v795 = vunpack.c.l.b16 %v722
      %v796 = vunpack.c.l.b16 %v723
      %v797 = vunpack.c.l.b16 %v724
      %v798 = vunpack.c.l.b16 %v725
      %v799 = vpack.c.b16 %v768, %v767
      %v800 = vpack.c.b16 %v770, %v769
      %v801 = vpack.c.b16 %v772, %v771
      %v802 = vpack.c.b16 %v774, %v773
      %v803 = vpack.c.b16 %v776, %v775
      %v804 = vpack.c.b16 %v778, %v777
      %v805 = vpack.c.b16 %v780, %v779
      %v806 = vpack.c.b16 %v782, %v781
      %v807 = vpack.c.b16 %v784, %v783
      %v808 = vpack.c.b16 %v786, %v785
      %v809 = vpack.c.b16 %v788, %v787
      %v810 = vpack.c.b16 %v790, %v789
      %v811 = vpack.c.b16 %v792, %v791
      %v812 = vpack.c.b16 %v794, %v793
      %v813 = vpack.c.b16 %v796, %v795
      %v814 = vpack.c.b16 %v798, %v797
      %831 = vmatpush.bf16.msra.mxu0 %v806
      %832 = vmatpush.bf16.msra.mxu0 %v805
      %833 = vmatpush.bf16.msra.mxu0 %v804
      %834 = vmatpush.bf16.msra.mxu0 %v803
      %835 = vmatpush.bf16.msra.mxu0 %v802
      %836 = vmatpush.bf16.msra.mxu0 %v801
      %837 = vmatpush.bf16.msra.mxu0 %v800
      %838 = vmatpush.bf16.msra.mxu0 %v799
      %839 = vmatmul.bf16.gmra.mxu0 %v731
      %v840 = vpop.f32.mrf.mxu0
      %v841 = vadd.f32 0.0, %v840
      %v842 = vpop.f32.mrf.mxu0
      %843 = vdwg.mxu0
      %844 = vmatpush.bf16.msra.mxu0 %v814
      %845 = vmatpush.bf16.msra.mxu0 %v813
      %846 = vmatpush.bf16.msra.mxu0 %v812
      %847 = vmatpush.bf16.msra.mxu0 %v811
      %848 = vmatpush.bf16.msra.mxu0 %v810
      %849 = vmatpush.bf16.msra.mxu0 %v809
      %850 = vmatpush.bf16.msra.mxu0 %v808
      %851 = vmatpush.bf16.msra.mxu0 %v807
      %852 = vmatmul.bf16.gmra.mxu0 %v732
      %v853 = vpop.f32.mrf.mxu0
      %v854 = vadd.f32 %v841, %v853
      %v855 = vpop.f32.mrf.mxu0
      %856 = vdwg.mxu0
      %v857 = vadd.f32 %v691, %v854
      %v858 = vld [vmem:[%s2] sm:$0x1]
      %v860 = vperm.slane %v858, 0
      %v862 = vadd.f32 %v857, %v860
      %v863 = vmax.f32 %v862, 0.0
      %v864 = vpack.c.bf16 %v863, %v863
      %865 = vst [vmem:[%s168] sm:$0x7] %v864
      %p866 = scmp.lt.s32.totalorder %s14, 1
      %s867 = scalar_select %p866, %s14, 1
      %s868 = smul.addr %s867, 4
      %s869 = scalar_lea.vmem %s3, %s868
      // Predicated region
      $region33: #{vae_forward.9} parent=31 // pred_check
        %p870 = pneg %p100
      $region34: #{vae_forward.9} parent=31 // pred_check_branch
        %872 = sbr.rel (%p870) target = $region36
      $region35: #{vae_forward.9} parent=31 // pred_region
        _
      $region36: #{vae_forward.9} parent=31 // pred_fallthru
        _
    $region32: #{vae_forward.9} parent=5 // pred_fallthru
      _
    %p873 = scmp.le.s32.totalorder 2, %s9
    // Predicated region
    $region37: #{vae_forward.9} parent=5 // pred_check
      %p874 = pneg %p873
    $region38: #{vae_forward.9} parent=5 // pred_check_branch
      %876 = sbr.rel (%p874) target = $region40
    $region39: #{vae_forward.9} parent=5 // pred_region
      %s877 = ssub.s32 %s9, 2
      // Predicated region
      $region41: #{vae_forward.9} parent=39 // pred_check
        %p878 = pneg %p106
      $region42: #{vae_forward.9} parent=39 // pred_check_branch
        %880 = sbr.rel (%p878) target = $region44
      $region43: #{vae_forward.9} parent=39 // pred_region
        %p881 = scmp.lt.s32.totalorder %s15, 1
        %s882 = scalar_select %p881, %s15, 1
        %s883 = smul.addr %s882, 4
        %s884 = scalar_lea.vmem %s3, %s883
      $region44: #{vae_forward.9} parent=39 // pred_fallthru
        _
    $region40: #{vae_forward.9} parent=5 // pred_fallthru
      _
  $region6: #{vae_forward.9} parent=0 // loop_footer
    %s13 = sadd.s32 1, %s9
  $region7: #{vae_forward.9} parent=0 // loop_footer_branch
    %8 = sbr.rel target = $region3
  $region8: #{vae_forward.9} parent=0 // loop_exit
    _

// kernel: vae_forward.11
$region0: #{vae_forward.11}
  #allocation0 [shape = 'u32[]', space=smem, size = 0x4, offset = 0x4, fixed_abs, tag = 'smem constant byte address 0x4 - core index']
  #allocation1 [shape = 'u32[72,128]{1,0:T(1,128)}', space=vmem, size = 0x9000, scoped, tag = 'internal scratch']
  %s0 = inlined_call_operand.vmem [shape: bf16[2,17,128], index: 0, kind: input, shape index: {}]
  %s1 = inlined_call_operand.vmem [shape: bf16[4,128,256], index: 1, kind: input, shape index: {}]
  %s2 = inlined_call_operand.vmem [shape: f32[1,256], index: 2, kind: input, shape index: {}]
  %s3 = inlined_call_operand.vmem [shape: bf16[2,12,256], index: 3, kind: output, shape index: {}]
  %s4 = sld [smem:[#allocation0]]
  $region45: #{vae_forward.11} parent=0
    _
  %s6 = ssub.s32 1, %s4
  %s7 = scalar_select 0, %s6, %s4
  loop: start=0, step=1, limit=4
  $region2: #{vae_forward.11} parent=0 // loop_pre_header
    _
  $region3: #{vae_forward.11} parent=0 // loop_header
    %s9 = sphi 0, %s13
    %p10 = scmp.ge.s32.totalorder %s9, 4
    %s19 = sphi 0, %s21
    %s22 = sphi 0, %s19
    %s23 = sphi 0, %s22
    %s39 = sphi 0, %s23
    %s43 = sphi 0, %s43
    %s45 = sphi 0, %s43
    %s46 = sphi 0, %s45
    %s60 = sphi 0, %s46
    %s64 = sphi 0, %s64
    %s66 = sphi 0, %s64
    %s67 = sphi 0, %s66
    %s81 = sphi 0, %s67
    %s87 = sphi 0, %s89
    %s90 = sphi 0, %s87
    %s91 = sphi 0, %s90
    %s107 = sphi 0, %s91
  $region4: #{vae_forward.11} parent=0 // loop_header_branch
    %12 = sbr.rel (%p10) target = $region8
  $region5: #{vae_forward.11} parent=0 // loop_body
    %s14 = ssub.s32 %s9, 1
    %s15 = ssub.s32 %s9, 2
    %s16 = sadd.s32 %s9, 1
    %s17 = ssub.s32 %s9, %s16
    %p18 = scmp.eq.s32.totalorder %s17, 0
    %s20 = sadd.s32 %s19, 1
    %s21 = scalar_select %p18, %s19, %s20
    %p24 = pneg %p18
    %p25 = scmp.eq.s32.totalorder %s9, 1
    %p26 = por %p24, %p25
    %p27 = scmp.ne.s32.totalorder %s19, %s22
    %p28 = scmp.eq.s32.totalorder %s9, 0
    %p29 = por %p27, %p28
    %p30 = scmp.ne.s32.totalorder %s19, %s22
    %p31 = scmp.eq.s32.totalorder %s14, 1
    %p32 = por %p30, %p31
    %p33 = scmp.ne.s32.totalorder %s22, %s23
    %p34 = scmp.eq.s32.totalorder %s14, 0
    %p35 = por %p33, %p34
    %p36 = scmp.ne.s32.totalorder %s22, %s23
    %p37 = scmp.eq.s32.totalorder %s15, 1
    %p38 = por %p36, %p37
    %p40 = scmp.ne.s32.totalorder %s23, %s39
    %p41 = scmp.eq.s32.totalorder %s15, 0
    %p42 = por %p40, %p41
    %s44 = sadd.s32 %s43, 1
    %p47 = scmp.eq.s32.totalorder %s9, 1
    %p48 = scmp.ne.s32.totalorder %s43, %s45
    %p49 = scmp.eq.s32.totalorder %s9, 0
    %p50 = por %p48, %p49
    %p51 = scmp.ne.s32.totalorder %s43, %s45
    %p52 = scmp.eq.s32.totalorder %s14, 1
    %p53 = por %p51, %p52
    %p54 = scmp.ne.s32.totalorder %s45, %s46
    %p55 = scmp.eq.s32.totalorder %s14, 0
    %p56 = por %p54, %p55
    %p57 = scmp.ne.s32.totalorder %s45, %s46
    %p58 = scmp.eq.s32.totalorder %s15, 1
    %p59 = por %p57, %p58
    %p61 = scmp.ne.s32.totalorder %s46, %s60
    %p62 = scmp.eq.s32.totalorder %s15, 0
    %p63 = por %p61, %p62
    %s65 = sadd.s32 %s64, 1
    %p68 = scmp.eq.s32.totalorder %s9, 1
    %p69 = scmp.ne.s32.totalorder %s64, %s66
    %p70 = scmp.eq.s32.totalorder %s9, 0
    %p71 = por %p69, %p70
    %p72 = scmp.ne.s32.totalorder %s64, %s66
    %p73 = scmp.eq.s32.totalorder %s14, 1
    %p74 = por %p72, %p73
    %p75 = scmp.ne.s32.totalorder %s66, %s67
    %p76 = scmp.eq.s32.totalorder %s14, 0
    %p77 = por %p75, %p76
    %p78 = scmp.ne.s32.totalorder %s66, %s67
    %p79 = scmp.eq.s32.totalorder %s15, 1
    %p80 = por %p78, %p79
    %p82 = scmp.ne.s32.totalorder %s67, %s81
    %p83 = scmp.eq.s32.totalorder %s15, 0
    %p84 = por %p82, %p83
    %s85 = ssub.s32 %s9, %s16
    %p86 = scmp.eq.s32.totalorder %s85, 0
    %s88 = sadd.s32 %s87, 1
    %s89 = scalar_select %p86, %s87, %s88
    %p92 = pneg %p86
    %p93 = scmp.eq.s32.totalorder %s9, 1
    %p94 = por %p92, %p93
    %p95 = scmp.ne.s32.totalorder %s87, %s90
    %p96 = scmp.eq.s32.totalorder %s9, 0
    %p97 = por %p95, %p96
    %p98 = scmp.ne.s32.totalorder %s87, %s90
    %p99 = scmp.eq.s32.totalorder %s14, 1
    %p100 = por %p98, %p99
    %p101 = scmp.ne.s32.totalorder %s90, %s91
    %p102 = scmp.eq.s32.totalorder %s14, 0
    %p103 = por %p101, %p102
    %p104 = scmp.ne.s32.totalorder %s90, %s91
    %p105 = scmp.eq.s32.totalorder %s15, 1
    %p106 = por %p104, %p105
    %p108 = scmp.ne.s32.totalorder %s91, %s107
    %p109 = scmp.eq.s32.totalorder %s15, 0
    %p110 = por %p108, %p109
    %p111 = scmp.le.s32.totalorder 1, %s9
    %p112 = scmp.lt.s32.totalorder %s9, 3
    %p113 = pnand %p111, %p112
    %p114 = pneg %p113
    // Predicated region
    $region9: #{vae_forward.11} parent=5 // pred_check
      _
    $region10: #{vae_forward.11} parent=5 // pred_check_branch
      %116 = sbr.rel (%p113) target = $region12
    $region11: #{vae_forward.11} parent=5 // pred_region
      %s117 = ssub.s32 %s9, 1
      // Predicated region
      $region13: #{vae_forward.11} parent=11 // pred_check
        %p118 = pneg %p56
      $region14: #{vae_forward.11} parent=11 // pred_check_branch
        %120 = sbr.rel (%p118) target = $region16
      $region15: #{vae_forward.11} parent=11 // pred_region
        _
      $region16: #{vae_forward.11} parent=11 // pred_fallthru
        _
      // Predicated region
      $region17: #{vae_forward.11} parent=11 // pred_check
        %p121 = pneg %p77
      $region18: #{vae_forward.11} parent=11 // pred_check_branch
        %123 = sbr.rel (%p121) target = $region20
      $region19: #{vae_forward.11} parent=11 // pred_region
        _
      $region20: #{vae_forward.11} parent=11 // pred_fallthru
        _
    $region12: #{vae_forward.11} parent=5 // pred_fallthru
      _
    %p124 = scmp.lt.s32.totalorder %s9, 2
    // Predicated region
    $region21: #{vae_forward.11} parent=5 // pred_check
      %p125 = pneg %p124
    $region22: #{vae_forward.11} parent=5 // pred_check_branch
      %127 = sbr.rel (%p125) target = $region24
    $region23: #{vae_forward.11} parent=5 // pred_region
      // Predicated region
      $region25: #{vae_forward.11} parent=23 // pred_check
        %p128 = pneg %p29
      $region26: #{vae_forward.11} parent=23 // pred_check_branch
        %130 = sbr.rel (%p128) target = $region28
      $region27: #{vae_forward.11} parent=23 // pred_region
        %p131 = scmp.lt.s32.totalorder %s9, 1
        %s132 = scalar_select %p131, %s9, 1
        %s133 = smul.addr %s132, 3
        %s134 = smul.addr %s133, 4
        %s135 = scalar_lea.vmem %s0, %s134
      $region28: #{vae_forward.11} parent=23 // pred_fallthru
        _
    $region24: #{vae_forward.11} parent=5 // pred_fallthru
      _
    %p136 = scmp.le.s32.totalorder 1, %s9
    %p137 = scmp.lt.s32.totalorder %s9, 3
    %p138 = pnand %p136, %p137
    %p139 = pneg %p138
    // Predicated region
    $region29: #{vae_forward.11} parent=5 // pred_check
      _
    $region30: #{vae_forward.11} parent=5 // pred_check_branch
      %141 = sbr.rel (%p138) target = $region32
    $region31: #{vae_forward.11} parent=5 // pred_region
      %s142 = ssub.s32 %s9, 1
      %p143 = scmp.lt.s32.totalorder %s14, 1
      %s144 = scalar_select %p143, %s14, 1
      %s145 = smul.addr %s144, 3
      %s146 = smul.addr %s145, 4
      %s147 = scalar_lea.vmem %s0, %s146
      %p148 = pneg %p35
      %p149 = pneg %p32
      %p150 = pneg %p56
      %p151 = pneg %p53
      %p152 = pneg %p77
      %p153 = pneg %p74
      %p154 = pneg %p103
      %p155 = pneg %p100
      %p156 = scmp.lt.s32.totalorder %s14, 1
      %s157 = scalar_select %p156, %s14, 1
      %s158 = smul.addr %s157, 4
      %s159 = smul.addr %s158, 4
      %s160 = scalar_lea.vmem %s3, %s159
      %p161 = scmp.lt.s32.totalorder %s14, 1
      %s162 = scalar_select %p161, %s14, 1
      %s163 = smul.addr %s162, 3
      %s164 = smul.addr %s163, 4
      %s165 = scalar_lea.vmem %s0, %s164
      %p166 = scmp.lt.s32.totalorder %s14, 1
      %s167 = scalar_select %p166, %s14, 1
      %s168 = smul.addr %s167, 4
      %s169 = smul.addr %s168, 4
      %s170 = scalar_lea.vmem %s3, %s169
      %v171 = vld [vmem:[%s165] sm:$0xf]
      %v172 = vld [vmem:[%s165 + $0x4] sm:$0x3]
      %v173 = vld [vmem:[%s1] sm:$0xff]
      %v174 = vld [vmem:[%s1 + $0x8] sm:$0xff]
      %v175 = vld [vmem:[%s1 + $0x10] sm:$0xff]
      %v176 = vld [vmem:[%s1 + $0x18] sm:$0xff]
      %v177 = vld [vmem:[%s1 + $0x20] sm:$0xff]
      %v178 = vld [vmem:[%s1 + $0x28] sm:$0xff]
      %v179 = vld [vmem:[%s1 + $0x30] sm:$0xff]
      %v180 = vld [vmem:[%s1 + $0x38] sm:$0xff]
      %v181 = vld [vmem:[%s1 + $0x40] sm:$0xff]
      %v182 = vld [vmem:[%s1 + $0x48] sm:$0xff]
      %v183 = vld [vmem:[%s1 + $0x50] sm:$0xff]
      %v184 = vld [vmem:[%s1 + $0x58] sm:$0xff]
      %v185 = vld [vmem:[%s1 + $0x60] sm:$0xff]
      %v186 = vld [vmem:[%s1 + $0x68] sm:$0xff]
      %v187 = vld [vmem:[%s1 + $0x70] sm:$0xff]
      %v188 = vld [vmem:[%s1 + $0x78] sm:$0xff]
      %v189 = vld [vmem:[%s165 + $0x4] sm:$0x7]
      %s190 = scalar_lea.vmem %s1, 128
      %v191 = vld [vmem:[%s190] sm:$0xff]
      %v192 = vld [vmem:[%s190 + $0x8] sm:$0xff]
      %v193 = vld [vmem:[%s190 + $0x10] sm:$0xff]
      %v194 = vld [vmem:[%s190 + $0x18] sm:$0xff]
      %v195 = vld [vmem:[%s190 + $0x20] sm:$0xff]
      %v196 = vld [vmem:[%s190 + $0x28] sm:$0xff]
      %v197 = vld [vmem:[%s190 + $0x30] sm:$0xff]
      %v198 = vld [vmem:[%s190 + $0x38] sm:$0xff]
      %v199 = vld [vmem:[%s190 + $0x40] sm:$0xff]
      %v200 = vld [vmem:[%s190 + $0x48] sm:$0xff]
      %v201 = vld [vmem:[%s190 + $0x50] sm:$0xff]
      %v202 = vld [vmem:[%s190 + $0x58] sm:$0xff]
      %v203 = vld [vmem:[%s190 + $0x60] sm:$0xff]
      %v204 = vld [vmem:[%s190 + $0x68] sm:$0xff]
      %v205 = vld [vmem:[%s190 + $0x70] sm:$0xff]
      %v206 = vld [vmem:[%s190 + $0x78] sm:$0xff]
      %v209 = vunpack.c.l.b16 %v171
      %v210 = vunpack.c.l.b16 %v189
      %v211 = vpack.c.b16 %v210, %v209
      %v213 = vshrl.u32 %v211, 16
      %v215 = vshll.u32 %v211, 16
      %v217 = vrot.slane %v215, 1
      %v218 = vor.u32 %v213, %v217
      %v236 = vunpack.c.l.b16 %v191
      %v237 = vunpack.c.h.b16 %v191
      %v238 = vunpack.c.l.b16 %v192
      %v239 = vunpack.c.h.b16 %v192
      %v240 = vunpack.c.l.b16 %v193
      %v241 = vunpack.c.h.b16 %v193
      %v242 = vunpack.c.l.b16 %v194
      %v243 = vunpack.c.h.b16 %v194
      %v244 = vunpack.c.l.b16 %v195
      %v245 = vunpack.c.h.b16 %v195
      %v246 = vunpack.c.l.b16 %v196
      %v247 = vunpack.c.h.b16 %v196
      %v248 = vunpack.c.l.b16 %v197
      %v249 = vunpack.c.h.b16 %v197
      %v250 = vunpack.c.l.b16 %v198
      %v251 = vunpack.c.h.b16 %v198
      %v252 = vunpack.c.l.b16 %v199
      %v253 = vunpack.c.h.b16 %v199
      %v254 = vunpack.c.l.b16 %v200
      %v255 = vunpack.c.h.b16 %v200
      %v256 = vunpack.c.l.b16 %v201
      %v257 = vunpack.c.h.b16 %v201
      %v258 = vunpack.c.l.b16 %v202
      %v259 = vunpack.c.h.b16 %v202
      %v260 = vunpack.c.l.b16 %v203
      %v261 = vunpack.c.h.b16 %v203
      %v262 = vunpack.c.l.b16 %v204
      %v263 = vunpack.c.h.b16 %v204
      %v264 = vunpack.c.l.b16 %v205
      %v265 = vunpack.c.h.b16 %v205
      %v266 = vunpack.c.l.b16 %v206
      %v267 = vunpack.c.h.b16 %v206
      %v268 = vpack.c.b16 %v238, %v236
      %v269 = vpack.c.b16 %v239, %v237
      %v270 = vpack.c.b16 %v242, %v240
      %v271 = vpack.c.b16 %v243, %v241
      %v272 = vpack.c.b16 %v246, %v244
      %v273 = vpack.c.b16 %v247, %v245
      %v274 = vpack.c.b16 %v250, %v248
      %v275 = vpack.c.b16 %v251, %v249
      %v276 = vpack.c.b16 %v254, %v252
      %v277 = vpack.c.b16 %v255, %v253
      %v278 = vpack.c.b16 %v258, %v256
      %v279 = vpack.c.b16 %v259, %v257
      %v280 = vpack.c.b16 %v262, %v260
      %v281 = vpack.c.b16 %v263, %v261
      %v282 = vpack.c.b16 %v266, %v264
      %v283 = vpack.c.b16 %v267, %v265
      %300 = vmatpush.bf16.msra.mxu0 %v282
      %301 = vmatpush.bf16.msra.mxu0 %v280
      %302 = vmatpush.bf16.msra.mxu0 %v278
      %303 = vmatpush.bf16.msra.mxu0 %v276
      %304 = vmatpush.bf16.msra.mxu0 %v274
      %305 = vmatpush.bf16.msra.mxu0 %v272
      %306 = vmatpush.bf16.msra.mxu0 %v270
      %307 = vmatpush.bf16.msra.mxu0 %v268
      %308 = vmatmul.bf16.gmra.mxu0 %v218
      %v309 = vpop.f32.mrf.mxu0
      %v310 = vadd.f32 0.0, %v309
      %v311 = vpop.f32.mrf.mxu0
      %v312 = vadd.f32 0.0, %v311
      %313 = vdwg.mxu0
      %314 = vmatpush.bf16.msra.mxu0 %v283
      %315 = vmatpush.bf16.msra.mxu0 %v281
      %316 = vmatpush.bf16.msra.mxu0 %v279
      %317 = vmatpush.bf16.msra.mxu0 %v277
      %318 = vmatpush.bf16.msra.mxu0 %v275
      %319 = vmatpush.bf16.msra.mxu0 %v273
      %320 = vmatpush.bf16.msra.mxu0 %v271
      %321 = vmatpush.bf16.msra.mxu0 %v269
      %322 = vmatmul.bf16.gmra.mxu0 %v218
      %v323 = vpop.f32.mrf.mxu0
      %v324 = vadd.f32 0.0, %v323
      %v325 = vpop.f32.mrf.mxu0
      %v326 = vadd.f32 0.0, %v325
      %327 = vdwg.mxu0
      %v329 = vunpack.c.l.b16 %v172
      %v330 = vpack.c.b16 %v329, %v209
      %v348 = vunpack.c.l.b16 %v173
      %v349 = vunpack.c.h.b16 %v173
      %v350 = vunpack.c.l.b16 %v174
      %v351 = vunpack.c.h.b16 %v174
      %v352 = vunpack.c.l.b16 %v175
      %v353 = vunpack.c.h.b16 %v175
      %v354 = vunpack.c.l.b16 %v176
      %v355 = vunpack.c.h.b16 %v176
      %v356 = vunpack.c.l.b16 %v177
      %v357 = vunpack.c.h.b16 %v177
      %v358 = vunpack.c.l.b16 %v178
      %v359 = vunpack.c.h.b16 %v178
      %v360 = vunpack.c.l.b16 %v179
      %v361 = vunpack.c.h.b16 %v179
      %v362 = vunpack.c.l.b16 %v180
      %v363 = vunpack.c.h.b16 %v180
      %v364 = vunpack.c.l.b16 %v181
      %v365 = vunpack.c.h.b16 %v181
      %v366 = vunpack.c.l.b16 %v182
      %v367 = vunpack.c.h.b16 %v182
      %v368 = vunpack.c.l.b16 %v183
      %v369 = vunpack.c.h.b16 %v183
      %v370 = vunpack.c.l.b16 %v184
      %v371 = vunpack.c.h.b16 %v184
      %v372 = vunpack.c.l.b16 %v185
      %v373 = vunpack.c.h.b16 %v185
      %v374 = vunpack.c.l.b16 %v186
      %v375 = vunpack.c.h.b16 %v186
      %v376 = vunpack.c.l.b16 %v187
      %v377 = vunpack.c.h.b16 %v187
      %v378 = vunpack.c.l.b16 %v188
      %v379 = vunpack.c.h.b16 %v188
      %v380 = vpack.c.b16 %v350, %v348
      %v381 = vpack.c.b16 %v351, %v349
      %v382 = vpack.c.b16 %v354, %v352
      %v383 = vpack.c.b16 %v355, %v353
      %v384 = vpack.c.b16 %v358, %v356
      %v385 = vpack.c.b16 %v359, %v357
      %v386 = vpack.c.b16 %v362, %v360
      %v387 = vpack.c.b16 %v363, %v361
      %v388 = vpack.c.b16 %v366, %v364
      %v389 = vpack.c.b16 %v367, %v365
      %v390 = vpack.c.b16 %v370, %v368
      %v391 = vpack.c.b16 %v371, %v369
      %v392 = vpack.c.b16 %v374, %v372
      %v393 = vpack.c.b16 %v375, %v373
      %v394 = vpack.c.b16 %v378, %v376
      %v395 = vpack.c.b16 %v379, %v377
      %412 = vmatpush.bf16.msra.mxu0 %v394
      %413 = vmatpush.bf16.msra.mxu0 %v392
      %414 = vmatpush.bf16.msra.mxu0 %v390
      %415 = vmatpush.bf16.msra.mxu0 %v388
      %416 = vmatpush.bf16.msra.mxu0 %v386
      %417 = vmatpush.bf16.msra.mxu0 %v384
      %418 = vmatpush.bf16.msra.mxu0 %v382
      %419 = vmatpush.bf16.msra.mxu0 %v380
      %420 = vmatmul.bf16.gmra.mxu0 %v330
      %v421 = vpop.f32.mrf.mxu0
      %v422 = vadd.f32 %v310, %v421
      %v423 = vpop.f32.mrf.mxu0
      %v424 = vadd.f32 %v312, %v423
      %425 = vdwg.mxu0
      %426 = vmatpush.bf16.msra.mxu0 %v395
      %427 = vmatpush.bf16.msra.mxu0 %v393
      %428 = vmatpush.bf16.msra.mxu0 %v391
      %429 = vmatpush.bf16.msra.mxu0 %v389
      %430 = vmatpush.bf16.msra.mxu0 %v387
      %431 = vmatpush.bf16.msra.mxu0 %v385
      %432 = vmatpush.bf16.msra.mxu0 %v383
      %433 = vmatpush.bf16.msra.mxu0 %v381
      %434 = vmatmul.bf16.gmra.mxu0 %v330
      %v435 = vpop.f32.mrf.mxu0
      %v436 = vadd.f32 %v324, %v435
      %v437 = vpop.f32.mrf.mxu0
      %v438 = vadd.f32 %v326, %v437
      %439 = vdwg.mxu0
      %v440 = vld [vmem:[%s165] sm:$0xc]
      %v441 = vld [vmem:[%s165 + $0x4] sm:$0xf]
      %s442 = scalar_lea.vmem %s1, 256
      %v443 = vld [vmem:[%s442] sm:$0xff]
      %v444 = vld [vmem:[%s442 + $0x8] sm:$0xff]
      %v445 = vld [vmem:[%s442 + $0x10] sm:$0xff]
      %v446 = vld [vmem:[%s442 + $0x18] sm:$0xff]
      %v447 = vld [vmem:[%s442 + $0x20] sm:$0xff]
      %v448 = vld [vmem:[%s442 + $0x28] sm:$0xff]
      %v449 = vld [vmem:[%s442 + $0x30] sm:$0xff]
      %v450 = vld [vmem:[%s442 + $0x38] sm:$0xff]
      %v451 = vld [vmem:[%s442 + $0x40] sm:$0xff]
      %v452 = vld [vmem:[%s442 + $0x48] sm:$0xff]
      %v453 = vld [vmem:[%s442 + $0x50] sm:$0xff]
      %v454 = vld [vmem:[%s442 + $0x58] sm:$0xff]
      %v455 = vld [vmem:[%s442 + $0x60] sm:$0xff]
      %v456 = vld [vmem:[%s442 + $0x68] sm:$0xff]
      %v457 = vld [vmem:[%s442 + $0x70] sm:$0xff]
      %v458 = vld [vmem:[%s442 + $0x78] sm:$0xff]
      %v461 = vunpack.c.l.b16 %v440
      %v462 = vunpack.c.l.b16 %v441
      %v463 = vpack.c.b16 %v462, %v461
      %v464 = vrot.slane %v463, 2
      %v482 = vunpack.c.l.b16 %v443
      %v483 = vunpack.c.h.b16 %v443
      %v484 = vunpack.c.l.b16 %v444
      %v485 = vunpack.c.h.b16 %v444
      %v486 = vunpack.c.l.b16 %v445
      %v487 = vunpack.c.h.b16 %v445
      %v488 = vunpack.c.l.b16 %v446
      %v489 = vunpack.c.h.b16 %v446
      %v490 = vunpack.c.l.b16 %v447
      %v491 = vunpack.c.h.b16 %v447
      %v492 = vunpack.c.l.b16 %v448
      %v493 = vunpack.c.h.b16 %v448
      %v494 = vunpack.c.l.b16 %v449
      %v495 = vunpack.c.h.b16 %v449
      %v496 = vunpack.c.l.b16 %v450
      %v497 = vunpack.c.h.b16 %v450
      %v498 = vunpack.c.l.b16 %v451
      %v499 = vunpack.c.h.b16 %v451
      %v500 = vunpack.c.l.b16 %v452
      %v501 = vunpack.c.h.b16 %v452
      %v502 = vunpack.c.l.b16 %v453
      %v503 = vunpack.c.h.b16 %v453
      %v504 = vunpack.c.l.b16 %v454
      %v505 = vunpack.c.h.b16 %v454
      %v506 = vunpack.c.l.b16 %v455
      %v507 = vunpack.c.h.b16 %v455
      %v508 = vunpack.c.l.b16 %v456
      %v509 = vunpack.c.h.b16 %v456
      %v510 = vunpack.c.l.b16 %v457
      %v511 = vunpack.c.h.b16 %v457
      %v512 = vunpack.c.l.b16 %v458
      %v513 = vunpack.c.h.b16 %v458
      %v514 = vpack.c.b16 %v484, %v482
      %v515 = vpack.c.b16 %v485, %v483
      %v516 = vpack.c.b16 %v488, %v486
      %v517 = vpack.c.b16 %v489, %v487
      %v518 = vpack.c.b16 %v492, %v490
      %v519 = vpack.c.b16 %v493, %v491
      %v520 = vpack.c.b16 %v496, %v494
      %v521 = vpack.c.b16 %v497, %v495
      %v522 = vpack.c.b16 %v500, %v498
      %v523 = vpack.c.b16 %v501, %v499
      %v524 = vpack.c.b16 %v504, %v502
      %v525 = vpack.c.b16 %v505, %v503
      %v526 = vpack.c.b16 %v508, %v506
      %v527 = vpack.c.b16 %v509, %v507
      %v528 = vpack.c.b16 %v512, %v510
      %v529 = vpack.c.b16 %v513, %v511
      %546 = vmatpush.bf16.msra.mxu0 %v528
      %547 = vmatpush.bf16.msra.mxu0 %v526
      %548 = vmatpush.bf16.msra.mxu0 %v524
      %549 = vmatpush.bf16.msra.mxu0 %v522
      %550 = vmatpush.bf16.msra.mxu0 %v520
      %551 = vmatpush.bf16.msra.mxu0 %v518
      %552 = vmatpush.bf16.msra.mxu0 %v516
      %553 = vmatpush.bf16.msra.mxu0 %v514
      %554 = vmatmul.bf16.gmra.mxu0 %v464
      %v555 = vpop.f32.mrf.mxu0
      %v556 = vadd.f32 0.0, %v555
      %v557 = vpop.f32.mrf.mxu0
      %v558 = vadd.f32 0.0, %v557
      %559 = vdwg.mxu0
      %560 = vmatpush.bf16.msra.mxu0 %v529
      %561 = vmatpush.bf16.msra.mxu0 %v527
      %562 = vmatpush.bf16.msra.mxu0 %v525
      %563 = vmatpush.bf16.msra.mxu0 %v523
      %564 = vmatpush.bf16.msra.mxu0 %v521
      %565 = vmatpush.bf16.msra.mxu0 %v519
      %566 = vmatpush.bf16.msra.mxu0 %v517
      %567 = vmatpush.bf16.msra.mxu0 %v515
      %568 = vmatmul.bf16.gmra.mxu0 %v464
      %v569 = vpop.f32.mrf.mxu0
      %v570 = vadd.f32 0.0, %v569
      %v571 = vpop.f32.mrf.mxu0
      %v572 = vadd.f32 0.0, %v571
      %573 = vdwg.mxu0
      %v574 = vadd.f32 %v422, %v556
      %v575 = vadd.f32 %v436, %v570
      %v576 = vadd.f32 %v424, %v558
      %v577 = vadd.f32 %v438, %v572
      %v578 = vld [vmem:[%s165] sm:$0xc]
      %v579 = vld [vmem:[%s165 + $0x4] sm:$0xf]
      %v580 = vld [vmem:[%s165 + $0x8] sm:$0x1]
      %s581 = scalar_lea.vmem %s1, 384
      %v582 = vld [vmem:[%s581] sm:$0xff]
      %v583 = vld [vmem:[%s581 + $0x8] sm:$0xff]
      %v584 = vld [vmem:[%s581 + $0x10] sm:$0xff]
      %v585 = vld [vmem:[%s581 + $0x18] sm:$0xff]
      %v586 = vld [vmem:[%s581 + $0x20] sm:$0xff]
      %v587 = vld [vmem:[%s581 + $0x28] sm:$0xff]
      %v588 = vld [vmem:[%s581 + $0x30] sm:$0xff]
      %v589 = vld [vmem:[%s581 + $0x38] sm:$0xff]
      %v590 = vld [vmem:[%s581 + $0x40] sm:$0xff]
      %v591 = vld [vmem:[%s581 + $0x48] sm:$0xff]
      %v592 = vld [vmem:[%s581 + $0x50] sm:$0xff]
      %v593 = vld [vmem:[%s581 + $0x58] sm:$0xff]
      %v594 = vld [vmem:[%s581 + $0x60] sm:$0xff]
      %v595 = vld [vmem:[%s581 + $0x68] sm:$0xff]
      %v596 = vld [vmem:[%s581 + $0x70] sm:$0xff]
      %v597 = vld [vmem:[%s581 + $0x78] sm:$0xff]
      %v601 = vunpack.c.l.b16 %v578
      %v602 = vunpack.c.l.b16 %v579
      %v603 = vunpack.c.l.b16 %v580
      %v604 = vpack.c.b16 %v602, %v601
      %v605 = vpack.c.b16 %v603, %v603
      %vm606 = vsmask.f32 5376
      %v608 = vshrl.u32 %v604, 16
      %v610 = vrot.slane %v608, 2
      %v611 = vshll.u32 %v604, 16
      %v613 = vrot.slane %v611, 3
      %v614 = vor.u32 %v610, %v613
      %v616 = vshll.u32 %v605, 16
      %v618 = vrot.slane %v616, 3
      %v619 = vsel %vm606, %v614, %v618
      %v637 = vunpack.c.l.b16 %v582
      %v638 = vunpack.c.h.b16 %v582
      %v639 = vunpack.c.l.b16 %v583
      %v640 = vunpack.c.h.b16 %v583
      %v641 = vunpack.c.l.b16 %v584
      %v642 = vunpack.c.h.b16 %v584
      %v643 = vunpack.c.l.b16 %v585
      %v644 = vunpack.c.h.b16 %v585
      %v645 = vunpack.c.l.b16 %v586
      %v646 = vunpack.c.h.b16 %v586
      %v647 = vunpack.c.l.b16 %v587
      %v648 = vunpack.c.h.b16 %v587
      %v649 = vunpack.c.l.b16 %v588
      %v650 = vunpack.c.h.b16 %v588
      %v651 = vunpack.c.l.b16 %v589
      %v652 = vunpack.c.h.b16 %v589
      %v653 = vunpack.c.l.b16 %v590
      %v654 = vunpack.c.h.b16 %v590
      %v655 = vunpack.c.l.b16 %v591
      %v656 = vunpack.c.h.b16 %v591
      %v657 = vunpack.c.l.b16 %v592
      %v658 = vunpack.c.h.b16 %v592
      %v659 = vunpack.c.l.b16 %v593
      %v660 = vunpack.c.h.b16 %v593
      %v661 = vunpack.c.l.b16 %v594
      %v662 = vunpack.c.h.b16 %v594
      %v663 = vunpack.c.l.b16 %v595
      %v664 = vunpack.c.h.b16 %v595
      %v665 = vunpack.c.l.b16 %v596
      %v666 = vunpack.c.h.b16 %v596
      %v667 = vunpack.c.l.b16 %v597
      %v668 = vunpack.c.h.b16 %v597
      %v669 = vpack.c.b16 %v639, %v637
      %v670 = vpack.c.b16 %v640, %v638
      %v671 = vpack.c.b16 %v643, %v641
      %v672 = vpack.c.b16 %v644, %v642
      %v673 = vpack.c.b16 %v647, %v645
      %v674 = vpack.c.b16 %v648, %v646
      %v675 = vpack.c.b16 %v651, %v649
      %v676 = vpack.c.b16 %v652, %v650
      %v677 = vpack.c.b16 %v655, %v653
      %v678 = vpack.c.b16 %v656, %v654
      %v679 = vpack.c.b16 %v659, %v657
      %v680 = vpack.c.b16 %v660, %v658
      %v681 = vpack.c.b16 %v663, %v661
      %v682 = vpack.c.b16 %v664, %v662
      %v683 = vpack.c.b16 %v667, %v665
      %v684 = vpack.c.b16 %v668, %v666
      %701 = vmatpush.bf16.msra.mxu0 %v683
      %702 = vmatpush.bf16.msra.mxu0 %v681
      %703 = vmatpush.bf16.msra.mxu0 %v679
      %704 = vmatpush.bf16.msra.mxu0 %v677
      %705 = vmatpush.bf16.msra.mxu0 %v675
      %706 = vmatpush.bf16.msra.mxu0 %v673
      %707 = vmatpush.bf16.msra.mxu0 %v671
      %708 = vmatpush.bf16.msra.mxu0 %v669
      %709 = vmatmul.bf16.gmra.mxu0 %v619
      %v710 = vpop.f32.mrf.mxu0
      %v711 = vadd.f32 0.0, %v710
      %v712 = vpop.f32.mrf.mxu0
      %v713 = vadd.f32 0.0, %v712
      %714 = vdwg.mxu0
      %715 = vmatpush.bf16.msra.mxu0 %v684
      %716 = vmatpush.bf16.msra.mxu0 %v682
      %717 = vmatpush.bf16.msra.mxu0 %v680
      %718 = vmatpush.bf16.msra.mxu0 %v678
      %719 = vmatpush.bf16.msra.mxu0 %v676
      %720 = vmatpush.bf16.msra.mxu0 %v674
      %721 = vmatpush.bf16.msra.mxu0 %v672
      %722 = vmatpush.bf16.msra.mxu0 %v670
      %723 = vmatmul.bf16.gmra.mxu0 %v619
      %v724 = vpop.f32.mrf.mxu0
      %v725 = vadd.f32 0.0, %v724
      %v726 = vpop.f32.mrf.mxu0
      %v727 = vadd.f32 0.0, %v726
      %728 = vdwg.mxu0
      %v729 = vadd.f32 %v574, %v711
      %v730 = vadd.f32 %v575, %v725
      %v731 = vadd.f32 %v576, %v713
      %v732 = vadd.f32 %v577, %v727
      %v733 = vld [vmem:[%s2] sm:$0x3]
      %v735 = vperm.slane %v733, 0
      %v736 = vperm.slane %v733, 1
      %v739 = vadd.f32 %v729, %v735
      %v740 = vadd.f32 %v730, %v736
      %v741 = vadd.f32 %v731, %v735
      %v742 = vadd.f32 %v732, %v736
      %v743 = vmax.f32 %v739, 0.0
      %v744 = vmax.f32 %v740, 0.0
      %v745 = vmax.f32 %v741, 0.0
      %v746 = vmax.f32 %v742, 0.0
      %v747 = vpack.c.bf16 %v744, %v743
      %v748 = vpack.c.bf16 %v746, %v745
      %749 = vst [vmem:[%s170] sm:$0xff] %v747
      %750 = vst [vmem:[%s170 + $0x8] sm:$0x33] %v748
      %p751 = scmp.lt.s32.totalorder %s14, 1
      %s752 = scalar_select %p751, %s14, 1
      %s753 = smul.addr %s752, 4
      %s754 = smul.addr %s753, 4
      %s755 = scalar_lea.vmem %s3, %s754
      // Predicated region
      $region33: #{vae_forward.11} parent=31 // pred_check
        %p756 = pneg %p100
      $region34: #{vae_forward.11} parent=31 // pred_check_branch
        %758 = sbr.rel (%p756) target = $region36
      $region35: #{vae_forward.11} parent=31 // pred_region
        _
      $region36: #{vae_forward.11} parent=31 // pred_fallthru
        _
    $region32: #{vae_forward.11} parent=5 // pred_fallthru
      _
    %p759 = scmp.le.s32.totalorder 2, %s9
    // Predicated region
    $region37: #{vae_forward.11} parent=5 // pred_check
      %p760 = pneg %p759
    $region38: #{vae_forward.11} parent=5 // pred_check_branch
      %762 = sbr.rel (%p760) target = $region40
    $region39: #{vae_forward.11} parent=5 // pred_region
      %s763 = ssub.s32 %s9, 2
      // Predicated region
      $region41: #{vae_forward.11} parent=39 // pred_check
        %p764 = pneg %p106
      $region42: #{vae_forward.11} parent=39 // pred_check_branch
        %766 = sbr.rel (%p764) target = $region44
      $region43: #{vae_forward.11} parent=39 // pred_region
        %p767 = scmp.lt.s32.totalorder %s15, 1
        %s768 = scalar_select %p767, %s15, 1
        %s769 = smul.addr %s768, 4
        %s770 = smul.addr %s769, 4
        %s771 = scalar_lea.vmem %s3, %s770
      $region44: #{vae_forward.11} parent=39 // pred_fallthru
        _
    $region40: #{vae_forward.11} parent=5 // pred_fallthru
      _
  $region6: #{vae_forward.11} parent=0 // loop_footer
    %s13 = sadd.s32 1, %s9
  $region7: #{vae_forward.11} parent=0 // loop_footer_branch
    %8 = sbr.rel target = $region3
  $region8: #{vae_forward.11} parent=0 // loop_exit
    _

// kernel: vae_forward.12
$region0: #{vae_forward.12}
  #allocation0 [shape = 'u32[]', space=smem, size = 0x4, offset = 0x4, fixed_abs, tag = 'smem constant byte address 0x4 - core index']
  #allocation1 [shape = 'u32[72,128]{1,0:T(1,128)}', space=vmem, size = 0x9000, scoped, tag = 'internal scratch']
  %s0 = inlined_call_operand.vmem [shape: bf16[2,37,64], index: 0, kind: input, shape index: {}]
  %s1 = inlined_call_operand.vmem [shape: bf16[4,64,128], index: 1, kind: input, shape index: {}]
  %s2 = inlined_call_operand.vmem [shape: f32[1,128], index: 2, kind: input, shape index: {}]
  %s3 = inlined_call_operand.vmem [shape: bf16[2,30,128], index: 3, kind: output, shape index: {}]
  %s4 = sld [smem:[#allocation0]]
  $region45: #{vae_forward.12} parent=0
    _
  %s6 = ssub.s32 1, %s4
  %s7 = scalar_select 0, %s6, %s4
  loop: start=0, step=1, limit=4
  $region2: #{vae_forward.12} parent=0 // loop_pre_header
    _
  $region3: #{vae_forward.12} parent=0 // loop_header
    %s9 = sphi 0, %s13
    %p10 = scmp.ge.s32.totalorder %s9, 4
    %s19 = sphi 0, %s21
    %s22 = sphi 0, %s19
    %s23 = sphi 0, %s22
    %s39 = sphi 0, %s23
    %s43 = sphi 0, %s43
    %s45 = sphi 0, %s43
    %s46 = sphi 0, %s45
    %s60 = sphi 0, %s46
    %s64 = sphi 0, %s64
    %s66 = sphi 0, %s64
    %s67 = sphi 0, %s66
    %s81 = sphi 0, %s67
    %s87 = sphi 0, %s89
    %s90 = sphi 0, %s87
    %s91 = sphi 0, %s90
    %s107 = sphi 0, %s91
  $region4: #{vae_forward.12} parent=0 // loop_header_branch
    %12 = sbr.rel (%p10) target = $region8
  $region5: #{vae_forward.12} parent=0 // loop_body
    %s14 = ssub.s32 %s9, 1
    %s15 = ssub.s32 %s9, 2
    %s16 = sadd.s32 %s9, 1
    %s17 = ssub.s32 %s9, %s16
    %p18 = scmp.eq.s32.totalorder %s17, 0
    %s20 = sadd.s32 %s19, 1
    %s21 = scalar_select %p18, %s19, %s20
    %p24 = pneg %p18
    %p25 = scmp.eq.s32.totalorder %s9, 1
    %p26 = por %p24, %p25
    %p27 = scmp.ne.s32.totalorder %s19, %s22
    %p28 = scmp.eq.s32.totalorder %s9, 0
    %p29 = por %p27, %p28
    %p30 = scmp.ne.s32.totalorder %s19, %s22
    %p31 = scmp.eq.s32.totalorder %s14, 1
    %p32 = por %p30, %p31
    %p33 = scmp.ne.s32.totalorder %s22, %s23
    %p34 = scmp.eq.s32.totalorder %s14, 0
    %p35 = por %p33, %p34
    %p36 = scmp.ne.s32.totalorder %s22, %s23
    %p37 = scmp.eq.s32.totalorder %s15, 1
    %p38 = por %p36, %p37
    %p40 = scmp.ne.s32.totalorder %s23, %s39
    %p41 = scmp.eq.s32.totalorder %s15, 0
    %p42 = por %p40, %p41
    %s44 = sadd.s32 %s43, 1
    %p47 = scmp.eq.s32.totalorder %s9, 1
    %p48 = scmp.ne.s32.totalorder %s43, %s45
    %p49 = scmp.eq.s32.totalorder %s9, 0
    %p50 = por %p48, %p49
    %p51 = scmp.ne.s32.totalorder %s43, %s45
    %p52 = scmp.eq.s32.totalorder %s14, 1
    %p53 = por %p51, %p52
    %p54 = scmp.ne.s32.totalorder %s45, %s46
    %p55 = scmp.eq.s32.totalorder %s14, 0
    %p56 = por %p54, %p55
    %p57 = scmp.ne.s32.totalorder %s45, %s46
    %p58 = scmp.eq.s32.totalorder %s15, 1
    %p59 = por %p57, %p58
    %p61 = scmp.ne.s32.totalorder %s46, %s60
    %p62 = scmp.eq.s32.totalorder %s15, 0
    %p63 = por %p61, %p62
    %s65 = sadd.s32 %s64, 1
    %p68 = scmp.eq.s32.totalorder %s9, 1
    %p69 = scmp.ne.s32.totalorder %s64, %s66
    %p70 = scmp.eq.s32.totalorder %s9, 0
    %p71 = por %p69, %p70
    %p72 = scmp.ne.s32.totalorder %s64, %s66
    %p73 = scmp.eq.s32.totalorder %s14, 1
    %p74 = por %p72, %p73
    %p75 = scmp.ne.s32.totalorder %s66, %s67
    %p76 = scmp.eq.s32.totalorder %s14, 0
    %p77 = por %p75, %p76
    %p78 = scmp.ne.s32.totalorder %s66, %s67
    %p79 = scmp.eq.s32.totalorder %s15, 1
    %p80 = por %p78, %p79
    %p82 = scmp.ne.s32.totalorder %s67, %s81
    %p83 = scmp.eq.s32.totalorder %s15, 0
    %p84 = por %p82, %p83
    %s85 = ssub.s32 %s9, %s16
    %p86 = scmp.eq.s32.totalorder %s85, 0
    %s88 = sadd.s32 %s87, 1
    %s89 = scalar_select %p86, %s87, %s88
    %p92 = pneg %p86
    %p93 = scmp.eq.s32.totalorder %s9, 1
    %p94 = por %p92, %p93
    %p95 = scmp.ne.s32.totalorder %s87, %s90
    %p96 = scmp.eq.s32.totalorder %s9, 0
    %p97 = por %p95, %p96
    %p98 = scmp.ne.s32.totalorder %s87, %s90
    %p99 = scmp.eq.s32.totalorder %s14, 1
    %p100 = por %p98, %p99
    %p101 = scmp.ne.s32.totalorder %s90, %s91
    %p102 = scmp.eq.s32.totalorder %s14, 0
    %p103 = por %p101, %p102
    %p104 = scmp.ne.s32.totalorder %s90, %s91
    %p105 = scmp.eq.s32.totalorder %s15, 1
    %p106 = por %p104, %p105
    %p108 = scmp.ne.s32.totalorder %s91, %s107
    %p109 = scmp.eq.s32.totalorder %s15, 0
    %p110 = por %p108, %p109
    %p111 = scmp.le.s32.totalorder 1, %s9
    %p112 = scmp.lt.s32.totalorder %s9, 3
    %p113 = pnand %p111, %p112
    %p114 = pneg %p113
    // Predicated region
    $region9: #{vae_forward.12} parent=5 // pred_check
      _
    $region10: #{vae_forward.12} parent=5 // pred_check_branch
      %116 = sbr.rel (%p113) target = $region12
    $region11: #{vae_forward.12} parent=5 // pred_region
      %s117 = ssub.s32 %s9, 1
      // Predicated region
      $region13: #{vae_forward.12} parent=11 // pred_check
        %p118 = pneg %p56
      $region14: #{vae_forward.12} parent=11 // pred_check_branch
        %120 = sbr.rel (%p118) target = $region16
      $region15: #{vae_forward.12} parent=11 // pred_region
        _
      $region16: #{vae_forward.12} parent=11 // pred_fallthru
        _
      // Predicated region
      $region17: #{vae_forward.12} parent=11 // pred_check
        %p121 = pneg %p77
      $region18: #{vae_forward.12} parent=11 // pred_check_branch
        %123 = sbr.rel (%p121) target = $region20
      $region19: #{vae_forward.12} parent=11 // pred_region
        _
      $region20: #{vae_forward.12} parent=11 // pred_fallthru
        _
    $region12: #{vae_forward.12} parent=5 // pred_fallthru
      _
    %p124 = scmp.lt.s32.totalorder %s9, 2
    // Predicated region
    $region21: #{vae_forward.12} parent=5 // pred_check
      %p125 = pneg %p124
    $region22: #{vae_forward.12} parent=5 // pred_check_branch
      %127 = sbr.rel (%p125) target = $region24
    $region23: #{vae_forward.12} parent=5 // pred_region
      // Predicated region
      $region25: #{vae_forward.12} parent=23 // pred_check
        %p128 = pneg %p29
      $region26: #{vae_forward.12} parent=23 // pred_check_branch
        %130 = sbr.rel (%p128) target = $region28
      $region27: #{vae_forward.12} parent=23 // pred_region
        %p131 = scmp.lt.s32.totalorder %s9, 1
        %s132 = scalar_select %p131, %s9, 1
        %s133 = smul.addr %s132, 5
        %s134 = smul.addr %s133, 4
        %s135 = scalar_lea.vmem %s0, %s134
      $region28: #{vae_forward.12} parent=23 // pred_fallthru
        _
    $region24: #{vae_forward.12} parent=5 // pred_fallthru
      _
    %p136 = scmp.le.s32.totalorder 1, %s9
    %p137 = scmp.lt.s32.totalorder %s9, 3
    %p138 = pnand %p136, %p137
    %p139 = pneg %p138
    // Predicated region
    $region29: #{vae_forward.12} parent=5 // pred_check
      _
    $region30: #{vae_forward.12} parent=5 // pred_check_branch
      %141 = sbr.rel (%p138) target = $region32
    $region31: #{vae_forward.12} parent=5 // pred_region
      %s142 = ssub.s32 %s9, 1
      %p143 = scmp.lt.s32.totalorder %s14, 1
      %s144 = scalar_select %p143, %s14, 1
      %s145 = smul.addr %s144, 5
      %s146 = smul.addr %s145, 4
      %s147 = scalar_lea.vmem %s0, %s146
      %p148 = pneg %p35
      %p149 = pneg %p32
      %p150 = pneg %p56
      %p151 = pneg %p53
      %p152 = pneg %p77
      %p153 = pneg %p74
      %p154 = pneg %p103
      %p155 = pneg %p100
      %p156 = scmp.lt.s32.totalorder %s14, 1
      %s157 = scalar_select %p156, %s14, 1
      %s158 = smul.addr %s157, 4
      %s159 = smul.addr %s158, 4
      %s160 = scalar_lea.vmem %s3, %s159
      %p161 = scmp.lt.s32.totalorder %s14, 1
      %s162 = scalar_select %p161, %s14, 1
      %s163 = smul.addr %s162, 5
      %s164 = smul.addr %s163, 4
      %s165 = scalar_lea.vmem %s0, %s164
      %p166 = scmp.lt.s32.totalorder %s14, 1
      %s167 = scalar_select %p166, %s14, 1
      %s168 = smul.addr %s167, 4
      %s169 = smul.addr %s168, 4
      %s170 = scalar_lea.vmem %s3, %s169
      %v172 = vld [vmem:[%s165] sm:$0xf]
      %v173 = vld [vmem:[%s165 + $0x4] sm:$0xf]
      %v174 = vld [vmem:[%s165 + $0x8] sm:$0xf]
      %v175 = vld [vmem:[%s165 + $0xc] sm:$0x7]
      %v176 = vld [vmem:[%s1] sm:$0xf]
      %v177 = vld [vmem:[%s1 + $0x4] sm:$0xf]
      %v178 = vld [vmem:[%s1 + $0x8] sm:$0xf]
      %v179 = vld [vmem:[%s1 + $0xc] sm:$0xf]
      %v180 = vld [vmem:[%s1 + $0x10] sm:$0xf]
      %v181 = vld [vmem:[%s1 + $0x14] sm:$0xf]
      %v182 = vld [vmem:[%s1 + $0x18] sm:$0xf]
      %v183 = vld [vmem:[%s1 + $0x1c] sm:$0xf]
      %v184 = vld [vmem:[%s165 + $0xc] sm:$0xf]
      %s185 = scalar_lea.vmem %s1, 32
      %v186 = vld [vmem:[%s185] sm:$0xf]
      %v187 = vld [vmem:[%s185 + $0x4] sm:$0xf]
      %v188 = vld [vmem:[%s185 + $0x8] sm:$0xf]
      %v189 = vld [vmem:[%s185 + $0xc] sm:$0xf]
      %v190 = vld [vmem:[%s185 + $0x10] sm:$0xf]
      %v191 = vld [vmem:[%s185 + $0x14] sm:$0xf]
      %v192 = vld [vmem:[%s185 + $0x18] sm:$0xf]
      %v193 = vld [vmem:[%s185 + $0x1c] sm:$0xf]
      %v198 = vunpack.c.l.b16 %v172
      %v199 = vunpack.c.l.b16 %v173
      %v200 = vunpack.c.l.b16 %v174
      %v201 = vunpack.c.l.b16 %v184
      %v202 = vpack.c.b16 %v199, %v198
      %v203 = vpack.c.b16 %v201, %v200
      %vm204 = vsmask.f32 7424
      %v206 = vshrl.u32 %v202, 16
      %v208 = vshll.u32 %v202, 16
      %v210 = vrot.slane %v208, 1
      %v211 = vor.u32 %v206, %v210
      %v213 = vshll.u32 %v203, 16
      %v215 = vrot.slane %v213, 1
      %v216 = vsel %vm204, %v211, %v215
      %v217 = vshrl.u32 %v203, 16
      %v219 = vor.u32 %v217, %v215
      %v228 = vunpack.c.l.b16 %v186
      %v229 = vunpack.c.l.b16 %v187
      %v230 = vunpack.c.l.b16 %v188
      %v231 = vunpack.c.l.b16 %v189
      %v232 = vunpack.c.l.b16 %v190
      %v233 = vunpack.c.l.b16 %v191
      %v234 = vunpack.c.l.b16 %v192
      %v235 = vunpack.c.l.b16 %v193
      %v236 = vpack.c.b16 %v229, %v228
      %v237 = vpack.c.b16 %v231, %v230
      %v238 = vpack.c.b16 %v233, %v232
      %v239 = vpack.c.b16 %v235, %v234
      %vm244 = vcmask 523264
      %v246 = vsel %vm244, %v216, 0
      %v249 = vsel %vm244, %v219, 0
      %251 = vmatpush.bf16.msra.mxu0 0
      %252 = vmatpush.bf16.msra.mxu0 0
      %253 = vmatpush.bf16.msra.mxu0 0
      %254 = vmatpush.bf16.msra.mxu0 0
      %255 = vmatpush.bf16.msra.mxu0 %v239
      %256 = vmatpush.bf16.msra.mxu0 %v238
      %257 = vmatpush.bf16.msra.mxu0 %v237
      %258 = vmatpush.bf16.msra.mxu0 %v236
      %259 = vmatmul.bf16.gmra.mxu0 %v246
      %v260 = vpop.f32.mrf.mxu0
      %v261 = vadd.f32 0.0, %v260
      %v262 = vpop.f32.mrf.mxu0
      %v263 = vadd.f32 0.0, %v262
      %264 = vmatmul.bf16.gmra.mxu0 %v249
      %v265 = vpop.f32.mrf.mxu0
      %v266 = vadd.f32 0.0, %v265
      %v267 = vpop.f32.mrf.mxu0
      %v268 = vadd.f32 0.0, %v267
      %269 = vdwg.mxu0
      %v271 = vunpack.c.l.b16 %v175
      %v272 = vpack.c.b16 %v271, %v200
      %v281 = vunpack.c.l.b16 %v176
      %v282 = vunpack.c.l.b16 %v177
      %v283 = vunpack.c.l.b16 %v178
      %v284 = vunpack.c.l.b16 %v179
      %v285 = vunpack.c.l.b16 %v180
      %v286 = vunpack.c.l.b16 %v181
      %v287 = vunpack.c.l.b16 %v182
      %v288 = vunpack.c.l.b16 %v183
      %v289 = vpack.c.b16 %v282, %v281
      %v290 = vpack.c.b16 %v284, %v283
      %v291 = vpack.c.b16 %v286, %v285
      %v292 = vpack.c.b16 %v288, %v287
      %v297 = vsel %vm244, %v202, 0
      %v300 = vsel %vm244, %v272, 0
      %302 = vmatpush.bf16.msra.mxu0 0
      %303 = vmatpush.bf16.msra.mxu0 0
      %304 = vmatpush.bf16.msra.mxu0 0
      %305 = vmatpush.bf16.msra.mxu0 0
      %306 = vmatpush.bf16.msra.mxu0 %v292
      %307 = vmatpush.bf16.msra.mxu0 %v291
      %308 = vmatpush.bf16.msra.mxu0 %v290
      %309 = vmatpush.bf16.msra.mxu0 %v289
      %310 = vmatmul.bf16.gmra.mxu0 %v297
      %v311 = vpop.f32.mrf.mxu0
      %v312 = vadd.f32 %v261, %v311
      %v313 = vpop.f32.mrf.mxu0
      %v314 = vadd.f32 %v263, %v313
      %315 = vmatmul.bf16.gmra.mxu0 %v300
      %v316 = vpop.f32.mrf.mxu0
      %v317 = vadd.f32 %v266, %v316
      %v318 = vpop.f32.mrf.mxu0
      %v319 = vadd.f32 %v268, %v318
      %320 = vdwg.mxu0
      %v321 = vld [vmem:[%s165] sm:$0x8]
      %v322 = vld [vmem:[%s165 + $0x4] sm:$0xf]
      %v323 = vld [vmem:[%s165 + $0x8] sm:$0xf]
      %v324 = vld [vmem:[%s165 + $0xc] sm:$0xf]
      %v325 = vld [vmem:[%s165 + $0x10] sm:$0x3]
      %s326 = scalar_lea.vmem %s1, 64
      %v327 = vld [vmem:[%s326] sm:$0xf]
      %v328 = vld [vmem:[%s326 + $0x4] sm:$0xf]
      %v329 = vld [vmem:[%s326 + $0x8] sm:$0xf]
      %v330 = vld [vmem:[%s326 + $0xc] sm:$0xf]
      %v331 = vld [vmem:[%s326 + $0x10] sm:$0xf]
      %v332 = vld [vmem:[%s326 + $0x14] sm:$0xf]
      %v333 = vld [vmem:[%s326 + $0x18] sm:$0xf]
      %v334 = vld [vmem:[%s326 + $0x1c] sm:$0xf]
      %v340 = vunpack.c.l.b16 %v321
      %v341 = vunpack.c.l.b16 %v322
      %v342 = vunpack.c.l.b16 %v323
      %v343 = vunpack.c.l.b16 %v324
      %v344 = vunpack.c.l.b16 %v325
      %v345 = vpack.c.b16 %v341, %v340
      %v346 = vpack.c.b16 %v343, %v342
      %v347 = vpack.c.b16 %v344, %v344
      %vm348 = vcmask 1044480
      %v349 = vrot.slane %v345, 3
      %v350 = vrot.slane %v346, 3
      %v351 = vsel %vm348, %v349, %v350
      %v352 = vrot.slane %v347, 3
      %v353 = vsel %vm348, %v350, %v352
      %v362 = vunpack.c.l.b16 %v327
      %v363 = vunpack.c.l.b16 %v328
      %v364 = vunpack.c.l.b16 %v329
      %v365 = vunpack.c.l.b16 %v330
      %v366 = vunpack.c.l.b16 %v331
      %v367 = vunpack.c.l.b16 %v332
      %v368 = vunpack.c.l.b16 %v333
      %v369 = vunpack.c.l.b16 %v334
      %v370 = vpack.c.b16 %v363, %v362
      %v371 = vpack.c.b16 %v365, %v364
      %v372 = vpack.c.b16 %v367, %v366
      %v373 = vpack.c.b16 %v369, %v368
      %v379 = vsel %vm244, %v351, 0
      %v382 = vsel %vm244, %v353, 0
      %384 = vmatpush.bf16.msra.mxu0 0
      %385 = vmatpush.bf16.msra.mxu0 0
      %386 = vmatpush.bf16.msra.mxu0 0
      %387 = vmatpush.bf16.msra.mxu0 0
      %388 = vmatpush.bf16.msra.mxu0 %v373
      %389 = vmatpush.bf16.msra.mxu0 %v372
      %390 = vmatpush.bf16.msra.mxu0 %v371
      %391 = vmatpush.bf16.msra.mxu0 %v370
      %392 = vmatmul.bf16.gmra.mxu0 %v379
      %v393 = vpop.f32.mrf.mxu0
      %v394 = vadd.f32 0.0, %v393
      %v395 = vpop.f32.mrf.mxu0
      %v396 = vadd.f32 0.0, %v395
      %397 = vmatmul.bf16.gmra.mxu0 %v382
      %v398 = vpop.f32.mrf.mxu0
      %v399 = vadd.f32 0.0, %v398
      %v400 = vpop.f32.mrf.mxu0
      %v401 = vadd.f32 0.0, %v400
      %402 = vdwg.mxu0
      %v403 = vadd.f32 %v312, %v394
      %v404 = vadd.f32 %v314, %v396
      %v405 = vadd.f32 %v317, %v399
      %v406 = vadd.f32 %v319, %v401
      %v407 = vld [vmem:[%s165 + $0x10] sm:$0x7]
      %s408 = scalar_lea.vmem %s1, 96
      %v409 = vld [vmem:[%s408] sm:$0xf]
      %v410 = vld [vmem:[%s408 + $0x4] sm:$0xf]
      %v411 = vld [vmem:[%s408 + $0x8] sm:$0xf]
      %v412 = vld [vmem:[%s408 + $0xc] sm:$0xf]
      %v413 = vld [vmem:[%s408 + $0x10] sm:$0xf]
      %v414 = vld [vmem:[%s408 + $0x14] sm:$0xf]
      %v415 = vld [vmem:[%s408 + $0x18] sm:$0xf]
      %v416 = vld [vmem:[%s408 + $0x1c] sm:$0xf]
      %v418 = vunpack.c.l.b16 %v407
      %v419 = vpack.c.b16 %v418, %v418
      %vm420 = vsmask.f32 4352
      %v422 = vshrl.u32 %v345, 16
      %v424 = vrot.slane %v422, 3
      %v425 = vshll.u32 %v345, 16
      %v427 = vrot.slane %v425, 4
      %v428 = vor.u32 %v424, %v427
      %v430 = vshrl.u32 %v346, 16
      %v432 = vrot.slane %v430, 3
      %v433 = vshll.u32 %v346, 16
      %v435 = vrot.slane %v433, 4
      %v436 = vor.u32 %v432, %v435
      %v437 = vsel %vm420, %v428, %v436
      %v439 = vshrl.u32 %v419, 16
      %v441 = vrot.slane %v439, 3
      %v442 = vshll.u32 %v419, 16
      %v444 = vrot.slane %v442, 4
      %v445 = vor.u32 %v441, %v444
      %v446 = vsel %vm420, %v436, %v445
      %v455 = vunpack.c.l.b16 %v409
      %v456 = vunpack.c.l.b16 %v410
      %v457 = vunpack.c.l.b16 %v411
      %v458 = vunpack.c.l.b16 %v412
      %v459 = vunpack.c.l.b16 %v413
      %v460 = vunpack.c.l.b16 %v414
      %v461 = vunpack.c.l.b16 %v415
      %v462 = vunpack.c.l.b16 %v416
      %v463 = vpack.c.b16 %v456, %v455
      %v464 = vpack.c.b16 %v458, %v457
      %v465 = vpack.c.b16 %v460, %v459
      %v466 = vpack.c.b16 %v462, %v461
      %v472 = vsel %vm244, %v437, 0
      %v475 = vsel %vm244, %v446, 0
      %477 = vmatpush.bf16.msra.mxu0 0
      %478 = vmatpush.bf16.msra.mxu0 0
      %479 = vmatpush.bf16.msra.mxu0 0
      %480 = vmatpush.bf16.msra.mxu0 0
      %481 = vmatpush.bf16.msra.mxu0 %v466
      %482 = vmatpush.bf16.msra.mxu0 %v465
      %483 = vmatpush.bf16.msra.mxu0 %v464
      %484 = vmatpush.bf16.msra.mxu0 %v463
      %485 = vmatmul.bf16.gmra.mxu0 %v472
      %v486 = vpop.f32.mrf.mxu0
      %v487 = vadd.f32 0.0, %v486
      %v488 = vpop.f32.mrf.mxu0
      %v489 = vadd.f32 0.0, %v488
      %490 = vmatmul.bf16.gmra.mxu0 %v475
      %v491 = vpop.f32.mrf.mxu0
      %v492 = vadd.f32 0.0, %v491
      %v493 = vpop.f32.mrf.mxu0
      %v494 = vadd.f32 0.0, %v493
      %495 = vdwg.mxu0
      %v496 = vadd.f32 %v403, %v487
      %v497 = vadd.f32 %v404, %v489
      %v498 = vadd.f32 %v405, %v492
      %v499 = vadd.f32 %v406, %v494
      %v500 = vld [vmem:[%s2] sm:$0x1]
      %v502 = vperm.slane %v500, 0
      %v504 = vadd.f32 %v496, %v502
      %v505 = vadd.f32 %v497, %v502
      %v506 = vadd.f32 %v498, %v502
      %v507 = vadd.f32 %v499, %v502
      %v508 = vmax.f32 %v504, 0.0
      %v509 = vmax.f32 %v505, 0.0
      %v510 = vmax.f32 %v506, 0.0
      %v511 = vmax.f32 %v507, 0.0
      %v512 = vpack.c.bf16 %v508, %v508
      %v513 = vpack.c.bf16 %v509, %v509
      %v514 = vpack.c.bf16 %v510, %v510
      %v515 = vpack.c.bf16 %v511, %v511
      %516 = vst [vmem:[%s170] sm:$0xf] %v512
      %517 = vst [vmem:[%s170 + $0x4] sm:$0xf] %v513
      %518 = vst [vmem:[%s170 + $0x8] sm:$0xf] %v514
      %519 = vst [vmem:[%s170 + $0xc] sm:$0x7] %v515
      %p520 = scmp.lt.s32.totalorder %s14, 1
      %s521 = scalar_select %p520, %s14, 1
      %s522 = smul.addr %s521, 4
      %s523 = smul.addr %s522, 4
      %s524 = scalar_lea.vmem %s3, %s523
      // Predicated region
      $region33: #{vae_forward.12} parent=31 // pred_check
        %p525 = pneg %p100
      $region34: #{vae_forward.12} parent=31 // pred_check_branch
        %527 = sbr.rel (%p525) target = $region36
      $region35: #{vae_forward.12} parent=31 // pred_region
        _
      $region36: #{vae_forward.12} parent=31 // pred_fallthru
        _
    $region32: #{vae_forward.12} parent=5 // pred_fallthru
      _
    %p528 = scmp.le.s32.totalorder 2, %s9
    // Predicated region
    $region37: #{vae_forward.12} parent=5 // pred_check
      %p529 = pneg %p528
    $region38: #{vae_forward.12} parent=5 // pred_check_branch
      %531 = sbr.rel (%p529) target = $region40
    $region39: #{vae_forward.12} parent=5 // pred_region
      %s532 = ssub.s32 %s9, 2
      // Predicated region
      $region41: #{vae_forward.12} parent=39 // pred_check
        %p533 = pneg %p106
      $region42: #{vae_forward.12} parent=39 // pred_check_branch
        %535 = sbr.rel (%p533) target = $region44
      $region43: #{vae_forward.12} parent=39 // pred_region
        %p536 = scmp.lt.s32.totalorder %s15, 1
        %s537 = scalar_select %p536, %s15, 1
        %s538 = smul.addr %s537, 4
        %s539 = smul.addr %s538, 4
        %s540 = scalar_lea.vmem %s3, %s539
      $region44: #{vae_forward.12} parent=39 // pred_fallthru
        _
    $region40: #{vae_forward.12} parent=5 // pred_fallthru
      _
  $region6: #{vae_forward.12} parent=0 // loop_footer
    %s13 = sadd.s32 1, %s9
  $region7: #{vae_forward.12} parent=0 // loop_footer_branch
    %8 = sbr.rel target = $region3
  $region8: #{vae_forward.12} parent=0 // loop_exit
    _

// kernel: vae_forward.13
$region0: #{vae_forward.13}
  #allocation0 [shape = 'u32[]', space=smem, size = 0x4, offset = 0x4, fixed_abs, tag = 'smem constant byte address 0x4 - core index']
  #allocation1 [shape = 'u32[72,128]{1,0:T(1,128)}', space=vmem, size = 0x9000, scoped, tag = 'internal scratch']
  %s0 = inlined_call_operand.vmem [shape: bf16[2,101,32], index: 0, kind: input, shape index: {}]
  %s1 = inlined_call_operand.vmem [shape: bf16[4,32,4], index: 1, kind: input, shape index: {}]
  %s2 = inlined_call_operand.vmem [shape: f32[1,4], index: 2, kind: input, shape index: {}]
  %s3 = inlined_call_operand.vmem [shape: f32[2,90,4], index: 3, kind: output, shape index: {}]
  %s4 = sld [smem:[#allocation0]]
  $region45: #{vae_forward.13} parent=0
    _
  %s6 = ssub.s32 1, %s4
  %s7 = scalar_select 0, %s6, %s4
  loop: start=0, step=1, limit=4
  $region2: #{vae_forward.13} parent=0 // loop_pre_header
    _
  $region3: #{vae_forward.13} parent=0 // loop_header
    %s9 = sphi 0, %s13
    %p10 = scmp.ge.s32.totalorder %s9, 4
    %s19 = sphi 0, %s21
    %s22 = sphi 0, %s19
    %s23 = sphi 0, %s22
    %s39 = sphi 0, %s23
    %s43 = sphi 0, %s43
    %s45 = sphi 0, %s43
    %s46 = sphi 0, %s45
    %s60 = sphi 0, %s46
    %s64 = sphi 0, %s64
    %s66 = sphi 0, %s64
    %s67 = sphi 0, %s66
    %s81 = sphi 0, %s67
    %s87 = sphi 0, %s89
    %s90 = sphi 0, %s87
    %s91 = sphi 0, %s90
    %s107 = sphi 0, %s91
  $region4: #{vae_forward.13} parent=0 // loop_header_branch
    %12 = sbr.rel (%p10) target = $region8
  $region5: #{vae_forward.13} parent=0 // loop_body
    %s14 = ssub.s32 %s9, 1
    %s15 = ssub.s32 %s9, 2
    %s16 = sadd.s32 %s9, 1
    %s17 = ssub.s32 %s9, %s16
    %p18 = scmp.eq.s32.totalorder %s17, 0
    %s20 = sadd.s32 %s19, 1
    %s21 = scalar_select %p18, %s19, %s20
    %p24 = pneg %p18
    %p25 = scmp.eq.s32.totalorder %s9, 1
    %p26 = por %p24, %p25
    %p27 = scmp.ne.s32.totalorder %s19, %s22
    %p28 = scmp.eq.s32.totalorder %s9, 0
    %p29 = por %p27, %p28
    %p30 = scmp.ne.s32.totalorder %s19, %s22
    %p31 = scmp.eq.s32.totalorder %s14, 1
    %p32 = por %p30, %p31
    %p33 = scmp.ne.s32.totalorder %s22, %s23
    %p34 = scmp.eq.s32.totalorder %s14, 0
    %p35 = por %p33, %p34
    %p36 = scmp.ne.s32.totalorder %s22, %s23
    %p37 = scmp.eq.s32.totalorder %s15, 1
    %p38 = por %p36, %p37
    %p40 = scmp.ne.s32.totalorder %s23, %s39
    %p41 = scmp.eq.s32.totalorder %s15, 0
    %p42 = por %p40, %p41
    %s44 = sadd.s32 %s43, 1
    %p47 = scmp.eq.s32.totalorder %s9, 1
    %p48 = scmp.ne.s32.totalorder %s43, %s45
    %p49 = scmp.eq.s32.totalorder %s9, 0
    %p50 = por %p48, %p49
    %p51 = scmp.ne.s32.totalorder %s43, %s45
    %p52 = scmp.eq.s32.totalorder %s14, 1
    %p53 = por %p51, %p52
    %p54 = scmp.ne.s32.totalorder %s45, %s46
    %p55 = scmp.eq.s32.totalorder %s14, 0
    %p56 = por %p54, %p55
    %p57 = scmp.ne.s32.totalorder %s45, %s46
    %p58 = scmp.eq.s32.totalorder %s15, 1
    %p59 = por %p57, %p58
    %p61 = scmp.ne.s32.totalorder %s46, %s60
    %p62 = scmp.eq.s32.totalorder %s15, 0
    %p63 = por %p61, %p62
    %s65 = sadd.s32 %s64, 1
    %p68 = scmp.eq.s32.totalorder %s9, 1
    %p69 = scmp.ne.s32.totalorder %s64, %s66
    %p70 = scmp.eq.s32.totalorder %s9, 0
    %p71 = por %p69, %p70
    %p72 = scmp.ne.s32.totalorder %s64, %s66
    %p73 = scmp.eq.s32.totalorder %s14, 1
    %p74 = por %p72, %p73
    %p75 = scmp.ne.s32.totalorder %s66, %s67
    %p76 = scmp.eq.s32.totalorder %s14, 0
    %p77 = por %p75, %p76
    %p78 = scmp.ne.s32.totalorder %s66, %s67
    %p79 = scmp.eq.s32.totalorder %s15, 1
    %p80 = por %p78, %p79
    %p82 = scmp.ne.s32.totalorder %s67, %s81
    %p83 = scmp.eq.s32.totalorder %s15, 0
    %p84 = por %p82, %p83
    %s85 = ssub.s32 %s9, %s16
    %p86 = scmp.eq.s32.totalorder %s85, 0
    %s88 = sadd.s32 %s87, 1
    %s89 = scalar_select %p86, %s87, %s88
    %p92 = pneg %p86
    %p93 = scmp.eq.s32.totalorder %s9, 1
    %p94 = por %p92, %p93
    %p95 = scmp.ne.s32.totalorder %s87, %s90
    %p96 = scmp.eq.s32.totalorder %s9, 0
    %p97 = por %p95, %p96
    %p98 = scmp.ne.s32.totalorder %s87, %s90
    %p99 = scmp.eq.s32.totalorder %s14, 1
    %p100 = por %p98, %p99
    %p101 = scmp.ne.s32.totalorder %s90, %s91
    %p102 = scmp.eq.s32.totalorder %s14, 0
    %p103 = por %p101, %p102
    %p104 = scmp.ne.s32.totalorder %s90, %s91
    %p105 = scmp.eq.s32.totalorder %s15, 1
    %p106 = por %p104, %p105
    %p108 = scmp.ne.s32.totalorder %s91, %s107
    %p109 = scmp.eq.s32.totalorder %s15, 0
    %p110 = por %p108, %p109
    %p111 = scmp.le.s32.totalorder 1, %s9
    %p112 = scmp.lt.s32.totalorder %s9, 3
    %p113 = pnand %p111, %p112
    %p114 = pneg %p113
    // Predicated region
    $region9: #{vae_forward.13} parent=5 // pred_check
      _
    $region10: #{vae_forward.13} parent=5 // pred_check_branch
      %116 = sbr.rel (%p113) target = $region12
    $region11: #{vae_forward.13} parent=5 // pred_region
      %s117 = ssub.s32 %s9, 1
      // Predicated region
      $region13: #{vae_forward.13} parent=11 // pred_check
        %p118 = pneg %p56
      $region14: #{vae_forward.13} parent=11 // pred_check_branch
        %120 = sbr.rel (%p118) target = $region16
      $region15: #{vae_forward.13} parent=11 // pred_region
        _
      $region16: #{vae_forward.13} parent=11 // pred_fallthru
        _
      // Predicated region
      $region17: #{vae_forward.13} parent=11 // pred_check
        %p121 = pneg %p77
      $region18: #{vae_forward.13} parent=11 // pred_check_branch
        %123 = sbr.rel (%p121) target = $region20
      $region19: #{vae_forward.13} parent=11 // pred_region
        _
      $region20: #{vae_forward.13} parent=11 // pred_fallthru
        _
    $region12: #{vae_forward.13} parent=5 // pred_fallthru
      _
    %p124 = scmp.lt.s32.totalorder %s9, 2
    // Predicated region
    $region21: #{vae_forward.13} parent=5 // pred_check
      %p125 = pneg %p124
    $region22: #{vae_forward.13} parent=5 // pred_check_branch
      %127 = sbr.rel (%p125) target = $region24
    $region23: #{vae_forward.13} parent=5 // pred_region
      // Predicated region
      $region25: #{vae_forward.13} parent=23 // pred_check
        %p128 = pneg %p29
      $region26: #{vae_forward.13} parent=23 // pred_check_branch
        %130 = sbr.rel (%p128) target = $region28
      $region27: #{vae_forward.13} parent=23 // pred_region
        %p131 = scmp.lt.s32.totalorder %s9, 1
        %s132 = scalar_select %p131, %s9, 1
        %s133 = smul.addr %s132, 13
        %s134 = smul.addr %s133, 4
        %s135 = scalar_lea.vmem %s0, %s134
      $region28: #{vae_forward.13} parent=23 // pred_fallthru
        _
    $region24: #{vae_forward.13} parent=5 // pred_fallthru
      _
    %p136 = scmp.le.s32.totalorder 1, %s9
    %p137 = scmp.lt.s32.totalorder %s9, 3
    %p138 = pnand %p136, %p137
    %p139 = pneg %p138
    // Predicated region
    $region29: #{vae_forward.13} parent=5 // pred_check
      _
    $region30: #{vae_forward.13} parent=5 // pred_check_branch
      %141 = sbr.rel (%p138) target = $region32
    $region31: #{vae_forward.13} parent=5 // pred_region
      %s142 = ssub.s32 %s9, 1
      %p143 = scmp.lt.s32.totalorder %s14, 1
      %s144 = scalar_select %p143, %s14, 1
      %s145 = smul.addr %s144, 13
      %s146 = smul.addr %s145, 4
      %s147 = scalar_lea.vmem %s0, %s146
      %p148 = pneg %p35
      %p149 = pneg %p32
      %p150 = pneg %p56
      %p151 = pneg %p53
      %p152 = pneg %p77
      %p153 = pneg %p74
      %p154 = pneg %p103
      %p155 = pneg %p100
      %p156 = scmp.lt.s32.totalorder %s14, 1
      %s157 = scalar_select %p156, %s14, 1
      %s158 = smul.addr %s157, 12
      %s159 = smul.addr %s158, 8
      %s160 = scalar_lea.vmem %s3, %s159
      %p161 = scmp.lt.s32.totalorder %s14, 1
      %s162 = scalar_select %p161, %s14, 1
      %s163 = smul.addr %s162, 13
      %s164 = smul.addr %s163, 4
      %s165 = scalar_lea.vmem %s0, %s164
      %p166 = scmp.lt.s32.totalorder %s14, 1
      %s167 = scalar_select %p166, %s14, 1
      %s168 = smul.addr %s167, 12
      %s169 = smul.addr %s168, 8
      %s170 = scalar_lea.vmem %s3, %s169
      %v172 = vld [vmem:[%s165] sm:$0xf]
      %v173 = vld [vmem:[%s165 + $0x4] sm:$0xf]
      %v174 = vld [vmem:[%s165 + $0x8] sm:$0xf]
      %v175 = vld [vmem:[%s165 + $0xc] sm:$0xf]
      %v176 = vld [vmem:[%s165 + $0x10] sm:$0xf]
      %v177 = vld [vmem:[%s165 + $0x14] sm:$0xf]
      %v178 = vld [vmem:[%s165 + $0x18] sm:$0xf]
      %v179 = vld [vmem:[%s165 + $0x1c] sm:$0xf]
      %v180 = vld [vmem:[%s165 + $0x20] sm:$0xf]
      %v181 = vld [vmem:[%s165 + $0x24] sm:$0xf]
      %v182 = vld [vmem:[%s165 + $0x28] sm:$0xf]
      %v183 = vld [vmem:[%s165 + $0x2c] sm:$0x1]
      %v184 = vld [vmem:[%s1] sm:$0xf]
      %v185 = vld [vmem:[%s1 + $0x4] sm:$0xf]
      %v186 = vld [vmem:[%s1 + $0x8] sm:$0xf]
      %v187 = vld [vmem:[%s1 + $0xc] sm:$0xf]
      %v188 = vld [vmem:[%s165 + $0x2c] sm:$0x3]
      %s189 = scalar_lea.vmem %s1, 16
      %v190 = vld [vmem:[%s189] sm:$0xf]
      %v191 = vld [vmem:[%s189 + $0x4] sm:$0xf]
      %v192 = vld [vmem:[%s189 + $0x8] sm:$0xf]
      %v193 = vld [vmem:[%s189 + $0xc] sm:$0xf]
      %v206 = vunpack.c.l.b16 %v172
      %v207 = vunpack.c.l.b16 %v173
      %v208 = vunpack.c.l.b16 %v174
      %v209 = vunpack.c.l.b16 %v175
      %v210 = vunpack.c.l.b16 %v176
      %v211 = vunpack.c.l.b16 %v177
      %v212 = vunpack.c.l.b16 %v178
      %v213 = vunpack.c.l.b16 %v179
      %v214 = vunpack.c.l.b16 %v180
      %v215 = vunpack.c.l.b16 %v181
      %v216 = vunpack.c.l.b16 %v182
      %v217 = vunpack.c.l.b16 %v188
      %v218 = vpack.c.b16 %v207, %v206
      %v219 = vpack.c.b16 %v209, %v208
      %v220 = vpack.c.b16 %v211, %v210
      %v221 = vpack.c.b16 %v213, %v212
      %v222 = vpack.c.b16 %v215, %v214
      %v223 = vpack.c.b16 %v217, %v216
      %vm224 = vsmask.f32 7424
      %v226 = vshrl.u32 %v218, 16
      %v228 = vshll.u32 %v218, 16
      %v230 = vrot.slane %v228, 1
      %v231 = vor.u32 %v226, %v230
      %v233 = vshll.u32 %v219, 16
      %v235 = vrot.slane %v233, 1
      %v236 = vsel %vm224, %v231, %v235
      %v237 = vshrl.u32 %v219, 16
      %v239 = vor.u32 %v237, %v235
      %v241 = vshll.u32 %v220, 16
      %v243 = vrot.slane %v241, 1
      %v244 = vsel %vm224, %v239, %v243
      %v245 = vshrl.u32 %v220, 16
      %v247 = vor.u32 %v245, %v243
      %v249 = vshll.u32 %v221, 16
      %v251 = vrot.slane %v249, 1
      %v252 = vsel %vm224, %v247, %v251
      %v253 = vshrl.u32 %v221, 16
      %v255 = vor.u32 %v253, %v251
      %v257 = vshll.u32 %v222, 16
      %v259 = vrot.slane %v257, 1
      %v260 = vsel %vm224, %v255, %v259
      %v261 = vshrl.u32 %v222, 16
      %v263 = vor.u32 %v261, %v259
      %v265 = vshll.u32 %v223, 16
      %v267 = vrot.slane %v265, 1
      %v268 = vsel %vm224, %v263, %v267
      %v269 = vshrl.u32 %v223, 16
      %v271 = vor.u32 %v269, %v267
      %v276 = vunpack.c.l.b16 %v190
      %v277 = vunpack.c.l.b16 %v191
      %v278 = vunpack.c.l.b16 %v192
      %v279 = vunpack.c.l.b16 %v193
      %v280 = vpack.c.b16 %v277, %v276
      %v281 = vpack.c.b16 %v279, %v278
      %vm284 = vcmask 261120
      %v286 = vsel %vm284, %v236, 0
      %v289 = vsel %vm284, %v244, 0
      %v292 = vsel %vm284, %v252, 0
      %v295 = vsel %vm284, %v260, 0
      %v298 = vsel %vm284, %v268, 0
      %v301 = vsel %vm284, %v271, 0
      %303 = vmatpush.bf16.msra.mxu0 0
      %304 = vmatpush.bf16.msra.mxu0 0
      %305 = vmatpush.bf16.msra.mxu0 0
      %306 = vmatpush.bf16.msra.mxu0 0
      %307 = vmatpush.bf16.msra.mxu0 0
      %308 = vmatpush.bf16.msra.mxu0 0
      %309 = vmatpush.bf16.msra.mxu0 %v281
      %310 = vmatpush.bf16.msra.mxu0 %v280
      %311 = vmatmul.bf16.gmra.mxu0 %v286
      %v312 = vpop.f32.mrf.mxu0
      %v313 = vadd.f32 0.0, %v312
      %v314 = vpop.f32.mrf.mxu0
      %v315 = vadd.f32 0.0, %v314
      %316 = vmatmul.bf16.gmra.mxu0 %v289
      %v317 = vpop.f32.mrf.mxu0
      %v318 = vadd.f32 0.0, %v317
      %v319 = vpop.f32.mrf.mxu0
      %v320 = vadd.f32 0.0, %v319
      %321 = vmatmul.bf16.gmra.mxu0 %v292
      %v322 = vpop.f32.mrf.mxu0
      %v323 = vadd.f32 0.0, %v322
      %v324 = vpop.f32.mrf.mxu0
      %v325 = vadd.f32 0.0, %v324
      %326 = vmatmul.bf16.gmra.mxu0 %v295
      %v327 = vpop.f32.mrf.mxu0
      %v328 = vadd.f32 0.0, %v327
      %v329 = vpop.f32.mrf.mxu0
      %v330 = vadd.f32 0.0, %v329
      %331 = vmatmul.bf16.gmra.mxu0 %v298
      %v332 = vpop.f32.mrf.mxu0
      %v333 = vadd.f32 0.0, %v332
      %v334 = vpop.f32.mrf.mxu0
      %v335 = vadd.f32 0.0, %v334
      %336 = vmatmul.bf16.gmra.mxu0 %v301
      %v337 = vpop.f32.mrf.mxu0
      %v338 = vadd.f32 0.0, %v337
      %v339 = vpop.f32.mrf.mxu0
      %v340 = vadd.f32 0.0, %v339
      %341 = vdwg.mxu0
      %v343 = vunpack.c.l.b16 %v183
      %v344 = vpack.c.b16 %v343, %v216
      %v349 = vunpack.c.l.b16 %v184
      %v350 = vunpack.c.l.b16 %v185
      %v351 = vunpack.c.l.b16 %v186
      %v352 = vunpack.c.l.b16 %v187
      %v353 = vpack.c.b16 %v350, %v349
      %v354 = vpack.c.b16 %v352, %v351
      %v357 = vsel %vm284, %v218, 0
      %v359 = vsel %vm284, %v219, 0
      %v361 = vsel %vm284, %v220, 0
      %v363 = vsel %vm284, %v221, 0
      %v365 = vsel %vm284, %v222, 0
      %v368 = vsel %vm284, %v344, 0
      %370 = vmatpush.bf16.msra.mxu0 0
      %371 = vmatpush.bf16.msra.mxu0 0
      %372 = vmatpush.bf16.msra.mxu0 0
      %373 = vmatpush.bf16.msra.mxu0 0
      %374 = vmatpush.bf16.msra.mxu0 0
      %375 = vmatpush.bf16.msra.mxu0 0
      %376 = vmatpush.bf16.msra.mxu0 %v354
      %377 = vmatpush.bf16.msra.mxu0 %v353
      %378 = vmatmul.bf16.gmra.mxu0 %v357
      %v379 = vpop.f32.mrf.mxu0
      %v380 = vadd.f32 %v313, %v379
      %v381 = vpop.f32.mrf.mxu0
      %v382 = vadd.f32 %v315, %v381
      %383 = vmatmul.bf16.gmra.mxu0 %v359
      %v384 = vpop.f32.mrf.mxu0
      %v385 = vadd.f32 %v318, %v384
      %v386 = vpop.f32.mrf.mxu0
      %v387 = vadd.f32 %v320, %v386
      %388 = vmatmul.bf16.gmra.mxu0 %v361
      %v389 = vpop.f32.mrf.mxu0
      %v390 = vadd.f32 %v323, %v389
      %v391 = vpop.f32.mrf.mxu0
      %v392 = vadd.f32 %v325, %v391
      %393 = vmatmul.bf16.gmra.mxu0 %v363
      %v394 = vpop.f32.mrf.mxu0
      %v395 = vadd.f32 %v328, %v394
      %v396 = vpop.f32.mrf.mxu0
      %v397 = vadd.f32 %v330, %v396
      %398 = vmatmul.bf16.gmra.mxu0 %v365
      %v399 = vpop.f32.mrf.mxu0
      %v400 = vadd.f32 %v333, %v399
      %v401 = vpop.f32.mrf.mxu0
      %v402 = vadd.f32 %v335, %v401
      %403 = vmatmul.bf16.gmra.mxu0 %v368
      %v404 = vpop.f32.mrf.mxu0
      %v405 = vadd.f32 %v338, %v404
      %v406 = vpop.f32.mrf.mxu0
      %v407 = vadd.f32 %v340, %v406
      %408 = vdwg.mxu0
      %v409 = vld [vmem:[%s165 + $0x4] sm:$0xe]
      %v410 = vld [vmem:[%s165 + $0x8] sm:$0xf]
      %v411 = vld [vmem:[%s165 + $0xc] sm:$0xf]
      %v412 = vld [vmem:[%s165 + $0x10] sm:$0xf]
      %v413 = vld [vmem:[%s165 + $0x14] sm:$0xf]
      %v414 = vld [vmem:[%s165 + $0x18] sm:$0xf]
      %v415 = vld [vmem:[%s165 + $0x1c] sm:$0xf]
      %v416 = vld [vmem:[%s165 + $0x20] sm:$0xf]
      %v417 = vld [vmem:[%s165 + $0x24] sm:$0xf]
      %v418 = vld [vmem:[%s165 + $0x28] sm:$0xf]
      %v419 = vld [vmem:[%s165 + $0x2c] sm:$0xf]
      %v420 = vld [vmem:[%s165 + $0x30] sm:$0x3]
      %s421 = scalar_lea.vmem %s1, 32
      %v422 = vld [vmem:[%s421] sm:$0xf]
      %v423 = vld [vmem:[%s421 + $0x4] sm:$0xf]
      %v424 = vld [vmem:[%s421 + $0x8] sm:$0xf]
      %v425 = vld [vmem:[%s421 + $0xc] sm:$0xf]
      %v438 = vunpack.c.l.b16 %v409
      %v439 = vunpack.c.l.b16 %v410
      %v440 = vunpack.c.l.b16 %v411
      %v441 = vunpack.c.l.b16 %v412
      %v442 = vunpack.c.l.b16 %v413
      %v443 = vunpack.c.l.b16 %v414
      %v444 = vunpack.c.l.b16 %v415
      %v445 = vunpack.c.l.b16 %v416
      %v446 = vunpack.c.l.b16 %v417
      %v447 = vunpack.c.l.b16 %v418
      %v448 = vunpack.c.l.b16 %v419
      %v449 = vunpack.c.l.b16 %v420
      %v450 = vpack.c.b16 %v439, %v438
      %v451 = vpack.c.b16 %v441, %v440
      %v452 = vpack.c.b16 %v443, %v442
      %v453 = vpack.c.b16 %v445, %v444
      %v454 = vpack.c.b16 %v447, %v446
      %v455 = vpack.c.b16 %v449, %v448
      %vm456 = vcmask 1046528
      %v457 = vrot.slane %v450, 1
      %v458 = vrot.slane %v451, 1
      %v459 = vsel %vm456, %v457, %v458
      %v460 = vrot.slane %v452, 1
      %v461 = vsel %vm456, %v458, %v460
      %v462 = vrot.slane %v453, 1
      %v463 = vsel %vm456, %v460, %v462
      %v464 = vrot.slane %v454, 1
      %v465 = vsel %vm456, %v462, %v464
      %v466 = vrot.slane %v455, 1
      %v467 = vsel %vm456, %v464, %v466
      %v472 = vunpack.c.l.b16 %v422
      %v473 = vunpack.c.l.b16 %v423
      %v474 = vunpack.c.l.b16 %v424
      %v475 = vunpack.c.l.b16 %v425
      %v476 = vpack.c.b16 %v473, %v472
      %v477 = vpack.c.b16 %v475, %v474
      %v481 = vsel %vm284, %v459, 0
      %v484 = vsel %vm284, %v461, 0
      %v487 = vsel %vm284, %v463, 0
      %v490 = vsel %vm284, %v465, 0
      %v493 = vsel %vm284, %v467, 0
      %v496 = vsel %vm284, %v466, 0
      %498 = vmatpush.bf16.msra.mxu0 0
      %499 = vmatpush.bf16.msra.mxu0 0
      %500 = vmatpush.bf16.msra.mxu0 0
      %501 = vmatpush.bf16.msra.mxu0 0
      %502 = vmatpush.bf16.msra.mxu0 0
      %503 = vmatpush.bf16.msra.mxu0 0
      %504 = vmatpush.bf16.msra.mxu0 %v477
      %505 = vmatpush.bf16.msra.mxu0 %v476
      %506 = vmatmul.bf16.gmra.mxu0 %v481
      %v507 = vpop.f32.mrf.mxu0
      %v508 = vadd.f32 0.0, %v507
      %v509 = vpop.f32.mrf.mxu0
      %v510 = vadd.f32 0.0, %v509
      %511 = vmatmul.bf16.gmra.mxu0 %v484
      %v512 = vpop.f32.mrf.mxu0
      %v513 = vadd.f32 0.0, %v512
      %v514 = vpop.f32.mrf.mxu0
      %v515 = vadd.f32 0.0, %v514
      %516 = vmatmul.bf16.gmra.mxu0 %v487
      %v517 = vpop.f32.mrf.mxu0
      %v518 = vadd.f32 0.0, %v517
      %v519 = vpop.f32.mrf.mxu0
      %v520 = vadd.f32 0.0, %v519
      %521 = vmatmul.bf16.gmra.mxu0 %v490
      %v522 = vpop.f32.mrf.mxu0
      %v523 = vadd.f32 0.0, %v522
      %v524 = vpop.f32.mrf.mxu0
      %v525 = vadd.f32 0.0, %v524
      %526 = vmatmul.bf16.gmra.mxu0 %v493
      %v527 = vpop.f32.mrf.mxu0
      %v528 = vadd.f32 0.0, %v527
      %v529 = vpop.f32.mrf.mxu0
      %v530 = vadd.f32 0.0, %v529
      %531 = vmatmul.bf16.gmra.mxu0 %v496
      %v532 = vpop.f32.mrf.mxu0
      %v533 = vadd.f32 0.0, %v532
      %v534 = vpop.f32.mrf.mxu0
      %v535 = vadd.f32 0.0, %v534
      %536 = vdwg.mxu0
      %v537 = vadd.f32 %v380, %v508
      %v538 = vadd.f32 %v382, %v510
      %v539 = vadd.f32 %v385, %v513
      %v540 = vadd.f32 %v387, %v515
      %v541 = vadd.f32 %v390, %v518
      %v542 = vadd.f32 %v392, %v520
      %v543 = vadd.f32 %v395, %v523
      %v544 = vadd.f32 %v397, %v525
      %v545 = vadd.f32 %v400, %v528
      %v546 = vadd.f32 %v402, %v530
      %v547 = vadd.f32 %v405, %v533
      %v548 = vadd.f32 %v407, %v535
      %v549 = vld [vmem:[%s165 + $0x30] sm:$0x7]
      %s550 = scalar_lea.vmem %s1, 48
      %v551 = vld [vmem:[%s550] sm:$0xf]
      %v552 = vld [vmem:[%s550 + $0x4] sm:$0xf]
      %v553 = vld [vmem:[%s550 + $0x8] sm:$0xf]
      %v554 = vld [vmem:[%s550 + $0xc] sm:$0xf]
      %v556 = vunpack.c.l.b16 %v549
      %v557 = vpack.c.b16 %v556, %v448
      %vm558 = vsmask.f32 6400
      %v560 = vshrl.u32 %v450, 16
      %v562 = vrot.slane %v560, 1
      %v563 = vshll.u32 %v450, 16
      %v565 = vrot.slane %v563, 2
      %v566 = vor.u32 %v562, %v565
      %v568 = vshrl.u32 %v451, 16
      %v570 = vrot.slane %v568, 1
      %v571 = vshll.u32 %v451, 16
      %v573 = vrot.slane %v571, 2
      %v574 = vor.u32 %v570, %v573
      %v575 = vsel %vm558, %v566, %v574
      %v577 = vshrl.u32 %v452, 16
      %v579 = vrot.slane %v577, 1
      %v580 = vshll.u32 %v452, 16
      %v582 = vrot.slane %v580, 2
      %v583 = vor.u32 %v579, %v582
      %v584 = vsel %vm558, %v574, %v583
      %v586 = vshrl.u32 %v453, 16
      %v588 = vrot.slane %v586, 1
      %v589 = vshll.u32 %v453, 16
      %v591 = vrot.slane %v589, 2
      %v592 = vor.u32 %v588, %v591
      %v593 = vsel %vm558, %v583, %v592
      %v595 = vshrl.u32 %v454, 16
      %v597 = vrot.slane %v595, 1
      %v598 = vshll.u32 %v454, 16
      %v600 = vrot.slane %v598, 2
      %v601 = vor.u32 %v597, %v600
      %v602 = vsel %vm558, %v592, %v601
      %v604 = vshrl.u32 %v557, 16
      %v606 = vrot.slane %v604, 1
      %v607 = vshll.u32 %v557, 16
      %v609 = vrot.slane %v607, 2
      %v610 = vor.u32 %v606, %v609
      %v611 = vsel %vm558, %v601, %v610
      %v616 = vunpack.c.l.b16 %v551
      %v617 = vunpack.c.l.b16 %v552
      %v618 = vunpack.c.l.b16 %v553
      %v619 = vunpack.c.l.b16 %v554
      %v620 = vpack.c.b16 %v617, %v616
      %v621 = vpack.c.b16 %v619, %v618
      %v625 = vsel %vm284, %v575, 0
      %v628 = vsel %vm284, %v584, 0
      %v631 = vsel %vm284, %v593, 0
      %v634 = vsel %vm284, %v602, 0
      %v637 = vsel %vm284, %v611, 0
      %v640 = vsel %vm284, %v610, 0
      %642 = vmatpush.bf16.msra.mxu0 0
      %643 = vmatpush.bf16.msra.mxu0 0
      %644 = vmatpush.bf16.msra.mxu0 0
      %645 = vmatpush.bf16.msra.mxu0 0
      %646 = vmatpush.bf16.msra.mxu0 0
      %647 = vmatpush.bf16.msra.mxu0 0
      %648 = vmatpush.bf16.msra.mxu0 %v621
      %649 = vmatpush.bf16.msra.mxu0 %v620
      %650 = vmatmul.bf16.gmra.mxu0 %v625
      %v651 = vpop.f32.mrf.mxu0
      %v652 = vadd.f32 0.0, %v651
      %v653 = vpop.f32.mrf.mxu0
      %v654 = vadd.f32 0.0, %v653
      %655 = vmatmul.bf16.gmra.mxu0 %v628
      %v656 = vpop.f32.mrf.mxu0
      %v657 = vadd.f32 0.0, %v656
      %v658 = vpop.f32.mrf.mxu0
      %v659 = vadd.f32 0.0, %v658
      %660 = vmatmul.bf16.gmra.mxu0 %v631
      %v661 = vpop.f32.mrf.mxu0
      %v662 = vadd.f32 0.0, %v661
      %v663 = vpop.f32.mrf.mxu0
      %v664 = vadd.f32 0.0, %v663
      %665 = vmatmul.bf16.gmra.mxu0 %v634
      %v666 = vpop.f32.mrf.mxu0
      %v667 = vadd.f32 0.0, %v666
      %v668 = vpop.f32.mrf.mxu0
      %v669 = vadd.f32 0.0, %v668
      %670 = vmatmul.bf16.gmra.mxu0 %v637
      %v671 = vpop.f32.mrf.mxu0
      %v672 = vadd.f32 0.0, %v671
      %v673 = vpop.f32.mrf.mxu0
      %v674 = vadd.f32 0.0, %v673
      %675 = vmatmul.bf16.gmra.mxu0 %v640
      %v676 = vpop.f32.mrf.mxu0
      %v677 = vadd.f32 0.0, %v676
      %v678 = vpop.f32.mrf.mxu0
      %v679 = vadd.f32 0.0, %v678
      %680 = vdwg.mxu0
      %v681 = vadd.f32 %v537, %v652
      %v682 = vadd.f32 %v538, %v654
      %v683 = vadd.f32 %v539, %v657
      %v684 = vadd.f32 %v540, %v659
      %v685 = vadd.f32 %v541, %v662
      %v686 = vadd.f32 %v542, %v664
      %v687 = vadd.f32 %v543, %v667
      %v688 = vadd.f32 %v544, %v669
      %v689 = vadd.f32 %v545, %v672
      %v690 = vadd.f32 %v546, %v674
      %v691 = vadd.f32 %v547, %v677
      %v692 = vadd.f32 %v548, %v679
      %v693 = vld [vmem:[%s2] sm:$0x1]
      %v695 = vperm.slane %v693, 0
      %v697 = vadd.f32 %v681, %v695
      %v698 = vadd.f32 %v682, %v695
      %v699 = vadd.f32 %v683, %v695
      %v700 = vadd.f32 %v684, %v695
      %v701 = vadd.f32 %v685, %v695
      %v702 = vadd.f32 %v686, %v695
      %v703 = vadd.f32 %v687, %v695
      %v704 = vadd.f32 %v688, %v695
      %v705 = vadd.f32 %v689, %v695
      %v706 = vadd.f32 %v690, %v695
      %v707 = vadd.f32 %v691, %v695
      %v708 = vadd.f32 %v692, %v695
      %v709 = vtanh.pop %v697
      %v710 = vtanh.pop %v698
      %v711 = vtanh.pop %v699
      %v712 = vtanh.pop %v700
      %v713 = vtanh.pop %v701
      %v714 = vtanh.pop %v702
      %v715 = vtanh.pop %v703
      %v716 = vtanh.pop %v704
      %v717 = vtanh.pop %v705
      %v718 = vtanh.pop %v706
      %v719 = vtanh.pop %v707
      %v720 = vtanh.pop %v708
      %vm721 = vcmask 31744
      %722 = vst.msk [vmem:[%s170] sm:$0xff] %vm721, %v709
      %723 = vst.msk [vmem:[%s170 + $0x8] sm:$0xff] %vm721, %v710
      %724 = vst.msk [vmem:[%s170 + $0x10] sm:$0xff] %vm721, %v711
      %725 = vst.msk [vmem:[%s170 + $0x18] sm:$0xff] %vm721, %v712
      %726 = vst.msk [vmem:[%s170 + $0x20] sm:$0xff] %vm721, %v713
      %727 = vst.msk [vmem:[%s170 + $0x28] sm:$0xff] %vm721, %v714
      %728 = vst.msk [vmem:[%s170 + $0x30] sm:$0xff] %vm721, %v715
      %729 = vst.msk [vmem:[%s170 + $0x38] sm:$0xff] %vm721, %v716
      %730 = vst.msk [vmem:[%s170 + $0x40] sm:$0xff] %vm721, %v717
      %731 = vst.msk [vmem:[%s170 + $0x48] sm:$0xff] %vm721, %v718
      %732 = vst.msk [vmem:[%s170 + $0x50] sm:$0xff] %vm721, %v719
      %vm733 = vcmask 25600
      %734 = vst.msk [vmem:[%s170 + $0x58] sm:$0x3] %vm733, %v720
      %p735 = scmp.lt.s32.totalorder %s14, 1
      %s736 = scalar_select %p735, %s14, 1
      %s737 = smul.addr %s736, 12
      %s738 = smul.addr %s737, 8
      %s739 = scalar_lea.vmem %s3, %s738
      // Predicated region
      $region33: #{vae_forward.13} parent=31 // pred_check
        %p740 = pneg %p100
      $region34: #{vae_forward.13} parent=31 // pred_check_branch
        %742 = sbr.rel (%p740) target = $region36
      $region35: #{vae_forward.13} parent=31 // pred_region
        _
      $region36: #{vae_forward.13} parent=31 // pred_fallthru
        _
    $region32: #{vae_forward.13} parent=5 // pred_fallthru
      _
    %p743 = scmp.le.s32.totalorder 2, %s9
    // Predicated region
    $region37: #{vae_forward.13} parent=5 // pred_check
      %p744 = pneg %p743
    $region38: #{vae_forward.13} parent=5 // pred_check_branch
      %746 = sbr.rel (%p744) target = $region40
    $region39: #{vae_forward.13} parent=5 // pred_region
      %s747 = ssub.s32 %s9, 2
      // Predicated region
      $region41: #{vae_forward.13} parent=39 // pred_check
        %p748 = pneg %p106
      $region42: #{vae_forward.13} parent=39 // pred_check_branch
        %750 = sbr.rel (%p748) target = $region44
      $region43: #{vae_forward.13} parent=39 // pred_region
        %p751 = scmp.lt.s32.totalorder %s15, 1
        %s752 = scalar_select %p751, %s15, 1
        %s753 = smul.addr %s752, 12
        %s754 = smul.addr %s753, 8
        %s755 = scalar_lea.vmem %s3, %s754
      $region44: #{vae_forward.13} parent=39 // pred_fallthru
        _
    $region40: #{vae_forward.13} parent=5 // pred_fallthru
      _
  $region6: #{vae_forward.13} parent=0 // loop_footer
    %s13 = sadd.s32 1, %s9
  $region7: #{vae_forward.13} parent=0 // loop_footer_branch
    %8 = sbr.rel target = $region3
  $region8: #{vae_forward.13} parent=0 // loop_exit
    _

</llo_original>
